<compile_context>
chip_gen: v5e
topology: v5e:2x2
jax: 0.10.0
libtpu: 0.0.40
codegen_flags: <defaults>
</compile_context>

<pallas_src>
import functools
import math

import jax
import jax.numpy as jnp
from jax.experimental import pallas as pl
from jax.experimental.pallas import tpu as pltpu


def _gelu(v):
    # tanh-approx GELU (EUP tanh; matches PyTorch nn.GELU() to ~1e-3).
    c = 0.7978845608028654
    return 0.5 * v * (1.0 + jnp.tanh(c * (v + 0.044715 * (v * v * v))))


# ---------------------------------------------------------------------------
# Fused Pallas kernel: whole decoder for one image per grid step
# ---------------------------------------------------------------------------
def _fused_kernel(x1_ref, w1_ref, b1_ref, w2_ref, b2_ref, w3_ref, b3_ref,
                  t1w_ref, t1b_ref, t2w_ref, t2b_ref, t3w_ref, t3b_ref,
                  w4_ref, b4_ref, o_ref, a1s_ref, a2s_ref,
                  *, H2, W2, H3, W3, R):
    f32 = jnp.float32
    bf16 = jnp.bfloat16

    # ---- zero ONLY the padding borders of the phase-split scratch ----------
    # (interior is fully overwritten every grid step).
    a1s_ref[:, :, pl.ds(0, 1), :, :] = jnp.zeros((2, 2, 1, W2 + 1, 64), bf16)
    a1s_ref[:, :, :, pl.ds(0, 1), :] = jnp.zeros((2, 2, H2 + 1, 1, 64), bf16)
    a2s_ref[:, :, pl.ds(0, 1), :, :] = jnp.zeros((2, 2, 1, W3 + 1, 128), bf16)
    a2s_ref[:, :, :, pl.ds(0, 1), :] = jnp.zeros((2, 2, H3 + 1, 1, 128), bf16)

    # ---- conv1 (3x3, s2, p1) + GELU: one matmul + ONE slab store per phase --
    w1 = w1_ref[...]                     # (16, 64) f32 (rows 9..15 are zero)
    b1 = b1_ref[...]                     # (1, 64)  f32
    for k in range(4):
        p, q = k // 2, k % 2
        xk = x1_ref[0, k]                # (H2*W2, 16) f32, raster over (u, v)
        y = _gelu(jnp.dot(xk, w1, preferred_element_type=f32) + b1)
        a1s_ref[p, q, pl.ds(1, H2), pl.ds(1, W2), :] = (
            y.astype(bf16).reshape(H2, W2, 64))

    # ---- generic 3x3/s2/p1 conv over the whole image (M = Hout*Wout) --------
    def conv_full(src_ref, w_ref_, b_ref_, Hout, Wout):
        acc = None
        for di in range(3):
            p = 0 if di == 1 else 1
            r0 = 0 if di == 0 else 1
            for dj in range(3):
                q = 0 if dj == 1 else 1
                c0 = 0 if dj == 0 else 1
                lhs = src_ref[p, q, pl.ds(r0, Hout), pl.ds(c0, Wout), :]
                lhs = lhs.reshape(Hout * Wout, lhs.shape[-1])        # (M, Cin)
                t = jnp.dot(lhs, w_ref_[di * 3 + dj],
                            preferred_element_type=f32)
                acc = t if acc is None else acc + t
        return _gelu(acc + b_ref_[...])                              # (M, Cout)

    # ---- conv2 + GELU -> phase-split a2 with 4 slab stores ------------------
    y2 = conv_full(a1s_ref, w2_ref, b2_ref, H2, W2).astype(bf16)     # (H2*W2,128)
    y2 = y2.reshape(H3, 2, W3, 2, 128)                               # (u,p,v,q,c)
    for p in range(2):
        for q in range(2):
            a2s_ref[p, q, pl.ds(1, H3), pl.ds(1, W3), :] = y2[:, p, :, q, :]

    # ---- conv3 + GELU --------------------------------------------------------
    x = conv_full(a2s_ref, w3_ref, b3_ref, H3, W3)                   # (P3, 256)

    # ---- ConvT(k=2,s=2): taps merged along N -> ONE matmul per layer --------
    def tconv(v, w_ref_, b_ref_, cout):
        y = jnp.dot(v.astype(bf16), w_ref_[...],
                    preferred_element_type=f32)                      # (M, 4*cout)
        parts = [y[:, k * cout:(k + 1) * cout] for k in range(4)]    # tap k=2p+q
        z = jnp.concatenate(parts, axis=0) + b_ref_[...]             # (4M, cout)
        return _gelu(z)

    x = tconv(x, t1w_ref, t1b_ref, 128)   # (4*P3, 128)
    x = tconv(x, t2w_ref, t2b_ref, 64)    # (16*P3, 64)
    x = tconv(x, t3w_ref, t3b_ref, 32)    # (64*P3, 32)

    # ---- 1x1 conv + sigmoid, emitted lane-dense (R, 128) f32 ----------------
    x = x.reshape(R, 128, 32)
    o = jnp.sum(x * w4_ref[...], axis=-1) + b4_ref[...]              # (R, 128)
    o_ref[0] = jax.nn.sigmoid(o)


# ---------------------------------------------------------------------------
# Host-side glue
# ---------------------------------------------------------------------------
def _prep_conv1_input(x_nchw):
    """im2col for conv1 (Cin=1); rows phase-ordered, K padded 9 -> 16, f32."""
    N, _, H, W = x_nchw.shape
    x = x_nchw[:, 0]
    xp = jnp.pad(x, ((0, 0), (1, 1), (1, 1)))
    H1, W1 = H // 2, W // 2
    H2, W2 = H1 // 2, W1 // 2
    cols = []
    for di in range(3):
        for dj in range(3):
            cols.append(xp[:, di:di + 2 * H1:2, dj:dj + 2 * W1:2])
    pat = jnp.stack(cols, axis=-1)                          # (N, H1, W1, 9)
    pat = pat.reshape(N, H2, 2, W2, 2, 9)                   # (N, u, p, v, q, 9)
    pat = pat.transpose(0, 2, 4, 1, 3, 5).reshape(N, 4, H2 * W2, 9)
    pat = jnp.pad(pat, ((0, 0), (0, 0), (0, 0), (0, 16 - 9)))
    return pat.astype(jnp.float32)


def prepack_params(params):
    """One-time weight packing (called OUTSIDE jit): matmul-ready layouts."""
    bf16, f32 = jnp.bfloat16, jnp.float32

    def c_pack(w):  # (Cout, Cin, 3, 3) -> (9, Cin, Cout), tap index di*3+dj
        co, ci = w.shape[0], w.shape[1]
        return jnp.transpose(w, (2, 3, 1, 0)).reshape(9, ci, co)

    def t_pack(w):  # (Cin, Cout, 2, 2) -> (Cin, 4*Cout), lane block k = 2p+q
        return jnp.concatenate(
            [w[:, :, p, q] for p in range(2) for q in range(2)], axis=1)

    pk = {}
    w1 = c_pack(params["c1_w"])[:, 0, :]                    # (9, 64)
    pk["w1"] = jnp.pad(w1, ((0, 16 - 9), (0, 0))).astype(f32)
    pk["b1"] = params["c1_b"].reshape(1, -1).astype(f32)
    pk["w2"] = c_pack(params["c2_w"]).astype(bf16)          # (9, 64, 128)
    pk["b2"] = params["c2_b"].reshape(1, -1).astype(f32)
    pk["w3"] = c_pack(params["c3_w"]).astype(bf16)          # (9, 128, 256)
    pk["b3"] = params["c3_b"].reshape(1, -1).astype(f32)
    pk["t1w"] = t_pack(params["t1_w"]).astype(bf16)         # (256, 512)
    pk["t1b"] = params["t1_b"].reshape(1, -1).astype(f32)
    pk["t2w"] = t_pack(params["t2_w"]).astype(bf16)         # (128, 256)
    pk["t2b"] = params["t2_b"].reshape(1, -1).astype(f32)
    pk["t3w"] = t_pack(params["t3_w"]).astype(bf16)         # (64, 128)
    pk["t3b"] = params["t3_b"].reshape(1, -1).astype(f32)
    pk["w4"] = params["c4_w"][:, :, 0, 0].reshape(1, 1, 32).astype(f32)
    pk["b4"] = params["c4_b"].reshape(1, 1).astype(f32)
    return pk


def postprocess_forward(x_nchw, packed):
    N, C, H, W = x_nchw.shape
    assert C == 1 and H % 8 == 0 and W % 8 == 0 and (H * W) % 128 == 0, (C, H, W)
    H2, W2 = H // 4, W // 4
    H3, W3 = H // 8, W // 8
    P3 = H3 * W3
    R = (H * W) // 128                                      # = 64 * P3 / 128

    x1 = _prep_conv1_input(x_nchw)                          # (N, 4, H2*W2, 16)

    weight_args = (packed["w1"], packed["b1"], packed["w2"], packed["b2"],
                   packed["w3"], packed["b3"], packed["t1w"], packed["t1b"],
                   packed["t2w"], packed["t2b"], packed["t3w"], packed["t3b"],
                   packed["w4"], packed["b4"])

    in_specs = [pl.BlockSpec((1, 4, H2 * W2, 16), lambda n: (n, 0, 0, 0))]
    for a in weight_args:
        nd = a.ndim
        in_specs.append(pl.BlockSpec(a.shape, lambda n, _nd=nd: (0,) * _nd))

    kernel = functools.partial(_fused_kernel, H2=H2, W2=W2, H3=H3, W3=W3, R=R)

    out = pl.pallas_call(
        kernel,
        grid=(N,),
        in_specs=in_specs,
        out_specs=pl.BlockSpec((1, R, 128), lambda n: (n, 0, 0)),
        out_shape=jax.ShapeDtypeStruct((N, R, 128), jnp.float32),
        scratch_shapes=[
            pltpu.VMEM((2, 2, H2 + 1, W2 + 1, 64), jnp.bfloat16),   # a1 phases
            pltpu.VMEM((2, 2, H3 + 1, W3 + 1, 128), jnp.bfloat16),  # a2 phases
        ],
        compiler_params=pltpu.CompilerParams(dimension_semantics=("parallel",)),
    )(x1, *weight_args)

    # Row f of the kernel's flat output = taps stacked along rows (outermost
    # block = last ConvT's tap).  De-interleave taps -> pixels on the host.
    o = out.reshape(N, 64 * P3)
    o = o.reshape(N, 2, 2, 2, 2, 2, 2, H3, W3)              # (p3,q3,p2,q2,p1,q1,i,j)
    o = o.transpose(0, 7, 5, 3, 1, 8, 6, 4, 2)              # (N, i,p1,p2,p3, j,q1,q2,q3)
    return o.reshape(N, 1, H, W)


# ---------------------------------------------------------------------------
# Pure-JAX (XLA conv) reference for correctness checking
# ---------------------------------------------------------------------------
def reference_forward(x_nchw, params):
    dn = ("NHWC", "HWIO", "NHWC")
    hi = jax.lax.Precision.HIGHEST

    def gelu(v):
        return 0.5 * v * (1.0 + jax.lax.erf(v / jnp.sqrt(2.0)))

    def conv(v, w_pt, b):
        w = jnp.transpose(w_pt, (2, 3, 1, 0))               # HWIO
        v = jax.lax.conv_general_dilated(v, w, (2, 2), [(1, 1), (1, 1)],
                                         dimension_numbers=dn, precision=hi)
        return gelu(v + b)

    def tconv(v, w_pt, b):
        w = jnp.transpose(w_pt, (2, 3, 0, 1))               # (kH,kW,Cin,Cout)
        w = w[::-1, ::-1]                                   # spatial flip
        v = jax.lax.conv_general_dilated(v, w, (1, 1), [(1, 1), (1, 1)],
                                         lhs_dilation=(2, 2),
                                         dimension_numbers=dn, precision=hi)
        return gelu(v + b)

    x = jnp.transpose(x_nchw, (0, 2, 3, 1))
    x = conv(x, params["c1_w"], params["c1_b"])
    x = conv(x, params["c2_w"], params["c2_b"])
    x = conv(x, params["c3_w"], params["c3_b"])
    x = tconv(x, params["t1_w"], params["t1_b"])
    x = tconv(x, params["t2_w"], params["t2_b"])
    x = tconv(x, params["t3_w"], params["t3_b"])
    w = jnp.transpose(params["c4_w"], (2, 3, 1, 0))
    x = jax.lax.conv_general_dilated(x, w, (1, 1), [(0, 0), (0, 0)],
                                     dimension_numbers=dn, precision=hi)
    x = jax.nn.sigmoid(x + params["c4_b"])
    return jnp.transpose(x, (0, 3, 1, 2))


# ---------------------------------------------------------------------------
# Deterministic parameter init (synthetic, PyTorch-like uniform(±1/sqrt(fan_in)))
# ---------------------------------------------------------------------------
def init_params(key):
    def u(k, shape, fan_in):
        bound = 1.0 / math.sqrt(fan_in)
        return jax.random.uniform(k, shape, jnp.float32, -bound, bound)

    keys = jax.random.split(key, 14)
    p = {}
    p["c1_w"], p["c1_b"] = u(keys[0], (64, 1, 3, 3), 1 * 9),      u(keys[1], (64,), 1 * 9)
    p["c2_w"], p["c2_b"] = u(keys[2], (128, 64, 3, 3), 64 * 9),   u(keys[3], (128,), 64 * 9)
    p["c3_w"], p["c3_b"] = u(keys[4], (256, 128, 3, 3), 128 * 9), u(keys[5], (256,), 128 * 9)
    p["t1_w"], p["t1_b"] = u(keys[6], (256, 128, 2, 2), 256 * 4), u(keys[7], (128,), 256 * 4)
    p["t2_w"], p["t2_b"] = u(keys[8], (128, 64, 2, 2), 128 * 4),  u(keys[9], (64,), 128 * 4)
    p["t3_w"], p["t3_b"] = u(keys[10], (64, 32, 2, 2), 64 * 4),   u(keys[11], (32,), 64 * 4)
    p["c4_w"], p["c4_b"] = u(keys[12], (1, 32, 1, 1), 32),        u(keys[13], (1,), 32)
    return p


if __name__ == "__main__":
    key = jax.random.PRNGKey(0)
    k_x, k_p = jax.random.split(key)
    x = jax.random.normal(k_x, (2, 1, 16, 16), jnp.float32)
    params = init_params(k_p)
    packed = prepack_params(params)                 # weight packing hoisted out of jit

    fwd = jax.jit(postprocess_forward)
    out = jax.block_until_ready(fwd(x, packed))
    ref = jax.block_until_ready(jax.jit(reference_forward)(x, params))

    assert out.shape == (2, 1, 16, 16), out.shape
    assert bool(jnp.all(jnp.isfinite(out)))
    err = float(jnp.max(jnp.abs(out - ref)))
    assert jnp.allclose(out, ref, atol=1e-2, rtol=1e-2), err

    print("KERNEL_OK")
</pallas_src>

<mosaic_0001>
module attributes {stable_mosaic.version = 11 : i64} {
  func.func @_fused_kernel(%arg0: i32, %arg1: memref<1x4x16x16xf32, #tpu.memory_space<vmem>>, %arg2: memref<16x64xf32, #tpu.memory_space<vmem>>, %arg3: memref<1x64xf32, #tpu.memory_space<vmem>>, %arg4: memref<9x64x128xbf16, #tpu.memory_space<vmem>>, %arg5: memref<1x128xf32, #tpu.memory_space<vmem>>, %arg6: memref<9x128x256xbf16, #tpu.memory_space<vmem>>, %arg7: memref<1x256xf32, #tpu.memory_space<vmem>>, %arg8: memref<256x512xbf16, #tpu.memory_space<vmem>>, %arg9: memref<1x128xf32, #tpu.memory_space<vmem>>, %arg10: memref<128x256xbf16, #tpu.memory_space<vmem>>, %arg11: memref<1x64xf32, #tpu.memory_space<vmem>>, %arg12: memref<64x128xbf16, #tpu.memory_space<vmem>>, %arg13: memref<1x32xf32, #tpu.memory_space<vmem>>, %arg14: memref<1x1x32xf32, #tpu.memory_space<vmem>>, %arg15: memref<1x1xf32, #tpu.memory_space<vmem>>, %arg16: memref<1x2x128xf32, #tpu.memory_space<vmem>>, %arg17: memref<2x2x5x5x64xbf16, #tpu.memory_space<vmem>>, %arg18: memref<2x2x3x3x128xbf16, #tpu.memory_space<vmem>>) attributes {dimension_semantics = [#tpu.dimension_semantics<parallel>], iteration_bounds = array<i64: 2>, scalar_prefetch = 0 : i64, scratch_operands = 2 : i64, tpu.core_type = #tpu.core_type<tc>, window_params = [{transform_indices = @transform_0, window_bounds = array<i64: 1, 4, 16, 16>}, {pipeline_mode = #tpu.pipeline_mode<synchronous>, transform_indices = @transform_1, window_bounds = array<i64: 16, 64>}, {pipeline_mode = #tpu.pipeline_mode<synchronous>, transform_indices = @transform_2, window_bounds = array<i64: 1, 64>}, {pipeline_mode = #tpu.pipeline_mode<synchronous>, transform_indices = @transform_3, window_bounds = array<i64: 9, 64, 128>}, {pipeline_mode = #tpu.pipeline_mode<synchronous>, transform_indices = @transform_4, window_bounds = array<i64: 1, 128>}, {pipeline_mode = #tpu.pipeline_mode<synchronous>, transform_indices = @transform_5, window_bounds = array<i64: 9, 128, 256>}, {pipeline_mode = #tpu.pipeline_mode<synchronous>, transform_indices = @transform_6, window_bounds = array<i64: 1, 256>}, {pipeline_mode = #tpu.pipeline_mode<synchronous>, transform_indices = @transform_7, window_bounds = array<i64: 256, 512>}, {pipeline_mode = #tpu.pipeline_mode<synchronous>, transform_indices = @transform_8, window_bounds = array<i64: 1, 128>}, {pipeline_mode = #tpu.pipeline_mode<synchronous>, transform_indices = @transform_9, window_bounds = array<i64: 128, 256>}, {pipeline_mode = #tpu.pipeline_mode<synchronous>, transform_indices = @transform_10, window_bounds = array<i64: 1, 64>}, {pipeline_mode = #tpu.pipeline_mode<synchronous>, transform_indices = @transform_11, window_bounds = array<i64: 64, 128>}, {pipeline_mode = #tpu.pipeline_mode<synchronous>, transform_indices = @transform_12, window_bounds = array<i64: 1, 32>}, {pipeline_mode = #tpu.pipeline_mode<synchronous>, transform_indices = @transform_13, window_bounds = array<i64: 1, 1, 32>}, {pipeline_mode = #tpu.pipeline_mode<synchronous>, transform_indices = @transform_14, window_bounds = array<i64: 1, 1>}, {transform_indices = @transform_15, window_bounds = array<i64: 1, 2, 128>}]} {
    %cst = arith.constant 0.000000e+00 : bf16
    %0 = vector.broadcast %cst : bf16 to vector<2x2x1x5x64xbf16>
    %c0 = arith.constant 0 : index
    %c0_0 = arith.constant 0 : index
    %c0_1 = arith.constant 0 : index
    %c0_2 = arith.constant 0 : index
    %c0_3 = arith.constant 0 : index
    %1 = vector.load %arg17[%c0, %c0_0, %c0_1, %c0_2, %c0_3] : memref<2x2x5x5x64xbf16, #tpu.memory_space<vmem>>, vector<2x2x1x5x64xbf16>
    tpu.vector_store %arg17[%c0, %c0_0, %c0_1, %c0_2, %c0_3], %0 {strides = array<i32>} : memref<2x2x5x5x64xbf16, #tpu.memory_space<vmem>>, vector<2x2x1x5x64xbf16>,
    %cst_4 = arith.constant 0.000000e+00 : bf16
    %2 = vector.broadcast %cst_4 : bf16 to vector<2x2x5x1x64xbf16>
    %c0_5 = arith.constant 0 : index
    %c0_6 = arith.constant 0 : index
    %c0_7 = arith.constant 0 : index
    %c0_8 = arith.constant 0 : index
    %c0_9 = arith.constant 0 : index
    %3 = vector.load %arg17[%c0_5, %c0_6, %c0_7, %c0_8, %c0_9] : memref<2x2x5x5x64xbf16, #tpu.memory_space<vmem>>, vector<2x2x5x1x64xbf16>
    tpu.vector_store %arg17[%c0_5, %c0_6, %c0_7, %c0_8, %c0_9], %2 {strides = array<i32>} : memref<2x2x5x5x64xbf16, #tpu.memory_space<vmem>>, vector<2x2x5x1x64xbf16>,
    %cst_10 = arith.constant 0.000000e+00 : bf16
    %4 = vector.broadcast %cst_10 : bf16 to vector<2x2x1x3x128xbf16>
    %c0_11 = arith.constant 0 : index
    %c0_12 = arith.constant 0 : index
    %c0_13 = arith.constant 0 : index
    %c0_14 = arith.constant 0 : index
    %c0_15 = arith.constant 0 : index
    %5 = vector.load %arg18[%c0_11, %c0_12, %c0_13, %c0_14, %c0_15] : memref<2x2x3x3x128xbf16, #tpu.memory_space<vmem>>, vector<2x2x1x3x128xbf16>
    tpu.vector_store %arg18[%c0_11, %c0_12, %c0_13, %c0_14, %c0_15], %4 {strides = array<i32>} : memref<2x2x3x3x128xbf16, #tpu.memory_space<vmem>>, vector<2x2x1x3x128xbf16>,
    %cst_16 = arith.constant 0.000000e+00 : bf16
    %6 = vector.broadcast %cst_16 : bf16 to vector<2x2x3x1x128xbf16>
    %c0_17 = arith.constant 0 : index
    %c0_18 = arith.constant 0 : index
    %c0_19 = arith.constant 0 : index
    %c0_20 = arith.constant 0 : index
    %c0_21 = arith.constant 0 : index
    %7 = vector.load %arg18[%c0_17, %c0_18, %c0_19, %c0_20, %c0_21] : memref<2x2x3x3x128xbf16, #tpu.memory_space<vmem>>, vector<2x2x3x1x128xbf16>
    tpu.vector_store %arg18[%c0_17, %c0_18, %c0_19, %c0_20, %c0_21], %6 {strides = array<i32>} : memref<2x2x3x3x128xbf16, #tpu.memory_space<vmem>>, vector<2x2x3x1x128xbf16>,
    %c0_22 = arith.constant 0 : index
    %c0_23 = arith.constant 0 : index
    %8 = vector.load %arg2[%c0_22, %c0_23] : memref<16x64xf32, #tpu.memory_space<vmem>>, vector<16x64xf32>
    %c0_24 = arith.constant 0 : index
    %c0_25 = arith.constant 0 : index
    %9 = vector.load %arg3[%c0_24, %c0_25] : memref<1x64xf32, #tpu.memory_space<vmem>>, vector<1x64xf32>
    %c0_26 = arith.constant 0 : index
    %c0_27 = arith.constant 0 : index
    %c0_28 = arith.constant 0 : index
    %c0_29 = arith.constant 0 : index
    %10 = vector.load %arg1[%c0_26, %c0_27, %c0_28, %c0_29] : memref<1x4x16x16xf32, #tpu.memory_space<vmem>>, vector<1x1x16x16xf32>
    %11 = vector.shape_cast %10 : vector<1x1x16x16xf32> to vector<16x16xf32>
    %cst_30 = arith.constant dense<0.000000e+00> : vector<16x64xf32>
    %12 = tpu.matmul %11, %8, %cst_30 {dimension_numbers = #tpu.dot_dimension_numbers<[1], [0], [0], [1], [0, 0, 1, 1], [], []>} : vector<16x16xf32>, vector<16x64xf32>, vector<16x64xf32> -> vector<16x64xf32>
    %13 = vector.broadcast %9 : vector<1x64xf32> to vector<16x64xf32>
    %14 = arith.addf %12, %13 : vector<16x64xf32>
    %cst_31 = arith.constant 5.000000e-01 : f32
    %15 = vector.broadcast %cst_31 : f32 to vector<16x64xf32>
    %16 = arith.mulf %15, %14 : vector<16x64xf32>
    %17 = arith.mulf %14, %14 : vector<16x64xf32>
    %18 = arith.mulf %17, %14 : vector<16x64xf32>
    %cst_32 = arith.constant 4.471500e-02 : f32
    %19 = vector.broadcast %cst_32 : f32 to vector<16x64xf32>
    %20 = arith.mulf %19, %18 : vector<16x64xf32>
    %21 = arith.addf %14, %20 : vector<16x64xf32>
    %cst_33 = arith.constant 0.797884583 : f32
    %22 = vector.broadcast %cst_33 : f32 to vector<16x64xf32>
    %23 = arith.mulf %22, %21 : vector<16x64xf32>
    %24 = math.tanh %23 : vector<16x64xf32>
    %cst_34 = arith.constant 1.000000e+00 : f32
    %25 = vector.broadcast %cst_34 : f32 to vector<16x64xf32>
    %26 = arith.addf %25, %24 : vector<16x64xf32>
    %27 = arith.mulf %16, %26 : vector<16x64xf32>
    %28 = arith.truncf %27 : vector<16x64xf32> to vector<16x64xbf16>
    %29 = vector.shape_cast %28 : vector<16x64xbf16> to vector<4x4x64xbf16>
    %c0_35 = arith.constant 0 : index
    %c0_36 = arith.constant 0 : index
    %c1 = arith.constant 1 : index
    %c1_37 = arith.constant 1 : index
    %c0_38 = arith.constant 0 : index
    %30 = vector.load %arg17[%c0_35, %c0_36, %c1, %c1_37, %c0_38] : memref<2x2x5x5x64xbf16, #tpu.memory_space<vmem>>, vector<1x1x4x4x64xbf16>
    %31 = vector.shape_cast %30 : vector<1x1x4x4x64xbf16> to vector<4x4x64xbf16>
    %32 = vector.shape_cast %29 : vector<4x4x64xbf16> to vector<1x1x4x4x64xbf16>
    tpu.vector_store %arg17[%c0_35, %c0_36, %c1, %c1_37, %c0_38], %32 {strides = array<i32>} : memref<2x2x5x5x64xbf16, #tpu.memory_space<vmem>>, vector<1x1x4x4x64xbf16>,
    %c0_39 = arith.constant 0 : index
    %c1_40 = arith.constant 1 : index
    %c0_41 = arith.constant 0 : index
    %c0_42 = arith.constant 0 : index
    %33 = vector.load %arg1[%c0_39, %c1_40, %c0_41, %c0_42] : memref<1x4x16x16xf32, #tpu.memory_space<vmem>>, vector<1x1x16x16xf32>
    %34 = vector.shape_cast %33 : vector<1x1x16x16xf32> to vector<16x16xf32>
    %cst_43 = arith.constant dense<0.000000e+00> : vector<16x64xf32>
    %35 = tpu.matmul %34, %8, %cst_43 {dimension_numbers = #tpu.dot_dimension_numbers<[1], [0], [0], [1], [0, 0, 1, 1], [], []>} : vector<16x16xf32>, vector<16x64xf32>, vector<16x64xf32> -> vector<16x64xf32>
    %36 = vector.broadcast %9 : vector<1x64xf32> to vector<16x64xf32>
    %37 = arith.addf %35, %36 : vector<16x64xf32>
    %cst_44 = arith.constant 5.000000e-01 : f32
    %38 = vector.broadcast %cst_44 : f32 to vector<16x64xf32>
    %39 = arith.mulf %38, %37 : vector<16x64xf32>
    %40 = arith.mulf %37, %37 : vector<16x64xf32>
    %41 = arith.mulf %40, %37 : vector<16x64xf32>
    %cst_45 = arith.constant 4.471500e-02 : f32
    %42 = vector.broadcast %cst_45 : f32 to vector<16x64xf32>
    %43 = arith.mulf %42, %41 : vector<16x64xf32>
    %44 = arith.addf %37, %43 : vector<16x64xf32>
    %cst_46 = arith.constant 0.797884583 : f32
    %45 = vector.broadcast %cst_46 : f32 to vector<16x64xf32>
    %46 = arith.mulf %45, %44 : vector<16x64xf32>
    %47 = math.tanh %46 : vector<16x64xf32>
    %cst_47 = arith.constant 1.000000e+00 : f32
    %48 = vector.broadcast %cst_47 : f32 to vector<16x64xf32>
    %49 = arith.addf %48, %47 : vector<16x64xf32>
    %50 = arith.mulf %39, %49 : vector<16x64xf32>
    %51 = arith.truncf %50 : vector<16x64xf32> to vector<16x64xbf16>
    %52 = vector.shape_cast %51 : vector<16x64xbf16> to vector<4x4x64xbf16>
    %c0_48 = arith.constant 0 : index
    %c1_49 = arith.constant 1 : index
    %c1_50 = arith.constant 1 : index
    %c1_51 = arith.constant 1 : index
    %c0_52 = arith.constant 0 : index
    %53 = vector.load %arg17[%c0_48, %c1_49, %c1_50, %c1_51, %c0_52] : memref<2x2x5x5x64xbf16, #tpu.memory_space<vmem>>, vector<1x1x4x4x64xbf16>
    %54 = vector.shape_cast %53 : vector<1x1x4x4x64xbf16> to vector<4x4x64xbf16>
    %55 = vector.shape_cast %52 : vector<4x4x64xbf16> to vector<1x1x4x4x64xbf16>
    tpu.vector_store %arg17[%c0_48, %c1_49, %c1_50, %c1_51, %c0_52], %55 {strides = array<i32>} : memref<2x2x5x5x64xbf16, #tpu.memory_space<vmem>>, vector<1x1x4x4x64xbf16>,
    %c0_53 = arith.constant 0 : index
    %c2 = arith.constant 2 : index
    %c0_54 = arith.constant 0 : index
    %c0_55 = arith.constant 0 : index
    %56 = vector.load %arg1[%c0_53, %c2, %c0_54, %c0_55] : memref<1x4x16x16xf32, #tpu.memory_space<vmem>>, vector<1x1x16x16xf32>
    %57 = vector.shape_cast %56 : vector<1x1x16x16xf32> to vector<16x16xf32>
    %cst_56 = arith.constant dense<0.000000e+00> : vector<16x64xf32>
    %58 = tpu.matmul %57, %8, %cst_56 {dimension_numbers = #tpu.dot_dimension_numbers<[1], [0], [0], [1], [0, 0, 1, 1], [], []>} : vector<16x16xf32>, vector<16x64xf32>, vector<16x64xf32> -> vector<16x64xf32>
    %59 = vector.broadcast %9 : vector<1x64xf32> to vector<16x64xf32>
    %60 = arith.addf %58, %59 : vector<16x64xf32>
    %cst_57 = arith.constant 5.000000e-01 : f32
    %61 = vector.broadcast %cst_57 : f32 to vector<16x64xf32>
    %62 = arith.mulf %61, %60 : vector<16x64xf32>
    %63 = arith.mulf %60, %60 : vector<16x64xf32>
    %64 = arith.mulf %63, %60 : vector<16x64xf32>
    %cst_58 = arith.constant 4.471500e-02 : f32
    %65 = vector.broadcast %cst_58 : f32 to vector<16x64xf32>
    %66 = arith.mulf %65, %64 : vector<16x64xf32>
    %67 = arith.addf %60, %66 : vector<16x64xf32>
    %cst_59 = arith.constant 0.797884583 : f32
    %68 = vector.broadcast %cst_59 : f32 to vector<16x64xf32>
    %69 = arith.mulf %68, %67 : vector<16x64xf32>
    %70 = math.tanh %69 : vector<16x64xf32>
    %cst_60 = arith.constant 1.000000e+00 : f32
    %71 = vector.broadcast %cst_60 : f32 to vector<16x64xf32>
    %72 = arith.addf %71, %70 : vector<16x64xf32>
    %73 = arith.mulf %62, %72 : vector<16x64xf32>
    %74 = arith.truncf %73 : vector<16x64xf32> to vector<16x64xbf16>
    %75 = vector.shape_cast %74 : vector<16x64xbf16> to vector<4x4x64xbf16>
    %c1_61 = arith.constant 1 : index
    %c0_62 = arith.constant 0 : index
    %c1_63 = arith.constant 1 : index
    %c1_64 = arith.constant 1 : index
    %c0_65 = arith.constant 0 : index
    %76 = vector.load %arg17[%c1_61, %c0_62, %c1_63, %c1_64, %c0_65] : memref<2x2x5x5x64xbf16, #tpu.memory_space<vmem>>, vector<1x1x4x4x64xbf16>
    %77 = vector.shape_cast %76 : vector<1x1x4x4x64xbf16> to vector<4x4x64xbf16>
    %78 = vector.shape_cast %75 : vector<4x4x64xbf16> to vector<1x1x4x4x64xbf16>
    tpu.vector_store %arg17[%c1_61, %c0_62, %c1_63, %c1_64, %c0_65], %78 {strides = array<i32>} : memref<2x2x5x5x64xbf16, #tpu.memory_space<vmem>>, vector<1x1x4x4x64xbf16>,
    %c0_66 = arith.constant 0 : index
    %c3 = arith.constant 3 : index
    %c0_67 = arith.constant 0 : index
    %c0_68 = arith.constant 0 : index
    %79 = vector.load %arg1[%c0_66, %c3, %c0_67, %c0_68] : memref<1x4x16x16xf32, #tpu.memory_space<vmem>>, vector<1x1x16x16xf32>
    %80 = vector.shape_cast %79 : vector<1x1x16x16xf32> to vector<16x16xf32>
    %cst_69 = arith.constant dense<0.000000e+00> : vector<16x64xf32>
    %81 = tpu.matmul %80, %8, %cst_69 {dimension_numbers = #tpu.dot_dimension_numbers<[1], [0], [0], [1], [0, 0, 1, 1], [], []>} : vector<16x16xf32>, vector<16x64xf32>, vector<16x64xf32> -> vector<16x64xf32>
    %82 = vector.broadcast %9 : vector<1x64xf32> to vector<16x64xf32>
    %83 = arith.addf %81, %82 : vector<16x64xf32>
    %cst_70 = arith.constant 5.000000e-01 : f32
    %84 = vector.broadcast %cst_70 : f32 to vector<16x64xf32>
    %85 = arith.mulf %84, %83 : vector<16x64xf32>
    %86 = arith.mulf %83, %83 : vector<16x64xf32>
    %87 = arith.mulf %86, %83 : vector<16x64xf32>
    %cst_71 = arith.constant 4.471500e-02 : f32
    %88 = vector.broadcast %cst_71 : f32 to vector<16x64xf32>
    %89 = arith.mulf %88, %87 : vector<16x64xf32>
    %90 = arith.addf %83, %89 : vector<16x64xf32>
    %cst_72 = arith.constant 0.797884583 : f32
    %91 = vector.broadcast %cst_72 : f32 to vector<16x64xf32>
    %92 = arith.mulf %91, %90 : vector<16x64xf32>
    %93 = math.tanh %92 : vector<16x64xf32>
    %cst_73 = arith.constant 1.000000e+00 : f32
    %94 = vector.broadcast %cst_73 : f32 to vector<16x64xf32>
    %95 = arith.addf %94, %93 : vector<16x64xf32>
    %96 = arith.mulf %85, %95 : vector<16x64xf32>
    %97 = arith.truncf %96 : vector<16x64xf32> to vector<16x64xbf16>
    %98 = vector.shape_cast %97 : vector<16x64xbf16> to vector<4x4x64xbf16>
    %c1_74 = arith.constant 1 : index
    %c1_75 = arith.constant 1 : index
    %c1_76 = arith.constant 1 : index
    %c1_77 = arith.constant 1 : index
    %c0_78 = arith.constant 0 : index
    %99 = vector.load %arg17[%c1_74, %c1_75, %c1_76, %c1_77, %c0_78] : memref<2x2x5x5x64xbf16, #tpu.memory_space<vmem>>, vector<1x1x4x4x64xbf16>
    %100 = vector.shape_cast %99 : vector<1x1x4x4x64xbf16> to vector<4x4x64xbf16>
    %101 = vector.shape_cast %98 : vector<4x4x64xbf16> to vector<1x1x4x4x64xbf16>
    tpu.vector_store %arg17[%c1_74, %c1_75, %c1_76, %c1_77, %c0_78], %101 {strides = array<i32>} : memref<2x2x5x5x64xbf16, #tpu.memory_space<vmem>>, vector<1x1x4x4x64xbf16>,
    %c1_79 = arith.constant 1 : index
    %c1_80 = arith.constant 1 : index
    %c0_81 = arith.constant 0 : index
    %c0_82 = arith.constant 0 : index
    %c0_83 = arith.constant 0 : index
    %102 = vector.load %arg17[%c1_79, %c1_80, %c0_81, %c0_82, %c0_83] : memref<2x2x5x5x64xbf16, #tpu.memory_space<vmem>>, vector<1x1x4x4x64xbf16>
    %103 = vector.shape_cast %102 : vector<1x1x4x4x64xbf16> to vector<4x4x64xbf16>
    %104 = vector.shape_cast %103 : vector<4x4x64xbf16> to vector<16x64xbf16>
    %c0_84 = arith.constant 0 : index
    %c0_85 = arith.constant 0 : index
    %c0_86 = arith.constant 0 : index
    %105 = vector.load %arg4[%c0_84, %c0_85, %c0_86] : memref<9x64x128xbf16, #tpu.memory_space<vmem>>, vector<1x64x128xbf16>
    %106 = vector.shape_cast %105 : vector<1x64x128xbf16> to vector<64x128xbf16>
    %cst_87 = arith.constant dense<0.000000e+00> : vector<16x128xf32>
    %107 = tpu.matmul %104, %106, %cst_87 {dimension_numbers = #tpu.dot_dimension_numbers<[1], [0], [0], [1], [0, 0, 1, 1], [], []>} : vector<16x64xbf16>, vector<64x128xbf16>, vector<16x128xf32> -> vector<16x128xf32>
    %c1_88 = arith.constant 1 : index
    %c0_89 = arith.constant 0 : index
    %c0_90 = arith.constant 0 : index
    %c1_91 = arith.constant 1 : index
    %c0_92 = arith.constant 0 : index
    %108 = vector.load %arg17[%c1_88, %c0_89, %c0_90, %c1_91, %c0_92] : memref<2x2x5x5x64xbf16, #tpu.memory_space<vmem>>, vector<1x1x4x4x64xbf16>
    %109 = vector.shape_cast %108 : vector<1x1x4x4x64xbf16> to vector<4x4x64xbf16>
    %110 = vector.shape_cast %109 : vector<4x4x64xbf16> to vector<16x64xbf16>
    %c1_93 = arith.constant 1 : index
    %c0_94 = arith.constant 0 : index
    %c0_95 = arith.constant 0 : index
    %111 = vector.load %arg4[%c1_93, %c0_94, %c0_95] : memref<9x64x128xbf16, #tpu.memory_space<vmem>>, vector<1x64x128xbf16>
    %112 = vector.shape_cast %111 : vector<1x64x128xbf16> to vector<64x128xbf16>
    %cst_96 = arith.constant dense<0.000000e+00> : vector<16x128xf32>
    %113 = tpu.matmul %110, %112, %cst_96 {dimension_numbers = #tpu.dot_dimension_numbers<[1], [0], [0], [1], [0, 0, 1, 1], [], []>} : vector<16x64xbf16>, vector<64x128xbf16>, vector<16x128xf32> -> vector<16x128xf32>
    %114 = arith.addf %107, %113 : vector<16x128xf32>
    %c1_97 = arith.constant 1 : index
    %c1_98 = arith.constant 1 : index
    %c0_99 = arith.constant 0 : index
    %c1_100 = arith.constant 1 : index
    %c0_101 = arith.constant 0 : index
    %115 = vector.load %arg17[%c1_97, %c1_98, %c0_99, %c1_100, %c0_101] : memref<2x2x5x5x64xbf16, #tpu.memory_space<vmem>>, vector<1x1x4x4x64xbf16>
    %116 = vector.shape_cast %115 : vector<1x1x4x4x64xbf16> to vector<4x4x64xbf16>
    %117 = vector.shape_cast %116 : vector<4x4x64xbf16> to vector<16x64xbf16>
    %c2_102 = arith.constant 2 : index
    %c0_103 = arith.constant 0 : index
    %c0_104 = arith.constant 0 : index
    %118 = vector.load %arg4[%c2_102, %c0_103, %c0_104] : memref<9x64x128xbf16, #tpu.memory_space<vmem>>, vector<1x64x128xbf16>
    %119 = vector.shape_cast %118 : vector<1x64x128xbf16> to vector<64x128xbf16>
    %cst_105 = arith.constant dense<0.000000e+00> : vector<16x128xf32>
    %120 = tpu.matmul %117, %119, %cst_105 {dimension_numbers = #tpu.dot_dimension_numbers<[1], [0], [0], [1], [0, 0, 1, 1], [], []>} : vector<16x64xbf16>, vector<64x128xbf16>, vector<16x128xf32> -> vector<16x128xf32>
    %121 = arith.addf %114, %120 : vector<16x128xf32>
    %c0_106 = arith.constant 0 : index
    %c1_107 = arith.constant 1 : index
    %c1_108 = arith.constant 1 : index
    %c0_109 = arith.constant 0 : index
    %c0_110 = arith.constant 0 : index
    %122 = vector.load %arg17[%c0_106, %c1_107, %c1_108, %c0_109, %c0_110] : memref<2x2x5x5x64xbf16, #tpu.memory_space<vmem>>, vector<1x1x4x4x64xbf16>
    %123 = vector.shape_cast %122 : vector<1x1x4x4x64xbf16> to vector<4x4x64xbf16>
    %124 = vector.shape_cast %123 : vector<4x4x64xbf16> to vector<16x64xbf16>
    %c3_111 = arith.constant 3 : index
    %c0_112 = arith.constant 0 : index
    %c0_113 = arith.constant 0 : index
    %125 = vector.load %arg4[%c3_111, %c0_112, %c0_113] : memref<9x64x128xbf16, #tpu.memory_space<vmem>>, vector<1x64x128xbf16>
    %126 = vector.shape_cast %125 : vector<1x64x128xbf16> to vector<64x128xbf16>
    %cst_114 = arith.constant dense<0.000000e+00> : vector<16x128xf32>
    %127 = tpu.matmul %124, %126, %cst_114 {dimension_numbers = #tpu.dot_dimension_numbers<[1], [0], [0], [1], [0, 0, 1, 1], [], []>} : vector<16x64xbf16>, vector<64x128xbf16>, vector<16x128xf32> -> vector<16x128xf32>
    %128 = arith.addf %121, %127 : vector<16x128xf32>
    %c0_115 = arith.constant 0 : index
    %c0_116 = arith.constant 0 : index
    %c1_117 = arith.constant 1 : index
    %c1_118 = arith.constant 1 : index
    %c0_119 = arith.constant 0 : index
    %129 = vector.load %arg17[%c0_115, %c0_116, %c1_117, %c1_118, %c0_119] : memref<2x2x5x5x64xbf16, #tpu.memory_space<vmem>>, vector<1x1x4x4x64xbf16>
    %130 = vector.shape_cast %129 : vector<1x1x4x4x64xbf16> to vector<4x4x64xbf16>
    %131 = vector.shape_cast %130 : vector<4x4x64xbf16> to vector<16x64xbf16>
    %c4 = arith.constant 4 : index
    %c0_120 = arith.constant 0 : index
    %c0_121 = arith.constant 0 : index
    %132 = vector.load %arg4[%c4, %c0_120, %c0_121] : memref<9x64x128xbf16, #tpu.memory_space<vmem>>, vector<1x64x128xbf16>
    %133 = vector.shape_cast %132 : vector<1x64x128xbf16> to vector<64x128xbf16>
    %cst_122 = arith.constant dense<0.000000e+00> : vector<16x128xf32>
    %134 = tpu.matmul %131, %133, %cst_122 {dimension_numbers = #tpu.dot_dimension_numbers<[1], [0], [0], [1], [0, 0, 1, 1], [], []>} : vector<16x64xbf16>, vector<64x128xbf16>, vector<16x128xf32> -> vector<16x128xf32>
    %135 = arith.addf %128, %134 : vector<16x128xf32>
    %c0_123 = arith.constant 0 : index
    %c1_124 = arith.constant 1 : index
    %c1_125 = arith.constant 1 : index
    %c1_126 = arith.constant 1 : index
    %c0_127 = arith.constant 0 : index
    %136 = vector.load %arg17[%c0_123, %c1_124, %c1_125, %c1_126, %c0_127] : memref<2x2x5x5x64xbf16, #tpu.memory_space<vmem>>, vector<1x1x4x4x64xbf16>
    %137 = vector.shape_cast %136 : vector<1x1x4x4x64xbf16> to vector<4x4x64xbf16>
    %138 = vector.shape_cast %137 : vector<4x4x64xbf16> to vector<16x64xbf16>
    %c5 = arith.constant 5 : index
    %c0_128 = arith.constant 0 : index
    %c0_129 = arith.constant 0 : index
    %139 = vector.load %arg4[%c5, %c0_128, %c0_129] : memref<9x64x128xbf16, #tpu.memory_space<vmem>>, vector<1x64x128xbf16>
    %140 = vector.shape_cast %139 : vector<1x64x128xbf16> to vector<64x128xbf16>
    %cst_130 = arith.constant dense<0.000000e+00> : vector<16x128xf32>
    %141 = tpu.matmul %138, %140, %cst_130 {dimension_numbers = #tpu.dot_dimension_numbers<[1], [0], [0], [1], [0, 0, 1, 1], [], []>} : vector<16x64xbf16>, vector<64x128xbf16>, vector<16x128xf32> -> vector<16x128xf32>
    %142 = arith.addf %135, %141 : vector<16x128xf32>
    %c1_131 = arith.constant 1 : index
    %c1_132 = arith.constant 1 : index
    %c1_133 = arith.constant 1 : index
    %c0_134 = arith.constant 0 : index
    %c0_135 = arith.constant 0 : index
    %143 = vector.load %arg17[%c1_131, %c1_132, %c1_133, %c0_134, %c0_135] : memref<2x2x5x5x64xbf16, #tpu.memory_space<vmem>>, vector<1x1x4x4x64xbf16>
    %144 = vector.shape_cast %143 : vector<1x1x4x4x64xbf16> to vector<4x4x64xbf16>
    %145 = vector.shape_cast %144 : vector<4x4x64xbf16> to vector<16x64xbf16>
    %c6 = arith.constant 6 : index
    %c0_136 = arith.constant 0 : index
    %c0_137 = arith.constant 0 : index
    %146 = vector.load %arg4[%c6, %c0_136, %c0_137] : memref<9x64x128xbf16, #tpu.memory_space<vmem>>, vector<1x64x128xbf16>
    %147 = vector.shape_cast %146 : vector<1x64x128xbf16> to vector<64x128xbf16>
    %cst_138 = arith.constant dense<0.000000e+00> : vector<16x128xf32>
    %148 = tpu.matmul %145, %147, %cst_138 {dimension_numbers = #tpu.dot_dimension_numbers<[1], [0], [0], [1], [0, 0, 1, 1], [], []>} : vector<16x64xbf16>, vector<64x128xbf16>, vector<16x128xf32> -> vector<16x128xf32>
    %149 = arith.addf %142, %148 : vector<16x128xf32>
    %c1_139 = arith.constant 1 : index
    %c0_140 = arith.constant 0 : index
    %c1_141 = arith.constant 1 : index
    %c1_142 = arith.constant 1 : index
    %c0_143 = arith.constant 0 : index
    %150 = vector.load %arg17[%c1_139, %c0_140, %c1_141, %c1_142, %c0_143] : memref<2x2x5x5x64xbf16, #tpu.memory_space<vmem>>, vector<1x1x4x4x64xbf16>
    %151 = vector.shape_cast %150 : vector<1x1x4x4x64xbf16> to vector<4x4x64xbf16>
    %152 = vector.shape_cast %151 : vector<4x4x64xbf16> to vector<16x64xbf16>
    %c7 = arith.constant 7 : index
    %c0_144 = arith.constant 0 : index
    %c0_145 = arith.constant 0 : index
    %153 = vector.load %arg4[%c7, %c0_144, %c0_145] : memref<9x64x128xbf16, #tpu.memory_space<vmem>>, vector<1x64x128xbf16>
    %154 = vector.shape_cast %153 : vector<1x64x128xbf16> to vector<64x128xbf16>
    %cst_146 = arith.constant dense<0.000000e+00> : vector<16x128xf32>
    %155 = tpu.matmul %152, %154, %cst_146 {dimension_numbers = #tpu.dot_dimension_numbers<[1], [0], [0], [1], [0, 0, 1, 1], [], []>} : vector<16x64xbf16>, vector<64x128xbf16>, vector<16x128xf32> -> vector<16x128xf32>
    %156 = arith.addf %149, %155 : vector<16x128xf32>
    %c1_147 = arith.constant 1 : index
    %c1_148 = arith.constant 1 : index
    %c1_149 = arith.constant 1 : index
    %c1_150 = arith.constant 1 : index
    %c0_151 = arith.constant 0 : index
    %157 = vector.load %arg17[%c1_147, %c1_148, %c1_149, %c1_150, %c0_151] : memref<2x2x5x5x64xbf16, #tpu.memory_space<vmem>>, vector<1x1x4x4x64xbf16>
    %158 = vector.shape_cast %157 : vector<1x1x4x4x64xbf16> to vector<4x4x64xbf16>
    %159 = vector.shape_cast %158 : vector<4x4x64xbf16> to vector<16x64xbf16>
    %c8 = arith.constant 8 : index
    %c0_152 = arith.constant 0 : index
    %c0_153 = arith.constant 0 : index
    %160 = vector.load %arg4[%c8, %c0_152, %c0_153] : memref<9x64x128xbf16, #tpu.memory_space<vmem>>, vector<1x64x128xbf16>
    %161 = vector.shape_cast %160 : vector<1x64x128xbf16> to vector<64x128xbf16>
    %cst_154 = arith.constant dense<0.000000e+00> : vector<16x128xf32>
    %162 = tpu.matmul %159, %161, %cst_154 {dimension_numbers = #tpu.dot_dimension_numbers<[1], [0], [0], [1], [0, 0, 1, 1], [], []>} : vector<16x64xbf16>, vector<64x128xbf16>, vector<16x128xf32> -> vector<16x128xf32>
    %163 = arith.addf %156, %162 : vector<16x128xf32>
    %c0_155 = arith.constant 0 : index
    %c0_156 = arith.constant 0 : index
    %164 = vector.load %arg5[%c0_155, %c0_156] : memref<1x128xf32, #tpu.memory_space<vmem>>, vector<1x128xf32>
    %165 = vector.broadcast %164 : vector<1x128xf32> to vector<16x128xf32>
    %166 = arith.addf %163, %165 : vector<16x128xf32>
    %cst_157 = arith.constant 5.000000e-01 : f32
    %167 = vector.broadcast %cst_157 : f32 to vector<16x128xf32>
    %168 = arith.mulf %167, %166 : vector<16x128xf32>
    %169 = arith.mulf %166, %166 : vector<16x128xf32>
    %170 = arith.mulf %169, %166 : vector<16x128xf32>
    %cst_158 = arith.constant 4.471500e-02 : f32
    %171 = vector.broadcast %cst_158 : f32 to vector<16x128xf32>
    %172 = arith.mulf %171, %170 : vector<16x128xf32>
    %173 = arith.addf %166, %172 : vector<16x128xf32>
    %cst_159 = arith.constant 0.797884583 : f32
    %174 = vector.broadcast %cst_159 : f32 to vector<16x128xf32>
    %175 = arith.mulf %174, %173 : vector<16x128xf32>
    %176 = math.tanh %175 : vector<16x128xf32>
    %cst_160 = arith.constant 1.000000e+00 : f32
    %177 = vector.broadcast %cst_160 : f32 to vector<16x128xf32>
    %178 = arith.addf %177, %176 : vector<16x128xf32>
    %179 = arith.mulf %168, %178 : vector<16x128xf32>
    %180 = arith.truncf %179 : vector<16x128xf32> to vector<16x128xbf16>
    %181 = vector.shape_cast %180 : vector<16x128xbf16> to vector<2x2x2x2x128xbf16>
    %182 = vector.extract_strided_slice %181 {offsets = [0, 0, 0, 0, 0], sizes = [2, 1, 2, 1, 128], strides = [1, 1, 1, 1, 1]} : vector<2x2x2x2x128xbf16> to vector<2x1x2x1x128xbf16>
    %183 = vector.shape_cast %182 : vector<2x1x2x1x128xbf16> to vector<2x2x128xbf16>
    %c0_161 = arith.constant 0 : index
    %c0_162 = arith.constant 0 : index
    %c1_163 = arith.constant 1 : index
    %c1_164 = arith.constant 1 : index
    %c0_165 = arith.constant 0 : index
    %184 = vector.load %arg18[%c0_161, %c0_162, %c1_163, %c1_164, %c0_165] : memref<2x2x3x3x128xbf16, #tpu.memory_space<vmem>>, vector<1x1x2x2x128xbf16>
    %185 = vector.shape_cast %184 : vector<1x1x2x2x128xbf16> to vector<2x2x128xbf16>
    %186 = vector.shape_cast %183 : vector<2x2x128xbf16> to vector<1x1x2x2x128xbf16>
    tpu.vector_store %arg18[%c0_161, %c0_162, %c1_163, %c1_164, %c0_165], %186 {strides = array<i32>} : memref<2x2x3x3x128xbf16, #tpu.memory_space<vmem>>, vector<1x1x2x2x128xbf16>,
    %187 = vector.extract_strided_slice %181 {offsets = [0, 0, 0, 1, 0], sizes = [2, 1, 2, 1, 128], strides = [1, 1, 1, 1, 1]} : vector<2x2x2x2x128xbf16> to vector<2x1x2x1x128xbf16>
    %188 = vector.shape_cast %187 : vector<2x1x2x1x128xbf16> to vector<2x2x128xbf16>
    %c0_166 = arith.constant 0 : index
    %c1_167 = arith.constant 1 : index
    %c1_168 = arith.constant 1 : index
    %c1_169 = arith.constant 1 : index
    %c0_170 = arith.constant 0 : index
    %189 = vector.load %arg18[%c0_166, %c1_167, %c1_168, %c1_169, %c0_170] : memref<2x2x3x3x128xbf16, #tpu.memory_space<vmem>>, vector<1x1x2x2x128xbf16>
    %190 = vector.shape_cast %189 : vector<1x1x2x2x128xbf16> to vector<2x2x128xbf16>
    %191 = vector.shape_cast %188 : vector<2x2x128xbf16> to vector<1x1x2x2x128xbf16>
    tpu.vector_store %arg18[%c0_166, %c1_167, %c1_168, %c1_169, %c0_170], %191 {strides = array<i32>} : memref<2x2x3x3x128xbf16, #tpu.memory_space<vmem>>, vector<1x1x2x2x128xbf16>,
    %192 = vector.extract_strided_slice %181 {offsets = [0, 1, 0, 0, 0], sizes = [2, 1, 2, 1, 128], strides = [1, 1, 1, 1, 1]} : vector<2x2x2x2x128xbf16> to vector<2x1x2x1x128xbf16>
    %193 = vector.shape_cast %192 : vector<2x1x2x1x128xbf16> to vector<2x2x128xbf16>
    %c1_171 = arith.constant 1 : index
    %c0_172 = arith.constant 0 : index
    %c1_173 = arith.constant 1 : index
    %c1_174 = arith.constant 1 : index
    %c0_175 = arith.constant 0 : index
    %194 = vector.load %arg18[%c1_171, %c0_172, %c1_173, %c1_174, %c0_175] : memref<2x2x3x3x128xbf16, #tpu.memory_space<vmem>>, vector<1x1x2x2x128xbf16>
    %195 = vector.shape_cast %194 : vector<1x1x2x2x128xbf16> to vector<2x2x128xbf16>
    %196 = vector.shape_cast %193 : vector<2x2x128xbf16> to vector<1x1x2x2x128xbf16>
    tpu.vector_store %arg18[%c1_171, %c0_172, %c1_173, %c1_174, %c0_175], %196 {strides = array<i32>} : memref<2x2x3x3x128xbf16, #tpu.memory_space<vmem>>, vector<1x1x2x2x128xbf16>,
    %197 = vector.extract_strided_slice %181 {offsets = [0, 1, 0, 1, 0], sizes = [2, 1, 2, 1, 128], strides = [1, 1, 1, 1, 1]} : vector<2x2x2x2x128xbf16> to vector<2x1x2x1x128xbf16>
    %198 = vector.shape_cast %197 : vector<2x1x2x1x128xbf16> to vector<2x2x128xbf16>
    %c1_176 = arith.constant 1 : index
    %c1_177 = arith.constant 1 : index
    %c1_178 = arith.constant 1 : index
    %c1_179 = arith.constant 1 : index
    %c0_180 = arith.constant 0 : index
    %199 = vector.load %arg18[%c1_176, %c1_177, %c1_178, %c1_179, %c0_180] : memref<2x2x3x3x128xbf16, #tpu.memory_space<vmem>>, vector<1x1x2x2x128xbf16>
    %200 = vector.shape_cast %199 : vector<1x1x2x2x128xbf16> to vector<2x2x128xbf16>
    %201 = vector.shape_cast %198 : vector<2x2x128xbf16> to vector<1x1x2x2x128xbf16>
    tpu.vector_store %arg18[%c1_176, %c1_177, %c1_178, %c1_179, %c0_180], %201 {strides = array<i32>} : memref<2x2x3x3x128xbf16, #tpu.memory_space<vmem>>, vector<1x1x2x2x128xbf16>,
    %c1_181 = arith.constant 1 : index
    %c1_182 = arith.constant 1 : index
    %c0_183 = arith.constant 0 : index
    %c0_184 = arith.constant 0 : index
    %c0_185 = arith.constant 0 : index
    %202 = vector.load %arg18[%c1_181, %c1_182, %c0_183, %c0_184, %c0_185] : memref<2x2x3x3x128xbf16, #tpu.memory_space<vmem>>, vector<1x1x2x2x128xbf16>
    %203 = vector.shape_cast %202 : vector<1x1x2x2x128xbf16> to vector<2x2x128xbf16>
    %204 = vector.shape_cast %203 : vector<2x2x128xbf16> to vector<4x128xbf16>
    %c0_186 = arith.constant 0 : index
    %c0_187 = arith.constant 0 : index
    %c0_188 = arith.constant 0 : index
    %205 = vector.load %arg6[%c0_186, %c0_187, %c0_188] : memref<9x128x256xbf16, #tpu.memory_space<vmem>>, vector<1x128x256xbf16>
    %206 = vector.shape_cast %205 : vector<1x128x256xbf16> to vector<128x256xbf16>
    %cst_189 = arith.constant dense<0.000000e+00> : vector<4x256xf32>
    %207 = tpu.matmul %204, %206, %cst_189 {dimension_numbers = #tpu.dot_dimension_numbers<[1], [0], [0], [1], [0, 0, 1, 1], [], []>} : vector<4x128xbf16>, vector<128x256xbf16>, vector<4x256xf32> -> vector<4x256xf32>
    %c1_190 = arith.constant 1 : index
    %c0_191 = arith.constant 0 : index
    %c0_192 = arith.constant 0 : index
    %c1_193 = arith.constant 1 : index
    %c0_194 = arith.constant 0 : index
    %208 = vector.load %arg18[%c1_190, %c0_191, %c0_192, %c1_193, %c0_194] : memref<2x2x3x3x128xbf16, #tpu.memory_space<vmem>>, vector<1x1x2x2x128xbf16>
    %209 = vector.shape_cast %208 : vector<1x1x2x2x128xbf16> to vector<2x2x128xbf16>
    %210 = vector.shape_cast %209 : vector<2x2x128xbf16> to vector<4x128xbf16>
    %c1_195 = arith.constant 1 : index
    %c0_196 = arith.constant 0 : index
    %c0_197 = arith.constant 0 : index
    %211 = vector.load %arg6[%c1_195, %c0_196, %c0_197] : memref<9x128x256xbf16, #tpu.memory_space<vmem>>, vector<1x128x256xbf16>
    %212 = vector.shape_cast %211 : vector<1x128x256xbf16> to vector<128x256xbf16>
    %cst_198 = arith.constant dense<0.000000e+00> : vector<4x256xf32>
    %213 = tpu.matmul %210, %212, %cst_198 {dimension_numbers = #tpu.dot_dimension_numbers<[1], [0], [0], [1], [0, 0, 1, 1], [], []>} : vector<4x128xbf16>, vector<128x256xbf16>, vector<4x256xf32> -> vector<4x256xf32>
    %214 = arith.addf %207, %213 : vector<4x256xf32>
    %c1_199 = arith.constant 1 : index
    %c1_200 = arith.constant 1 : index
    %c0_201 = arith.constant 0 : index
    %c1_202 = arith.constant 1 : index
    %c0_203 = arith.constant 0 : index
    %215 = vector.load %arg18[%c1_199, %c1_200, %c0_201, %c1_202, %c0_203] : memref<2x2x3x3x128xbf16, #tpu.memory_space<vmem>>, vector<1x1x2x2x128xbf16>
    %216 = vector.shape_cast %215 : vector<1x1x2x2x128xbf16> to vector<2x2x128xbf16>
    %217 = vector.shape_cast %216 : vector<2x2x128xbf16> to vector<4x128xbf16>
    %c2_204 = arith.constant 2 : index
    %c0_205 = arith.constant 0 : index
    %c0_206 = arith.constant 0 : index
    %218 = vector.load %arg6[%c2_204, %c0_205, %c0_206] : memref<9x128x256xbf16, #tpu.memory_space<vmem>>, vector<1x128x256xbf16>
    %219 = vector.shape_cast %218 : vector<1x128x256xbf16> to vector<128x256xbf16>
    %cst_207 = arith.constant dense<0.000000e+00> : vector<4x256xf32>
    %220 = tpu.matmul %217, %219, %cst_207 {dimension_numbers = #tpu.dot_dimension_numbers<[1], [0], [0], [1], [0, 0, 1, 1], [], []>} : vector<4x128xbf16>, vector<128x256xbf16>, vector<4x256xf32> -> vector<4x256xf32>
    %221 = arith.addf %214, %220 : vector<4x256xf32>
    %c0_208 = arith.constant 0 : index
    %c1_209 = arith.constant 1 : index
    %c1_210 = arith.constant 1 : index
    %c0_211 = arith.constant 0 : index
    %c0_212 = arith.constant 0 : index
    %222 = vector.load %arg18[%c0_208, %c1_209, %c1_210, %c0_211, %c0_212] : memref<2x2x3x3x128xbf16, #tpu.memory_space<vmem>>, vector<1x1x2x2x128xbf16>
    %223 = vector.shape_cast %222 : vector<1x1x2x2x128xbf16> to vector<2x2x128xbf16>
    %224 = vector.shape_cast %223 : vector<2x2x128xbf16> to vector<4x128xbf16>
    %c3_213 = arith.constant 3 : index
    %c0_214 = arith.constant 0 : index
    %c0_215 = arith.constant 0 : index
    %225 = vector.load %arg6[%c3_213, %c0_214, %c0_215] : memref<9x128x256xbf16, #tpu.memory_space<vmem>>, vector<1x128x256xbf16>
    %226 = vector.shape_cast %225 : vector<1x128x256xbf16> to vector<128x256xbf16>
    %cst_216 = arith.constant dense<0.000000e+00> : vector<4x256xf32>
    %227 = tpu.matmul %224, %226, %cst_216 {dimension_numbers = #tpu.dot_dimension_numbers<[1], [0], [0], [1], [0, 0, 1, 1], [], []>} : vector<4x128xbf16>, vector<128x256xbf16>, vector<4x256xf32> -> vector<4x256xf32>
    %228 = arith.addf %221, %227 : vector<4x256xf32>
    %c0_217 = arith.constant 0 : index
    %c0_218 = arith.constant 0 : index
    %c1_219 = arith.constant 1 : index
    %c1_220 = arith.constant 1 : index
    %c0_221 = arith.constant 0 : index
    %229 = vector.load %arg18[%c0_217, %c0_218, %c1_219, %c1_220, %c0_221] : memref<2x2x3x3x128xbf16, #tpu.memory_space<vmem>>, vector<1x1x2x2x128xbf16>
    %230 = vector.shape_cast %229 : vector<1x1x2x2x128xbf16> to vector<2x2x128xbf16>
    %231 = vector.shape_cast %230 : vector<2x2x128xbf16> to vector<4x128xbf16>
    %c4_222 = arith.constant 4 : index
    %c0_223 = arith.constant 0 : index
    %c0_224 = arith.constant 0 : index
    %232 = vector.load %arg6[%c4_222, %c0_223, %c0_224] : memref<9x128x256xbf16, #tpu.memory_space<vmem>>, vector<1x128x256xbf16>
    %233 = vector.shape_cast %232 : vector<1x128x256xbf16> to vector<128x256xbf16>
    %cst_225 = arith.constant dense<0.000000e+00> : vector<4x256xf32>
    %234 = tpu.matmul %231, %233, %cst_225 {dimension_numbers = #tpu.dot_dimension_numbers<[1], [0], [0], [1], [0, 0, 1, 1], [], []>} : vector<4x128xbf16>, vector<128x256xbf16>, vector<4x256xf32> -> vector<4x256xf32>
    %235 = arith.addf %228, %234 : vector<4x256xf32>
    %c0_226 = arith.constant 0 : index
    %c1_227 = arith.constant 1 : index
    %c1_228 = arith.constant 1 : index
    %c1_229 = arith.constant 1 : index
    %c0_230 = arith.constant 0 : index
    %236 = vector.load %arg18[%c0_226, %c1_227, %c1_228, %c1_229, %c0_230] : memref<2x2x3x3x128xbf16, #tpu.memory_space<vmem>>, vector<1x1x2x2x128xbf16>
    %237 = vector.shape_cast %236 : vector<1x1x2x2x128xbf16> to vector<2x2x128xbf16>
    %238 = vector.shape_cast %237 : vector<2x2x128xbf16> to vector<4x128xbf16>
    %c5_231 = arith.constant 5 : index
    %c0_232 = arith.constant 0 : index
    %c0_233 = arith.constant 0 : index
    %239 = vector.load %arg6[%c5_231, %c0_232, %c0_233] : memref<9x128x256xbf16, #tpu.memory_space<vmem>>, vector<1x128x256xbf16>
    %240 = vector.shape_cast %239 : vector<1x128x256xbf16> to vector<128x256xbf16>
    %cst_234 = arith.constant dense<0.000000e+00> : vector<4x256xf32>
    %241 = tpu.matmul %238, %240, %cst_234 {dimension_numbers = #tpu.dot_dimension_numbers<[1], [0], [0], [1], [0, 0, 1, 1], [], []>} : vector<4x128xbf16>, vector<128x256xbf16>, vector<4x256xf32> -> vector<4x256xf32>
    %242 = arith.addf %235, %241 : vector<4x256xf32>
    %c1_235 = arith.constant 1 : index
    %c1_236 = arith.constant 1 : index
    %c1_237 = arith.constant 1 : index
    %c0_238 = arith.constant 0 : index
    %c0_239 = arith.constant 0 : index
    %243 = vector.load %arg18[%c1_235, %c1_236, %c1_237, %c0_238, %c0_239] : memref<2x2x3x3x128xbf16, #tpu.memory_space<vmem>>, vector<1x1x2x2x128xbf16>
    %244 = vector.shape_cast %243 : vector<1x1x2x2x128xbf16> to vector<2x2x128xbf16>
    %245 = vector.shape_cast %244 : vector<2x2x128xbf16> to vector<4x128xbf16>
    %c6_240 = arith.constant 6 : index
    %c0_241 = arith.constant 0 : index
    %c0_242 = arith.constant 0 : index
    %246 = vector.load %arg6[%c6_240, %c0_241, %c0_242] : memref<9x128x256xbf16, #tpu.memory_space<vmem>>, vector<1x128x256xbf16>
    %247 = vector.shape_cast %246 : vector<1x128x256xbf16> to vector<128x256xbf16>
    %cst_243 = arith.constant dense<0.000000e+00> : vector<4x256xf32>
    %248 = tpu.matmul %245, %247, %cst_243 {dimension_numbers = #tpu.dot_dimension_numbers<[1], [0], [0], [1], [0, 0, 1, 1], [], []>} : vector<4x128xbf16>, vector<128x256xbf16>, vector<4x256xf32> -> vector<4x256xf32>
    %249 = arith.addf %242, %248 : vector<4x256xf32>
    %c1_244 = arith.constant 1 : index
    %c0_245 = arith.constant 0 : index
    %c1_246 = arith.constant 1 : index
    %c1_247 = arith.constant 1 : index
    %c0_248 = arith.constant 0 : index
    %250 = vector.load %arg18[%c1_244, %c0_245, %c1_246, %c1_247, %c0_248] : memref<2x2x3x3x128xbf16, #tpu.memory_space<vmem>>, vector<1x1x2x2x128xbf16>
    %251 = vector.shape_cast %250 : vector<1x1x2x2x128xbf16> to vector<2x2x128xbf16>
    %252 = vector.shape_cast %251 : vector<2x2x128xbf16> to vector<4x128xbf16>
    %c7_249 = arith.constant 7 : index
    %c0_250 = arith.constant 0 : index
    %c0_251 = arith.constant 0 : index
    %253 = vector.load %arg6[%c7_249, %c0_250, %c0_251] : memref<9x128x256xbf16, #tpu.memory_space<vmem>>, vector<1x128x256xbf16>
    %254 = vector.shape_cast %253 : vector<1x128x256xbf16> to vector<128x256xbf16>
    %cst_252 = arith.constant dense<0.000000e+00> : vector<4x256xf32>
    %255 = tpu.matmul %252, %254, %cst_252 {dimension_numbers = #tpu.dot_dimension_numbers<[1], [0], [0], [1], [0, 0, 1, 1], [], []>} : vector<4x128xbf16>, vector<128x256xbf16>, vector<4x256xf32> -> vector<4x256xf32>
    %256 = arith.addf %249, %255 : vector<4x256xf32>
    %c1_253 = arith.constant 1 : index
    %c1_254 = arith.constant 1 : index
    %c1_255 = arith.constant 1 : index
    %c1_256 = arith.constant 1 : index
    %c0_257 = arith.constant 0 : index
    %257 = vector.load %arg18[%c1_253, %c1_254, %c1_255, %c1_256, %c0_257] : memref<2x2x3x3x128xbf16, #tpu.memory_space<vmem>>, vector<1x1x2x2x128xbf16>
    %258 = vector.shape_cast %257 : vector<1x1x2x2x128xbf16> to vector<2x2x128xbf16>
    %259 = vector.shape_cast %258 : vector<2x2x128xbf16> to vector<4x128xbf16>
    %c8_258 = arith.constant 8 : index
    %c0_259 = arith.constant 0 : index
    %c0_260 = arith.constant 0 : index
    %260 = vector.load %arg6[%c8_258, %c0_259, %c0_260] : memref<9x128x256xbf16, #tpu.memory_space<vmem>>, vector<1x128x256xbf16>
    %261 = vector.shape_cast %260 : vector<1x128x256xbf16> to vector<128x256xbf16>
    %cst_261 = arith.constant dense<0.000000e+00> : vector<4x256xf32>
    %262 = tpu.matmul %259, %261, %cst_261 {dimension_numbers = #tpu.dot_dimension_numbers<[1], [0], [0], [1], [0, 0, 1, 1], [], []>} : vector<4x128xbf16>, vector<128x256xbf16>, vector<4x256xf32> -> vector<4x256xf32>
    %263 = arith.addf %256, %262 : vector<4x256xf32>
    %c0_262 = arith.constant 0 : index
    %c0_263 = arith.constant 0 : index
    %264 = vector.load %arg7[%c0_262, %c0_263] : memref<1x256xf32, #tpu.memory_space<vmem>>, vector<1x256xf32>
    %265 = vector.broadcast %264 : vector<1x256xf32> to vector<4x256xf32>
    %266 = arith.addf %263, %265 : vector<4x256xf32>
    %cst_264 = arith.constant 5.000000e-01 : f32
    %267 = vector.broadcast %cst_264 : f32 to vector<4x256xf32>
    %268 = arith.mulf %267, %266 : vector<4x256xf32>
    %269 = arith.mulf %266, %266 : vector<4x256xf32>
    %270 = arith.mulf %269, %266 : vector<4x256xf32>
    %cst_265 = arith.constant 4.471500e-02 : f32
    %271 = vector.broadcast %cst_265 : f32 to vector<4x256xf32>
    %272 = arith.mulf %271, %270 : vector<4x256xf32>
    %273 = arith.addf %266, %272 : vector<4x256xf32>
    %cst_266 = arith.constant 0.797884583 : f32
    %274 = vector.broadcast %cst_266 : f32 to vector<4x256xf32>
    %275 = arith.mulf %274, %273 : vector<4x256xf32>
    %276 = math.tanh %275 : vector<4x256xf32>
    %cst_267 = arith.constant 1.000000e+00 : f32
    %277 = vector.broadcast %cst_267 : f32 to vector<4x256xf32>
    %278 = arith.addf %277, %276 : vector<4x256xf32>
    %279 = arith.mulf %268, %278 : vector<4x256xf32>
    %280 = arith.truncf %279 : vector<4x256xf32> to vector<4x256xbf16>
    %c0_268 = arith.constant 0 : index
    %c0_269 = arith.constant 0 : index
    %281 = vector.load %arg8[%c0_268, %c0_269] : memref<256x512xbf16, #tpu.memory_space<vmem>>, vector<256x512xbf16>
    %cst_270 = arith.constant dense<0.000000e+00> : vector<4x512xf32>
    %282 = tpu.matmul %280, %281, %cst_270 {dimension_numbers = #tpu.dot_dimension_numbers<[1], [0], [0], [1], [0, 0, 1, 1], [], []>} : vector<4x256xbf16>, vector<256x512xbf16>, vector<4x512xf32> -> vector<4x512xf32>
    %283 = vector.extract_strided_slice %282 {offsets = [0, 0], sizes = [4, 128], strides = [1, 1]} : vector<4x512xf32> to vector<4x128xf32>
    %284 = vector.extract_strided_slice %282 {offsets = [0, 128], sizes = [4, 128], strides = [1, 1]} : vector<4x512xf32> to vector<4x128xf32>
    %285 = vector.extract_strided_slice %282 {offsets = [0, 256], sizes = [4, 128], strides = [1, 1]} : vector<4x512xf32> to vector<4x128xf32>
    %286 = vector.extract_strided_slice %282 {offsets = [0, 384], sizes = [4, 128], strides = [1, 1]} : vector<4x512xf32> to vector<4x128xf32>
    %287 = tpu.concatenate %283, %284, %285, %286 in 0 : vector<4x128xf32>, vector<4x128xf32>, vector<4x128xf32>, vector<4x128xf32> -> vector<16x128xf32>
    %c0_271 = arith.constant 0 : index
    %c0_272 = arith.constant 0 : index
    %288 = vector.load %arg9[%c0_271, %c0_272] : memref<1x128xf32, #tpu.memory_space<vmem>>, vector<1x128xf32>
    %289 = vector.broadcast %288 : vector<1x128xf32> to vector<16x128xf32>
    %290 = arith.addf %287, %289 : vector<16x128xf32>
    %cst_273 = arith.constant 5.000000e-01 : f32
    %291 = vector.broadcast %cst_273 : f32 to vector<16x128xf32>
    %292 = arith.mulf %291, %290 : vector<16x128xf32>
    %293 = arith.mulf %290, %290 : vector<16x128xf32>
    %294 = arith.mulf %293, %290 : vector<16x128xf32>
    %cst_274 = arith.constant 4.471500e-02 : f32
    %295 = vector.broadcast %cst_274 : f32 to vector<16x128xf32>
    %296 = arith.mulf %295, %294 : vector<16x128xf32>
    %297 = arith.addf %290, %296 : vector<16x128xf32>
    %cst_275 = arith.constant 0.797884583 : f32
    %298 = vector.broadcast %cst_275 : f32 to vector<16x128xf32>
    %299 = arith.mulf %298, %297 : vector<16x128xf32>
    %300 = math.tanh %299 : vector<16x128xf32>
    %cst_276 = arith.constant 1.000000e+00 : f32
    %301 = vector.broadcast %cst_276 : f32 to vector<16x128xf32>
    %302 = arith.addf %301, %300 : vector<16x128xf32>
    %303 = arith.mulf %292, %302 : vector<16x128xf32>
    %304 = arith.truncf %303 : vector<16x128xf32> to vector<16x128xbf16>
    %c0_277 = arith.constant 0 : index
    %c0_278 = arith.constant 0 : index
    %305 = vector.load %arg10[%c0_277, %c0_278] : memref<128x256xbf16, #tpu.memory_space<vmem>>, vector<128x256xbf16>
    %cst_279 = arith.constant dense<0.000000e+00> : vector<16x256xf32>
    %306 = tpu.matmul %304, %305, %cst_279 {dimension_numbers = #tpu.dot_dimension_numbers<[1], [0], [0], [1], [0, 0, 1, 1], [], []>} : vector<16x128xbf16>, vector<128x256xbf16>, vector<16x256xf32> -> vector<16x256xf32>
    %307 = vector.extract_strided_slice %306 {offsets = [0, 0], sizes = [16, 64], strides = [1, 1]} : vector<16x256xf32> to vector<16x64xf32>
    %308 = vector.extract_strided_slice %306 {offsets = [0, 64], sizes = [16, 64], strides = [1, 1]} : vector<16x256xf32> to vector<16x64xf32>
    %309 = vector.extract_strided_slice %306 {offsets = [0, 128], sizes = [16, 64], strides = [1, 1]} : vector<16x256xf32> to vector<16x64xf32>
    %310 = vector.extract_strided_slice %306 {offsets = [0, 192], sizes = [16, 64], strides = [1, 1]} : vector<16x256xf32> to vector<16x64xf32>
    %311 = tpu.concatenate %307, %308, %309, %310 in 0 : vector<16x64xf32>, vector<16x64xf32>, vector<16x64xf32>, vector<16x64xf32> -> vector<64x64xf32>
    %c0_280 = arith.constant 0 : index
    %c0_281 = arith.constant 0 : index
    %312 = vector.load %arg11[%c0_280, %c0_281] : memref<1x64xf32, #tpu.memory_space<vmem>>, vector<1x64xf32>
    %313 = vector.broadcast %312 : vector<1x64xf32> to vector<64x64xf32>
    %314 = arith.addf %311, %313 : vector<64x64xf32>
    %cst_282 = arith.constant 5.000000e-01 : f32
    %315 = vector.broadcast %cst_282 : f32 to vector<64x64xf32>
    %316 = arith.mulf %315, %314 : vector<64x64xf32>
    %317 = arith.mulf %314, %314 : vector<64x64xf32>
    %318 = arith.mulf %317, %314 : vector<64x64xf32>
    %cst_283 = arith.constant 4.471500e-02 : f32
    %319 = vector.broadcast %cst_283 : f32 to vector<64x64xf32>
    %320 = arith.mulf %319, %318 : vector<64x64xf32>
    %321 = arith.addf %314, %320 : vector<64x64xf32>
    %cst_284 = arith.constant 0.797884583 : f32
    %322 = vector.broadcast %cst_284 : f32 to vector<64x64xf32>
    %323 = arith.mulf %322, %321 : vector<64x64xf32>
    %324 = math.tanh %323 : vector<64x64xf32>
    %cst_285 = arith.constant 1.000000e+00 : f32
    %325 = vector.broadcast %cst_285 : f32 to vector<64x64xf32>
    %326 = arith.addf %325, %324 : vector<64x64xf32>
    %327 = arith.mulf %316, %326 : vector<64x64xf32>
    %328 = arith.truncf %327 : vector<64x64xf32> to vector<64x64xbf16>
    %c0_286 = arith.constant 0 : index
    %c0_287 = arith.constant 0 : index
    %329 = vector.load %arg12[%c0_286, %c0_287] : memref<64x128xbf16, #tpu.memory_space<vmem>>, vector<64x128xbf16>
    %cst_288 = arith.constant dense<0.000000e+00> : vector<64x128xf32>
    %330 = tpu.matmul %328, %329, %cst_288 {dimension_numbers = #tpu.dot_dimension_numbers<[1], [0], [0], [1], [0, 0, 1, 1], [], []>} : vector<64x64xbf16>, vector<64x128xbf16>, vector<64x128xf32> -> vector<64x128xf32>
    %331 = vector.extract_strided_slice %330 {offsets = [0, 0], sizes = [64, 32], strides = [1, 1]} : vector<64x128xf32> to vector<64x32xf32>
    %332 = vector.extract_strided_slice %330 {offsets = [0, 32], sizes = [64, 32], strides = [1, 1]} : vector<64x128xf32> to vector<64x32xf32>
    %333 = vector.extract_strided_slice %330 {offsets = [0, 64], sizes = [64, 32], strides = [1, 1]} : vector<64x128xf32> to vector<64x32xf32>
    %334 = vector.extract_strided_slice %330 {offsets = [0, 96], sizes = [64, 32], strides = [1, 1]} : vector<64x128xf32> to vector<64x32xf32>
    %335 = tpu.concatenate %331, %332, %333, %334 in 0 : vector<64x32xf32>, vector<64x32xf32>, vector<64x32xf32>, vector<64x32xf32> -> vector<256x32xf32>
    %c0_289 = arith.constant 0 : index
    %c0_290 = arith.constant 0 : index
    %336 = vector.load %arg13[%c0_289, %c0_290] : memref<1x32xf32, #tpu.memory_space<vmem>>, vector<1x32xf32>
    %337 = vector.broadcast %336 : vector<1x32xf32> to vector<256x32xf32>
    %338 = arith.addf %335, %337 : vector<256x32xf32>
    %cst_291 = arith.constant 5.000000e-01 : f32
    %339 = vector.broadcast %cst_291 : f32 to vector<256x32xf32>
    %340 = arith.mulf %339, %338 : vector<256x32xf32>
    %341 = arith.mulf %338, %338 : vector<256x32xf32>
    %342 = arith.mulf %341, %338 : vector<256x32xf32>
    %cst_292 = arith.constant 4.471500e-02 : f32
    %343 = vector.broadcast %cst_292 : f32 to vector<256x32xf32>
    %344 = arith.mulf %343, %342 : vector<256x32xf32>
    %345 = arith.addf %338, %344 : vector<256x32xf32>
    %cst_293 = arith.constant 0.797884583 : f32
    %346 = vector.broadcast %cst_293 : f32 to vector<256x32xf32>
    %347 = arith.mulf %346, %345 : vector<256x32xf32>
    %348 = math.tanh %347 : vector<256x32xf32>
    %cst_294 = arith.constant 1.000000e+00 : f32
    %349 = vector.broadcast %cst_294 : f32 to vector<256x32xf32>
    %350 = arith.addf %349, %348 : vector<256x32xf32>
    %351 = arith.mulf %340, %350 : vector<256x32xf32>
    %352 = vector.shape_cast %351 : vector<256x32xf32> to vector<2x128x32xf32>
    %c0_295 = arith.constant 0 : index
    %c0_296 = arith.constant 0 : index
    %c0_297 = arith.constant 0 : index
    %353 = vector.load %arg14[%c0_295, %c0_296, %c0_297] : memref<1x1x32xf32, #tpu.memory_space<vmem>>, vector<1x1x32xf32>
    %354 = vector.broadcast %353 : vector<1x1x32xf32> to vector<2x128x32xf32>
    %355 = arith.mulf %352, %354 : vector<2x128x32xf32>
    %cst_298 = arith.constant dense<0.000000e+00> : vector<2x128xf32>
    %356 = vector.multi_reduction <add>, %355, %cst_298 [2] : vector<2x128x32xf32> to vector<2x128xf32>
    %c0_299 = arith.constant 0 : index
    %c0_300 = arith.constant 0 : index
    %357 = vector.load %arg15[%c0_299, %c0_300] : memref<1x1xf32, #tpu.memory_space<vmem>>, vector<1x1xf32>
    %358 = vector.broadcast %357 : vector<1x1xf32> to vector<2x128xf32>
    %359 = arith.addf %356, %358 : vector<2x128xf32>
    %360 = arith.negf %359 : vector<2x128xf32>
    %361 = math.exp %360 : vector<2x128xf32>
    %cst_301 = arith.constant 1.000000e+00 : f32
    %362 = vector.broadcast %cst_301 : f32 to vector<2x128xf32>
    %363 = arith.addf %362, %361 : vector<2x128xf32>
    %364 = arith.divf %362, %363 : vector<2x128xf32>
    %c0_302 = arith.constant 0 : index
    %c0_303 = arith.constant 0 : index
    %c0_304 = arith.constant 0 : index
    %365 = vector.load %arg16[%c0_302, %c0_303, %c0_304] : memref<1x2x128xf32, #tpu.memory_space<vmem>>, vector<1x2x128xf32>
    %366 = vector.shape_cast %365 : vector<1x2x128xf32> to vector<2x128xf32>
    %367 = vector.shape_cast %364 : vector<2x128xf32> to vector<1x2x128xf32>
    tpu.vector_store %arg16[%c0_302, %c0_303, %c0_304], %367 {strides = array<i32>} : memref<1x2x128xf32, #tpu.memory_space<vmem>>, vector<1x2x128xf32>,
    return
  }
  func.func @transform_0(%arg0: i32) -> (i32, i32, i32, i32) {
    %c0_i32 = arith.constant 0 : i32
    %c0_i32_0 = arith.constant 0 : i32
    %c0_i32_1 = arith.constant 0 : i32
    %c0_i32_2 = arith.constant 0 : i32
    return %arg0, %c0_i32, %c0_i32_0, %c0_i32_1 : i32, i32, i32, i32
  }
  func.func @transform_1(%arg0: i32) -> (i32, i32) {
    %c0_i32 = arith.constant 0 : i32
    %c0_i32_0 = arith.constant 0 : i32
    %c0_i32_1 = arith.constant 0 : i32
    return %c0_i32, %c0_i32_0 : i32, i32
  }
  func.func @transform_2(%arg0: i32) -> (i32, i32) {
    %c0_i32 = arith.constant 0 : i32
    %c0_i32_0 = arith.constant 0 : i32
    %c0_i32_1 = arith.constant 0 : i32
    return %c0_i32, %c0_i32_0 : i32, i32
  }
  func.func @transform_3(%arg0: i32) -> (i32, i32, i32) {
    %c0_i32 = arith.constant 0 : i32
    %c0_i32_0 = arith.constant 0 : i32
    %c0_i32_1 = arith.constant 0 : i32
    %c0_i32_2 = arith.constant 0 : i32
    return %c0_i32, %c0_i32_0, %c0_i32_1 : i32, i32, i32
  }
  func.func @transform_4(%arg0: i32) -> (i32, i32) {
    %c0_i32 = arith.constant 0 : i32
    %c0_i32_0 = arith.constant 0 : i32
    %c0_i32_1 = arith.constant 0 : i32
    return %c0_i32, %c0_i32_0 : i32, i32
  }
  func.func @transform_5(%arg0: i32) -> (i32, i32, i32) {
    %c0_i32 = arith.constant 0 : i32
    %c0_i32_0 = arith.constant 0 : i32
    %c0_i32_1 = arith.constant 0 : i32
    %c0_i32_2 = arith.constant 0 : i32
    return %c0_i32, %c0_i32_0, %c0_i32_1 : i32, i32, i32
  }
  func.func @transform_6(%arg0: i32) -> (i32, i32) {
    %c0_i32 = arith.constant 0 : i32
    %c0_i32_0 = arith.constant 0 : i32
    %c0_i32_1 = arith.constant 0 : i32
    return %c0_i32, %c0_i32_0 : i32, i32
  }
  func.func @transform_7(%arg0: i32) -> (i32, i32) {
    %c0_i32 = arith.constant 0 : i32
    %c0_i32_0 = arith.constant 0 : i32
    %c0_i32_1 = arith.constant 0 : i32
    return %c0_i32, %c0_i32_0 : i32, i32
  }
  func.func @transform_8(%arg0: i32) -> (i32, i32) {
    %c0_i32 = arith.constant 0 : i32
    %c0_i32_0 = arith.constant 0 : i32
    %c0_i32_1 = arith.constant 0 : i32
    return %c0_i32, %c0_i32_0 : i32, i32
  }
  func.func @transform_9(%arg0: i32) -> (i32, i32) {
    %c0_i32 = arith.constant 0 : i32
    %c0_i32_0 = arith.constant 0 : i32
    %c0_i32_1 = arith.constant 0 : i32
    return %c0_i32, %c0_i32_0 : i32, i32
  }
  func.func @transform_10(%arg0: i32) -> (i32, i32) {
    %c0_i32 = arith.constant 0 : i32
    %c0_i32_0 = arith.constant 0 : i32
    %c0_i32_1 = arith.constant 0 : i32
    return %c0_i32, %c0_i32_0 : i32, i32
  }
  func.func @transform_11(%arg0: i32) -> (i32, i32) {
    %c0_i32 = arith.constant 0 : i32
    %c0_i32_0 = arith.constant 0 : i32
    %c0_i32_1 = arith.constant 0 : i32
    return %c0_i32, %c0_i32_0 : i32, i32
  }
  func.func @transform_12(%arg0: i32) -> (i32, i32) {
    %c0_i32 = arith.constant 0 : i32
    %c0_i32_0 = arith.constant 0 : i32
    %c0_i32_1 = arith.constant 0 : i32
    return %c0_i32, %c0_i32_0 : i32, i32
  }
  func.func @transform_13(%arg0: i32) -> (i32, i32, i32) {
    %c0_i32 = arith.constant 0 : i32
    %c0_i32_0 = arith.constant 0 : i32
    %c0_i32_1 = arith.constant 0 : i32
    %c0_i32_2 = arith.constant 0 : i32
    return %c0_i32, %c0_i32_0, %c0_i32_1 : i32, i32, i32
  }
  func.func @transform_14(%arg0: i32) -> (i32, i32) {
    %c0_i32 = arith.constant 0 : i32
    %c0_i32_0 = arith.constant 0 : i32
    %c0_i32_1 = arith.constant 0 : i32
    return %c0_i32, %c0_i32_0 : i32, i32
  }
  func.func @transform_15(%arg0: i32) -> (i32, i32, i32) {
    %c0_i32 = arith.constant 0 : i32
    %c0_i32_0 = arith.constant 0 : i32
    %c0_i32_1 = arith.constant 0 : i32
    return %arg0, %c0_i32, %c0_i32_0 : i32, i32, i32
  }
}

</mosaic_0001>

<llo_original>
// kernel: postprocess_forward.1
$region0: #{postprocess_forward.1}
  #allocation0 [shape = 'u32[]', space=smem, size = 0x4, offset = 0x4, fixed_abs, tag = 'smem constant byte address 0x4 - core index']
  #allocation1 [shape = 'u32[72,128]{1,0:T(1,128)}', space=vmem, size = 0x9000, scoped, tag = 'internal scratch']
  #allocation2 [shape = 'bf16[2,2,5,5,64]{4,3,2,1,0:T(8,128)(2,1)}', space=vmem, size = 0xa000, scoped, tag = 'scratch operand']
  #allocation3 [shape = 'bf16[2,2,3,3,128]{4,3,2,1,0:T(4,128)(2,1)}', space=vmem, size = 0x3000, scoped, tag = 'scratch operand']
  #allocation4 [shape = 'f32[1,1]{1,0:T(1,128)S(1)}', space=vmem, size = 0x200, scoped, tag = 'scoped memory for postprocess_forward.1']
  %s0 = inlined_call_operand.vmem [shape: f32[2,4,16,16], index: 0, kind: input, shape index: {}]
  %s1 = inlined_call_operand.vmem [shape: f32[16,64], index: 1, kind: input, shape index: {}]
  %s2 = inlined_call_operand.vmem [shape: f32[1,64], index: 2, kind: input, shape index: {}]
  %s3 = inlined_call_operand.vmem [shape: bf16[9,64,128], index: 3, kind: input, shape index: {}]
  %s4 = inlined_call_operand.vmem [shape: f32[1,128], index: 4, kind: input, shape index: {}]
  %s5 = inlined_call_operand.vmem [shape: bf16[9,128,256], index: 5, kind: input, shape index: {}]
  %s6 = inlined_call_operand.vmem [shape: f32[1,256], index: 6, kind: input, shape index: {}]
  %s7 = inlined_call_operand.vmem [shape: bf16[256,512], index: 7, kind: input, shape index: {}]
  %s8 = inlined_call_operand.vmem [shape: f32[1,128], index: 8, kind: input, shape index: {}]
  %s9 = inlined_call_operand.vmem [shape: bf16[128,256], index: 9, kind: input, shape index: {}]
  %s10 = inlined_call_operand.vmem [shape: f32[1,64], index: 10, kind: input, shape index: {}]
  %s11 = inlined_call_operand.vmem [shape: bf16[64,128], index: 11, kind: input, shape index: {}]
  %s12 = inlined_call_operand.vmem [shape: f32[1,32], index: 12, kind: input, shape index: {}]
  %s13 = inlined_call_operand.vmem [shape: f32[1,1,32], index: 13, kind: input, shape index: {}]
  %s14 = inlined_call_operand.<no memory space> [shape: f32[1,1], index: 14, kind: input, shape index: {}]
  %s15 = inlined_call_operand.vmem [shape: f32[2,2,128], index: 15, kind: output, shape index: {}]
  %s16 = sld [smem:[#allocation0]]
  $region93: #{postprocess_forward.1} parent=0
    _
  %s18 = ssub.s32 1, %s16
  %s19 = scalar_select 0, %s18, %s16
  %v20 = vstv %s14
  %21 = vst [vmem:[#allocation4] sm:$0x1] %v20
  loop: start=0, step=1, limit=4
  $region2: #{postprocess_forward.1} parent=0 // loop_pre_header
    _
  $region3: #{postprocess_forward.1} parent=0 // loop_header
    %s23 = sphi 0, %s27
    %p24 = scmp.ge.s32.totalorder %s23, 4
    %s33 = sphi 0, %s35
    %s36 = sphi 0, %s33
    %s37 = sphi 0, %s36
    %s53 = sphi 0, %s37
    %s57 = sphi 0, %s57
    %s59 = sphi 0, %s57
    %s60 = sphi 0, %s59
    %s74 = sphi 0, %s60
    %s78 = sphi 0, %s78
    %s80 = sphi 0, %s78
    %s81 = sphi 0, %s80
    %s95 = sphi 0, %s81
    %s99 = sphi 0, %s99
    %s101 = sphi 0, %s99
    %s102 = sphi 0, %s101
    %s116 = sphi 0, %s102
    %s120 = sphi 0, %s120
    %s122 = sphi 0, %s120
    %s123 = sphi 0, %s122
    %s137 = sphi 0, %s123
    %s141 = sphi 0, %s141
    %s143 = sphi 0, %s141
    %s144 = sphi 0, %s143
    %s158 = sphi 0, %s144
    %s162 = sphi 0, %s162
    %s164 = sphi 0, %s162
    %s165 = sphi 0, %s164
    %s179 = sphi 0, %s165
    %s183 = sphi 0, %s183
    %s185 = sphi 0, %s183
    %s186 = sphi 0, %s185
    %s200 = sphi 0, %s186
    %s204 = sphi 0, %s204
    %s206 = sphi 0, %s204
    %s207 = sphi 0, %s206
    %s221 = sphi 0, %s207
    %s225 = sphi 0, %s225
    %s227 = sphi 0, %s225
    %s228 = sphi 0, %s227
    %s242 = sphi 0, %s228
    %s246 = sphi 0, %s246
    %s248 = sphi 0, %s246
    %s249 = sphi 0, %s248
    %s263 = sphi 0, %s249
    %s267 = sphi 0, %s267
    %s269 = sphi 0, %s267
    %s270 = sphi 0, %s269
    %s284 = sphi 0, %s270
    %s288 = sphi 0, %s288
    %s290 = sphi 0, %s288
    %s291 = sphi 0, %s290
    %s305 = sphi 0, %s291
    %s309 = sphi 0, %s309
    %s311 = sphi 0, %s309
    %s312 = sphi 0, %s311
    %s326 = sphi 0, %s312
    %s330 = sphi 0, %s330
    %s332 = sphi 0, %s330
    %s333 = sphi 0, %s332
    %s347 = sphi 0, %s333
    %s353 = sphi 0, %s355
    %s356 = sphi 0, %s353
    %s357 = sphi 0, %s356
    %s373 = sphi 0, %s357
  $region4: #{postprocess_forward.1} parent=0 // loop_header_branch
    %26 = sbr.rel (%p24) target = $region8
  $region5: #{postprocess_forward.1} parent=0 // loop_body
    %s28 = ssub.s32 %s23, 1
    %s29 = ssub.s32 %s23, 2
    %s30 = sadd.s32 %s23, 1
    %s31 = ssub.s32 %s23, %s30
    %p32 = scmp.eq.s32.totalorder %s31, 0
    %s34 = sadd.s32 %s33, 1
    %s35 = scalar_select %p32, %s33, %s34
    %p38 = pneg %p32
    %p39 = scmp.eq.s32.totalorder %s23, 1
    %p40 = por %p38, %p39
    %p41 = scmp.ne.s32.totalorder %s33, %s36
    %p42 = scmp.eq.s32.totalorder %s23, 0
    %p43 = por %p41, %p42
    %p44 = scmp.ne.s32.totalorder %s33, %s36
    %p45 = scmp.eq.s32.totalorder %s28, 1
    %p46 = por %p44, %p45
    %p47 = scmp.ne.s32.totalorder %s36, %s37
    %p48 = scmp.eq.s32.totalorder %s28, 0
    %p49 = por %p47, %p48
    %p50 = scmp.ne.s32.totalorder %s36, %s37
    %p51 = scmp.eq.s32.totalorder %s29, 1
    %p52 = por %p50, %p51
    %p54 = scmp.ne.s32.totalorder %s37, %s53
    %p55 = scmp.eq.s32.totalorder %s29, 0
    %p56 = por %p54, %p55
    %s58 = sadd.s32 %s57, 1
    %p61 = scmp.eq.s32.totalorder %s23, 1
    %p62 = scmp.ne.s32.totalorder %s57, %s59
    %p63 = scmp.eq.s32.totalorder %s23, 0
    %p64 = por %p62, %p63
    %p65 = scmp.ne.s32.totalorder %s57, %s59
    %p66 = scmp.eq.s32.totalorder %s28, 1
    %p67 = por %p65, %p66
    %p68 = scmp.ne.s32.totalorder %s59, %s60
    %p69 = scmp.eq.s32.totalorder %s28, 0
    %p70 = por %p68, %p69
    %p71 = scmp.ne.s32.totalorder %s59, %s60
    %p72 = scmp.eq.s32.totalorder %s29, 1
    %p73 = por %p71, %p72
    %p75 = scmp.ne.s32.totalorder %s60, %s74
    %p76 = scmp.eq.s32.totalorder %s29, 0
    %p77 = por %p75, %p76
    %s79 = sadd.s32 %s78, 1
    %p82 = scmp.eq.s32.totalorder %s23, 1
    %p83 = scmp.ne.s32.totalorder %s78, %s80
    %p84 = scmp.eq.s32.totalorder %s23, 0
    %p85 = por %p83, %p84
    %p86 = scmp.ne.s32.totalorder %s78, %s80
    %p87 = scmp.eq.s32.totalorder %s28, 1
    %p88 = por %p86, %p87
    %p89 = scmp.ne.s32.totalorder %s80, %s81
    %p90 = scmp.eq.s32.totalorder %s28, 0
    %p91 = por %p89, %p90
    %p92 = scmp.ne.s32.totalorder %s80, %s81
    %p93 = scmp.eq.s32.totalorder %s29, 1
    %p94 = por %p92, %p93
    %p96 = scmp.ne.s32.totalorder %s81, %s95
    %p97 = scmp.eq.s32.totalorder %s29, 0
    %p98 = por %p96, %p97
    %s100 = sadd.s32 %s99, 1
    %p103 = scmp.eq.s32.totalorder %s23, 1
    %p104 = scmp.ne.s32.totalorder %s99, %s101
    %p105 = scmp.eq.s32.totalorder %s23, 0
    %p106 = por %p104, %p105
    %p107 = scmp.ne.s32.totalorder %s99, %s101
    %p108 = scmp.eq.s32.totalorder %s28, 1
    %p109 = por %p107, %p108
    %p110 = scmp.ne.s32.totalorder %s101, %s102
    %p111 = scmp.eq.s32.totalorder %s28, 0
    %p112 = por %p110, %p111
    %p113 = scmp.ne.s32.totalorder %s101, %s102
    %p114 = scmp.eq.s32.totalorder %s29, 1
    %p115 = por %p113, %p114
    %p117 = scmp.ne.s32.totalorder %s102, %s116
    %p118 = scmp.eq.s32.totalorder %s29, 0
    %p119 = por %p117, %p118
    %s121 = sadd.s32 %s120, 1
    %p124 = scmp.eq.s32.totalorder %s23, 1
    %p125 = scmp.ne.s32.totalorder %s120, %s122
    %p126 = scmp.eq.s32.totalorder %s23, 0
    %p127 = por %p125, %p126
    %p128 = scmp.ne.s32.totalorder %s120, %s122
    %p129 = scmp.eq.s32.totalorder %s28, 1
    %p130 = por %p128, %p129
    %p131 = scmp.ne.s32.totalorder %s122, %s123
    %p132 = scmp.eq.s32.totalorder %s28, 0
    %p133 = por %p131, %p132
    %p134 = scmp.ne.s32.totalorder %s122, %s123
    %p135 = scmp.eq.s32.totalorder %s29, 1
    %p136 = por %p134, %p135
    %p138 = scmp.ne.s32.totalorder %s123, %s137
    %p139 = scmp.eq.s32.totalorder %s29, 0
    %p140 = por %p138, %p139
    %s142 = sadd.s32 %s141, 1
    %p145 = scmp.eq.s32.totalorder %s23, 1
    %p146 = scmp.ne.s32.totalorder %s141, %s143
    %p147 = scmp.eq.s32.totalorder %s23, 0
    %p148 = por %p146, %p147
    %p149 = scmp.ne.s32.totalorder %s141, %s143
    %p150 = scmp.eq.s32.totalorder %s28, 1
    %p151 = por %p149, %p150
    %p152 = scmp.ne.s32.totalorder %s143, %s144
    %p153 = scmp.eq.s32.totalorder %s28, 0
    %p154 = por %p152, %p153
    %p155 = scmp.ne.s32.totalorder %s143, %s144
    %p156 = scmp.eq.s32.totalorder %s29, 1
    %p157 = por %p155, %p156
    %p159 = scmp.ne.s32.totalorder %s144, %s158
    %p160 = scmp.eq.s32.totalorder %s29, 0
    %p161 = por %p159, %p160
    %s163 = sadd.s32 %s162, 1
    %p166 = scmp.eq.s32.totalorder %s23, 1
    %p167 = scmp.ne.s32.totalorder %s162, %s164
    %p168 = scmp.eq.s32.totalorder %s23, 0
    %p169 = por %p167, %p168
    %p170 = scmp.ne.s32.totalorder %s162, %s164
    %p171 = scmp.eq.s32.totalorder %s28, 1
    %p172 = por %p170, %p171
    %p173 = scmp.ne.s32.totalorder %s164, %s165
    %p174 = scmp.eq.s32.totalorder %s28, 0
    %p175 = por %p173, %p174
    %p176 = scmp.ne.s32.totalorder %s164, %s165
    %p177 = scmp.eq.s32.totalorder %s29, 1
    %p178 = por %p176, %p177
    %p180 = scmp.ne.s32.totalorder %s165, %s179
    %p181 = scmp.eq.s32.totalorder %s29, 0
    %p182 = por %p180, %p181
    %s184 = sadd.s32 %s183, 1
    %p187 = scmp.eq.s32.totalorder %s23, 1
    %p188 = scmp.ne.s32.totalorder %s183, %s185
    %p189 = scmp.eq.s32.totalorder %s23, 0
    %p190 = por %p188, %p189
    %p191 = scmp.ne.s32.totalorder %s183, %s185
    %p192 = scmp.eq.s32.totalorder %s28, 1
    %p193 = por %p191, %p192
    %p194 = scmp.ne.s32.totalorder %s185, %s186
    %p195 = scmp.eq.s32.totalorder %s28, 0
    %p196 = por %p194, %p195
    %p197 = scmp.ne.s32.totalorder %s185, %s186
    %p198 = scmp.eq.s32.totalorder %s29, 1
    %p199 = por %p197, %p198
    %p201 = scmp.ne.s32.totalorder %s186, %s200
    %p202 = scmp.eq.s32.totalorder %s29, 0
    %p203 = por %p201, %p202
    %s205 = sadd.s32 %s204, 1
    %p208 = scmp.eq.s32.totalorder %s23, 1
    %p209 = scmp.ne.s32.totalorder %s204, %s206
    %p210 = scmp.eq.s32.totalorder %s23, 0
    %p211 = por %p209, %p210
    %p212 = scmp.ne.s32.totalorder %s204, %s206
    %p213 = scmp.eq.s32.totalorder %s28, 1
    %p214 = por %p212, %p213
    %p215 = scmp.ne.s32.totalorder %s206, %s207
    %p216 = scmp.eq.s32.totalorder %s28, 0
    %p217 = por %p215, %p216
    %p218 = scmp.ne.s32.totalorder %s206, %s207
    %p219 = scmp.eq.s32.totalorder %s29, 1
    %p220 = por %p218, %p219
    %p222 = scmp.ne.s32.totalorder %s207, %s221
    %p223 = scmp.eq.s32.totalorder %s29, 0
    %p224 = por %p222, %p223
    %s226 = sadd.s32 %s225, 1
    %p229 = scmp.eq.s32.totalorder %s23, 1
    %p230 = scmp.ne.s32.totalorder %s225, %s227
    %p231 = scmp.eq.s32.totalorder %s23, 0
    %p232 = por %p230, %p231
    %p233 = scmp.ne.s32.totalorder %s225, %s227
    %p234 = scmp.eq.s32.totalorder %s28, 1
    %p235 = por %p233, %p234
    %p236 = scmp.ne.s32.totalorder %s227, %s228
    %p237 = scmp.eq.s32.totalorder %s28, 0
    %p238 = por %p236, %p237
    %p239 = scmp.ne.s32.totalorder %s227, %s228
    %p240 = scmp.eq.s32.totalorder %s29, 1
    %p241 = por %p239, %p240
    %p243 = scmp.ne.s32.totalorder %s228, %s242
    %p244 = scmp.eq.s32.totalorder %s29, 0
    %p245 = por %p243, %p244
    %s247 = sadd.s32 %s246, 1
    %p250 = scmp.eq.s32.totalorder %s23, 1
    %p251 = scmp.ne.s32.totalorder %s246, %s248
    %p252 = scmp.eq.s32.totalorder %s23, 0
    %p253 = por %p251, %p252
    %p254 = scmp.ne.s32.totalorder %s246, %s248
    %p255 = scmp.eq.s32.totalorder %s28, 1
    %p256 = por %p254, %p255
    %p257 = scmp.ne.s32.totalorder %s248, %s249
    %p258 = scmp.eq.s32.totalorder %s28, 0
    %p259 = por %p257, %p258
    %p260 = scmp.ne.s32.totalorder %s248, %s249
    %p261 = scmp.eq.s32.totalorder %s29, 1
    %p262 = por %p260, %p261
    %p264 = scmp.ne.s32.totalorder %s249, %s263
    %p265 = scmp.eq.s32.totalorder %s29, 0
    %p266 = por %p264, %p265
    %s268 = sadd.s32 %s267, 1
    %p271 = scmp.eq.s32.totalorder %s23, 1
    %p272 = scmp.ne.s32.totalorder %s267, %s269
    %p273 = scmp.eq.s32.totalorder %s23, 0
    %p274 = por %p272, %p273
    %p275 = scmp.ne.s32.totalorder %s267, %s269
    %p276 = scmp.eq.s32.totalorder %s28, 1
    %p277 = por %p275, %p276
    %p278 = scmp.ne.s32.totalorder %s269, %s270
    %p279 = scmp.eq.s32.totalorder %s28, 0
    %p280 = por %p278, %p279
    %p281 = scmp.ne.s32.totalorder %s269, %s270
    %p282 = scmp.eq.s32.totalorder %s29, 1
    %p283 = por %p281, %p282
    %p285 = scmp.ne.s32.totalorder %s270, %s284
    %p286 = scmp.eq.s32.totalorder %s29, 0
    %p287 = por %p285, %p286
    %s289 = sadd.s32 %s288, 1
    %p292 = scmp.eq.s32.totalorder %s23, 1
    %p293 = scmp.ne.s32.totalorder %s288, %s290
    %p294 = scmp.eq.s32.totalorder %s23, 0
    %p295 = por %p293, %p294
    %p296 = scmp.ne.s32.totalorder %s288, %s290
    %p297 = scmp.eq.s32.totalorder %s28, 1
    %p298 = por %p296, %p297
    %p299 = scmp.ne.s32.totalorder %s290, %s291
    %p300 = scmp.eq.s32.totalorder %s28, 0
    %p301 = por %p299, %p300
    %p302 = scmp.ne.s32.totalorder %s290, %s291
    %p303 = scmp.eq.s32.totalorder %s29, 1
    %p304 = por %p302, %p303
    %p306 = scmp.ne.s32.totalorder %s291, %s305
    %p307 = scmp.eq.s32.totalorder %s29, 0
    %p308 = por %p306, %p307
    %s310 = sadd.s32 %s309, 1
    %p313 = scmp.eq.s32.totalorder %s23, 1
    %p314 = scmp.ne.s32.totalorder %s309, %s311
    %p315 = scmp.eq.s32.totalorder %s23, 0
    %p316 = por %p314, %p315
    %p317 = scmp.ne.s32.totalorder %s309, %s311
    %p318 = scmp.eq.s32.totalorder %s28, 1
    %p319 = por %p317, %p318
    %p320 = scmp.ne.s32.totalorder %s311, %s312
    %p321 = scmp.eq.s32.totalorder %s28, 0
    %p322 = por %p320, %p321
    %p323 = scmp.ne.s32.totalorder %s311, %s312
    %p324 = scmp.eq.s32.totalorder %s29, 1
    %p325 = por %p323, %p324
    %p327 = scmp.ne.s32.totalorder %s312, %s326
    %p328 = scmp.eq.s32.totalorder %s29, 0
    %p329 = por %p327, %p328
    %s331 = sadd.s32 %s330, 1
    %p334 = scmp.eq.s32.totalorder %s23, 1
    %p335 = scmp.ne.s32.totalorder %s330, %s332
    %p336 = scmp.eq.s32.totalorder %s23, 0
    %p337 = por %p335, %p336
    %p338 = scmp.ne.s32.totalorder %s330, %s332
    %p339 = scmp.eq.s32.totalorder %s28, 1
    %p340 = por %p338, %p339
    %p341 = scmp.ne.s32.totalorder %s332, %s333
    %p342 = scmp.eq.s32.totalorder %s28, 0
    %p343 = por %p341, %p342
    %p344 = scmp.ne.s32.totalorder %s332, %s333
    %p345 = scmp.eq.s32.totalorder %s29, 1
    %p346 = por %p344, %p345
    %p348 = scmp.ne.s32.totalorder %s333, %s347
    %p349 = scmp.eq.s32.totalorder %s29, 0
    %p350 = por %p348, %p349
    %s351 = ssub.s32 %s23, %s30
    %p352 = scmp.eq.s32.totalorder %s351, 0
    %s354 = sadd.s32 %s353, 1
    %s355 = scalar_select %p352, %s353, %s354
    %p358 = pneg %p352
    %p359 = scmp.eq.s32.totalorder %s23, 1
    %p360 = por %p358, %p359
    %p361 = scmp.ne.s32.totalorder %s353, %s356
    %p362 = scmp.eq.s32.totalorder %s23, 0
    %p363 = por %p361, %p362
    %p364 = scmp.ne.s32.totalorder %s353, %s356
    %p365 = scmp.eq.s32.totalorder %s28, 1
    %p366 = por %p364, %p365
    %p367 = scmp.ne.s32.totalorder %s356, %s357
    %p368 = scmp.eq.s32.totalorder %s28, 0
    %p369 = por %p367, %p368
    %p370 = scmp.ne.s32.totalorder %s356, %s357
    %p371 = scmp.eq.s32.totalorder %s29, 1
    %p372 = por %p370, %p371
    %p374 = scmp.ne.s32.totalorder %s357, %s373
    %p375 = scmp.eq.s32.totalorder %s29, 0
    %p376 = por %p374, %p375
    %p377 = scmp.le.s32.totalorder 1, %s23
    %p378 = scmp.lt.s32.totalorder %s23, 3
    %p379 = pnand %p377, %p378
    %p380 = pneg %p379
    // Predicated region
    $region9: #{postprocess_forward.1} parent=5 // pred_check
      _
    $region10: #{postprocess_forward.1} parent=5 // pred_check_branch
      %382 = sbr.rel (%p379) target = $region12
    $region11: #{postprocess_forward.1} parent=5 // pred_region
      %s383 = ssub.s32 %s23, 1
      // Predicated region
      $region13: #{postprocess_forward.1} parent=11 // pred_check
        %p384 = pneg %p70
      $region14: #{postprocess_forward.1} parent=11 // pred_check_branch
        %386 = sbr.rel (%p384) target = $region16
      $region15: #{postprocess_forward.1} parent=11 // pred_region
        _
      $region16: #{postprocess_forward.1} parent=11 // pred_fallthru
        _
      // Predicated region
      $region17: #{postprocess_forward.1} parent=11 // pred_check
        %p387 = pneg %p91
      $region18: #{postprocess_forward.1} parent=11 // pred_check_branch
        %389 = sbr.rel (%p387) target = $region20
      $region19: #{postprocess_forward.1} parent=11 // pred_region
        _
      $region20: #{postprocess_forward.1} parent=11 // pred_fallthru
        _
      // Predicated region
      $region21: #{postprocess_forward.1} parent=11 // pred_check
        %p390 = pneg %p112
      $region22: #{postprocess_forward.1} parent=11 // pred_check_branch
        %392 = sbr.rel (%p390) target = $region24
      $region23: #{postprocess_forward.1} parent=11 // pred_region
        _
      $region24: #{postprocess_forward.1} parent=11 // pred_fallthru
        _
      // Predicated region
      $region25: #{postprocess_forward.1} parent=11 // pred_check
        %p393 = pneg %p133
      $region26: #{postprocess_forward.1} parent=11 // pred_check_branch
        %395 = sbr.rel (%p393) target = $region28
      $region27: #{postprocess_forward.1} parent=11 // pred_region
        _
      $region28: #{postprocess_forward.1} parent=11 // pred_fallthru
        _
      // Predicated region
      $region29: #{postprocess_forward.1} parent=11 // pred_check
        %p396 = pneg %p154
      $region30: #{postprocess_forward.1} parent=11 // pred_check_branch
        %398 = sbr.rel (%p396) target = $region32
      $region31: #{postprocess_forward.1} parent=11 // pred_region
        _
      $region32: #{postprocess_forward.1} parent=11 // pred_fallthru
        _
      // Predicated region
      $region33: #{postprocess_forward.1} parent=11 // pred_check
        %p399 = pneg %p175
      $region34: #{postprocess_forward.1} parent=11 // pred_check_branch
        %401 = sbr.rel (%p399) target = $region36
      $region35: #{postprocess_forward.1} parent=11 // pred_region
        _
      $region36: #{postprocess_forward.1} parent=11 // pred_fallthru
        _
      // Predicated region
      $region37: #{postprocess_forward.1} parent=11 // pred_check
        %p402 = pneg %p196
      $region38: #{postprocess_forward.1} parent=11 // pred_check_branch
        %404 = sbr.rel (%p402) target = $region40
      $region39: #{postprocess_forward.1} parent=11 // pred_region
        _
      $region40: #{postprocess_forward.1} parent=11 // pred_fallthru
        _
      // Predicated region
      $region41: #{postprocess_forward.1} parent=11 // pred_check
        %p405 = pneg %p217
      $region42: #{postprocess_forward.1} parent=11 // pred_check_branch
        %407 = sbr.rel (%p405) target = $region44
      $region43: #{postprocess_forward.1} parent=11 // pred_region
        _
      $region44: #{postprocess_forward.1} parent=11 // pred_fallthru
        _
      // Predicated region
      $region45: #{postprocess_forward.1} parent=11 // pred_check
        %p408 = pneg %p238
      $region46: #{postprocess_forward.1} parent=11 // pred_check_branch
        %410 = sbr.rel (%p408) target = $region48
      $region47: #{postprocess_forward.1} parent=11 // pred_region
        _
      $region48: #{postprocess_forward.1} parent=11 // pred_fallthru
        _
      // Predicated region
      $region49: #{postprocess_forward.1} parent=11 // pred_check
        %p411 = pneg %p259
      $region50: #{postprocess_forward.1} parent=11 // pred_check_branch
        %413 = sbr.rel (%p411) target = $region52
      $region51: #{postprocess_forward.1} parent=11 // pred_region
        _
      $region52: #{postprocess_forward.1} parent=11 // pred_fallthru
        _
      // Predicated region
      $region53: #{postprocess_forward.1} parent=11 // pred_check
        %p414 = pneg %p280
      $region54: #{postprocess_forward.1} parent=11 // pred_check_branch
        %416 = sbr.rel (%p414) target = $region56
      $region55: #{postprocess_forward.1} parent=11 // pred_region
        _
      $region56: #{postprocess_forward.1} parent=11 // pred_fallthru
        _
      // Predicated region
      $region57: #{postprocess_forward.1} parent=11 // pred_check
        %p417 = pneg %p301
      $region58: #{postprocess_forward.1} parent=11 // pred_check_branch
        %419 = sbr.rel (%p417) target = $region60
      $region59: #{postprocess_forward.1} parent=11 // pred_region
        _
      $region60: #{postprocess_forward.1} parent=11 // pred_fallthru
        _
      // Predicated region
      $region61: #{postprocess_forward.1} parent=11 // pred_check
        %p420 = pneg %p322
      $region62: #{postprocess_forward.1} parent=11 // pred_check_branch
        %422 = sbr.rel (%p420) target = $region64
      $region63: #{postprocess_forward.1} parent=11 // pred_region
        _
      $region64: #{postprocess_forward.1} parent=11 // pred_fallthru
        _
      // Predicated region
      $region65: #{postprocess_forward.1} parent=11 // pred_check
        %p423 = pneg %p343
      $region66: #{postprocess_forward.1} parent=11 // pred_check_branch
        %425 = sbr.rel (%p423) target = $region68
      $region67: #{postprocess_forward.1} parent=11 // pred_region
        _
      $region68: #{postprocess_forward.1} parent=11 // pred_fallthru
        _
    $region12: #{postprocess_forward.1} parent=5 // pred_fallthru
      _
    %p426 = scmp.lt.s32.totalorder %s23, 2
    // Predicated region
    $region69: #{postprocess_forward.1} parent=5 // pred_check
      %p427 = pneg %p426
    $region70: #{postprocess_forward.1} parent=5 // pred_check_branch
      %429 = sbr.rel (%p427) target = $region72
    $region71: #{postprocess_forward.1} parent=5 // pred_region
      // Predicated region
      $region73: #{postprocess_forward.1} parent=71 // pred_check
        %p430 = pneg %p43
      $region74: #{postprocess_forward.1} parent=71 // pred_check_branch
        %432 = sbr.rel (%p430) target = $region76
      $region75: #{postprocess_forward.1} parent=71 // pred_region
        %p433 = scmp.lt.s32.totalorder %s23, 1
        %s434 = scalar_select %p433, %s23, 1
        %s435 = smul.addr %s434, 8
        %s436 = smul.addr %s435, 8
        %s437 = scalar_lea.vmem %s0, %s436
      $region76: #{postprocess_forward.1} parent=71 // pred_fallthru
        _
    $region72: #{postprocess_forward.1} parent=5 // pred_fallthru
      _
    %p438 = scmp.le.s32.totalorder 1, %s23
    %p439 = scmp.lt.s32.totalorder %s23, 3
    %p440 = pnand %p438, %p439
    %p441 = pneg %p440
    // Predicated region
    $region77: #{postprocess_forward.1} parent=5 // pred_check
      _
    $region78: #{postprocess_forward.1} parent=5 // pred_check_branch
      %443 = sbr.rel (%p440) target = $region80
    $region79: #{postprocess_forward.1} parent=5 // pred_region
      %s444 = ssub.s32 %s23, 1
      %p445 = scmp.lt.s32.totalorder %s28, 1
      %s446 = scalar_select %p445, %s28, 1
      %s447 = smul.addr %s446, 8
      %s448 = smul.addr %s447, 8
      %s449 = scalar_lea.vmem %s0, %s448
      %p450 = pneg %p49
      %p451 = pneg %p46
      %p452 = pneg %p70
      %p453 = pneg %p67
      %p454 = pneg %p91
      %p455 = pneg %p88
      %p456 = pneg %p112
      %p457 = pneg %p109
      %p458 = pneg %p133
      %p459 = pneg %p130
      %p460 = pneg %p154
      %p461 = pneg %p151
      %p462 = pneg %p175
      %p463 = pneg %p172
      %p464 = pneg %p196
      %p465 = pneg %p193
      %p466 = pneg %p217
      %p467 = pneg %p214
      %p468 = pneg %p238
      %p469 = pneg %p235
      %p470 = pneg %p259
      %p471 = pneg %p256
      %p472 = pneg %p280
      %p473 = pneg %p277
      %p474 = pneg %p301
      %p475 = pneg %p298
      %p476 = pneg %p322
      %p477 = pneg %p319
      %p478 = pneg %p343
      %p479 = pneg %p340
      %p480 = pneg %p369
      %p481 = pneg %p366
      %p482 = scmp.lt.s32.totalorder %s28, 1
      %s483 = scalar_select %p482, %s28, 1
      %s484 = smul.addr %s483, 2
      %s485 = scalar_lea.vmem %s15, %s484
      %p486 = scmp.lt.s32.totalorder %s28, 1
      %s487 = scalar_select %p486, %s28, 1
      %s488 = smul.addr %s487, 8
      %s489 = smul.addr %s488, 8
      %s490 = scalar_lea.vmem %s0, %s489
      %p491 = scmp.lt.s32.totalorder %s28, 1
      %s492 = scalar_select %p491, %s28, 1
      %s493 = smul.addr %s492, 2
      %s494 = scalar_lea.vmem %s15, %s493
      %vm496 = vcmask 518144
      %vm497 = vsmask.f32 2304
      %vm498 = vmand %vm496, %vm497
      %v499 = vld [vmem:[#allocation2] sm:$0x7]
      %v500 = vsel %vm498, 0, %v499
      %501 = vst [vmem:[#allocation2] sm:$0x7] %v500
      %v502 = vld [vmem:[#allocation2 + $0x14] sm:$0x7]
      %v503 = vsel %vm498, 0, %v502
      %504 = vst [vmem:[#allocation2 + $0x14] sm:$0x7] %v503
      %v505 = vld [vmem:[#allocation2 + $0x28] sm:$0x7]
      %v506 = vsel %vm498, 0, %v505
      %507 = vst [vmem:[#allocation2 + $0x28] sm:$0x7] %v506
      %v508 = vld [vmem:[#allocation2 + $0x3c] sm:$0x7]
      %v509 = vsel %vm498, 0, %v508
      %510 = vst [vmem:[#allocation2 + $0x3c] sm:$0x7] %v509
      %vm511 = vcmask 516096
      %vm512 = vsmask.f32 256
      %vm513 = vmand %vm511, %vm512
      %v514 = vld [vmem:[#allocation2] sm:$0x1]
      %v515 = vsel %vm513, 0, %v514
      %516 = vst [vmem:[#allocation2] sm:$0x1] %v515
      %v517 = vld [vmem:[#allocation2 + $0x4] sm:$0x1]
      %v518 = vsel %vm513, 0, %v517
      %519 = vst [vmem:[#allocation2 + $0x4] sm:$0x1] %v518
      %v520 = vld [vmem:[#allocation2 + $0x8] sm:$0x1]
      %v521 = vsel %vm513, 0, %v520
      %522 = vst [vmem:[#allocation2 + $0x8] sm:$0x1] %v521
      %v523 = vld [vmem:[#allocation2 + $0xc] sm:$0x1]
      %v524 = vsel %vm513, 0, %v523
      %525 = vst [vmem:[#allocation2 + $0xc] sm:$0x1] %v524
      %v526 = vld [vmem:[#allocation2 + $0x10] sm:$0x1]
      %v527 = vsel %vm513, 0, %v526
      %528 = vst [vmem:[#allocation2 + $0x10] sm:$0x1] %v527
      %v529 = vld [vmem:[#allocation2 + $0x14] sm:$0x1]
      %v530 = vsel %vm513, 0, %v529
      %531 = vst [vmem:[#allocation2 + $0x14] sm:$0x1] %v530
      %v532 = vld [vmem:[#allocation2 + $0x18] sm:$0x1]
      %v533 = vsel %vm513, 0, %v532
      %534 = vst [vmem:[#allocation2 + $0x18] sm:$0x1] %v533
      %v535 = vld [vmem:[#allocation2 + $0x1c] sm:$0x1]
      %v536 = vsel %vm513, 0, %v535
      %537 = vst [vmem:[#allocation2 + $0x1c] sm:$0x1] %v536
      %v538 = vld [vmem:[#allocation2 + $0x20] sm:$0x1]
      %v539 = vsel %vm513, 0, %v538
      %540 = vst [vmem:[#allocation2 + $0x20] sm:$0x1] %v539
      %v541 = vld [vmem:[#allocation2 + $0x24] sm:$0x1]
      %v542 = vsel %vm513, 0, %v541
      %543 = vst [vmem:[#allocation2 + $0x24] sm:$0x1] %v542
      %v544 = vld [vmem:[#allocation2 + $0x28] sm:$0x1]
      %v545 = vsel %vm513, 0, %v544
      %546 = vst [vmem:[#allocation2 + $0x28] sm:$0x1] %v545
      %v547 = vld [vmem:[#allocation2 + $0x2c] sm:$0x1]
      %v548 = vsel %vm513, 0, %v547
      %549 = vst [vmem:[#allocation2 + $0x2c] sm:$0x1] %v548
      %v550 = vld [vmem:[#allocation2 + $0x30] sm:$0x1]
      %v551 = vsel %vm513, 0, %v550
      %552 = vst [vmem:[#allocation2 + $0x30] sm:$0x1] %v551
      %v553 = vld [vmem:[#allocation2 + $0x34] sm:$0x1]
      %v554 = vsel %vm513, 0, %v553
      %555 = vst [vmem:[#allocation2 + $0x34] sm:$0x1] %v554
      %v556 = vld [vmem:[#allocation2 + $0x38] sm:$0x1]
      %v557 = vsel %vm513, 0, %v556
      %558 = vst [vmem:[#allocation2 + $0x38] sm:$0x1] %v557
      %v559 = vld [vmem:[#allocation2 + $0x3c] sm:$0x1]
      %v560 = vsel %vm513, 0, %v559
      %561 = vst [vmem:[#allocation2 + $0x3c] sm:$0x1] %v560
      %v562 = vld [vmem:[#allocation2 + $0x40] sm:$0x1]
      %v563 = vsel %vm513, 0, %v562
      %564 = vst [vmem:[#allocation2 + $0x40] sm:$0x1] %v563
      %v565 = vld [vmem:[#allocation2 + $0x44] sm:$0x1]
      %v566 = vsel %vm513, 0, %v565
      %567 = vst [vmem:[#allocation2 + $0x44] sm:$0x1] %v566
      %v568 = vld [vmem:[#allocation2 + $0x48] sm:$0x1]
      %v569 = vsel %vm513, 0, %v568
      %570 = vst [vmem:[#allocation2 + $0x48] sm:$0x1] %v569
      %v571 = vld [vmem:[#allocation2 + $0x4c] sm:$0x1]
      %v572 = vsel %vm513, 0, %v571
      %573 = vst [vmem:[#allocation2 + $0x4c] sm:$0x1] %v572
      %vm574 = vcmask 1041408
      %vm575 = vsmask.f32 1280
      %vm576 = vmand %vm574, %vm575
      %v577 = vld [vmem:[#allocation3] sm:$0x3]
      %v578 = vsel %vm576, 0, %v577
      %579 = vst [vmem:[#allocation3] sm:$0x3] %v578
      %v580 = vld [vmem:[#allocation3 + $0x6] sm:$0x3]
      %v581 = vsel %vm576, 0, %v580
      %582 = vst [vmem:[#allocation3 + $0x6] sm:$0x3] %v581
      %v583 = vld [vmem:[#allocation3 + $0xc] sm:$0x3]
      %v584 = vsel %vm576, 0, %v583
      %585 = vst [vmem:[#allocation3 + $0xc] sm:$0x3] %v584
      %v586 = vld [vmem:[#allocation3 + $0x12] sm:$0x3]
      %v587 = vsel %vm576, 0, %v586
      %588 = vst [vmem:[#allocation3 + $0x12] sm:$0x3] %v587
      %vm589 = vcmask 1040384
      %vm590 = vmand %vm589, %vm512
      %v591 = vld [vmem:[#allocation3] sm:$0x1]
      %v592 = vsel %vm590, 0, %v591
      %593 = vst [vmem:[#allocation3] sm:$0x1] %v592
      %v594 = vld [vmem:[#allocation3 + $0x2] sm:$0x1]
      %v595 = vsel %vm590, 0, %v594
      %596 = vst [vmem:[#allocation3 + $0x2] sm:$0x1] %v595
      %v597 = vld [vmem:[#allocation3 + $0x4] sm:$0x1]
      %v598 = vsel %vm590, 0, %v597
      %599 = vst [vmem:[#allocation3 + $0x4] sm:$0x1] %v598
      %v600 = vld [vmem:[#allocation3 + $0x6] sm:$0x1]
      %v601 = vsel %vm590, 0, %v600
      %602 = vst [vmem:[#allocation3 + $0x6] sm:$0x1] %v601
      %v603 = vld [vmem:[#allocation3 + $0x8] sm:$0x1]
      %v604 = vsel %vm590, 0, %v603
      %605 = vst [vmem:[#allocation3 + $0x8] sm:$0x1] %v604
      %v606 = vld [vmem:[#allocation3 + $0xa] sm:$0x1]
      %v607 = vsel %vm590, 0, %v606
      %608 = vst [vmem:[#allocation3 + $0xa] sm:$0x1] %v607
      %v609 = vld [vmem:[#allocation3 + $0xc] sm:$0x1]
      %v610 = vsel %vm590, 0, %v609
      %611 = vst [vmem:[#allocation3 + $0xc] sm:$0x1] %v610
      %v612 = vld [vmem:[#allocation3 + $0xe] sm:$0x1]
      %v613 = vsel %vm590, 0, %v612
      %614 = vst [vmem:[#allocation3 + $0xe] sm:$0x1] %v613
      %v615 = vld [vmem:[#allocation3 + $0x10] sm:$0x1]
      %v616 = vsel %vm590, 0, %v615
      %617 = vst [vmem:[#allocation3 + $0x10] sm:$0x1] %v616
      %v618 = vld [vmem:[#allocation3 + $0x12] sm:$0x1]
      %v619 = vsel %vm590, 0, %v618
      %620 = vst [vmem:[#allocation3 + $0x12] sm:$0x1] %v619
      %v621 = vld [vmem:[#allocation3 + $0x14] sm:$0x1]
      %v622 = vsel %vm590, 0, %v621
      %623 = vst [vmem:[#allocation3 + $0x14] sm:$0x1] %v622
      %v624 = vld [vmem:[#allocation3 + $0x16] sm:$0x1]
      %v625 = vsel %vm590, 0, %v624
      %626 = vst [vmem:[#allocation3 + $0x16] sm:$0x1] %v625
      %v627 = vld [vmem:[%s1] sm:$0xff]
      %v628 = vld [vmem:[%s1 + $0x8] sm:$0xff]
      %v629 = vld [vmem:[%s2] sm:$0x1]
      %v630 = vld [vmem:[%s490] sm:$0xff]
      %v631 = vld [vmem:[%s490 + $0x8] sm:$0xff]
      %v633 = vperm.slane %v629, 0
      %vm635 = vcmask 130048
      %v637 = vsel %vm635, %v630, 0
      %v640 = vsel %vm635, %v631, 0
      %642 = vmatpush.msra.mxu0 0.0
      %643 = vmatpush.msra.mxu0 0.0
      %644 = vmatpush.msra.mxu0 0.0
      %645 = vmatpush.msra.mxu0 0.0
      %646 = vmatpush.msra.mxu0 0.0
      %647 = vmatpush.msra.mxu0 0.0
      %648 = vmatpush.msra.mxu0 0.0
      %649 = vmatpush.msra.mxu0 0.0
      %650 = vmatpush.msra.mxu0 0.0
      %651 = vmatpush.msra.mxu0 0.0
      %652 = vmatpush.msra.mxu0 0.0
      %653 = vmatpush.msra.mxu0 0.0
      %654 = vmatpush.msra.mxu0 0.0
      %655 = vmatpush.msra.mxu0 0.0
      %656 = vmatpush.msra.mxu0 %v628
      %657 = vmatpush.msra.mxu0 %v627
      %658 = vmatmul.f32.gmra.mxu0 %v637
      %v659 = vpop.f32.mrf.mxu0
      %v660 = vadd.f32 %v633, %v659
      %661 = vmatmul.f32.gmra.mxu0 %v640
      %v662 = vpop.f32.mrf.mxu0
      %v663 = vadd.f32 %v633, %v662
      %664 = vdwg.mxu0
      %v665 = vmul.f32 %v660, 0.5
      %v666 = vmul.f32 %v663, 0.5
      %v667 = vmul.f32 %v660, %v660
      %v668 = vmul.f32 %v663, %v663
      %v669 = vmul.f32 %v667, %v660
      %v670 = vmul.f32 %v668, %v663
      %v671 = vmul.f32 %v669, 0.044715
      %v672 = vmul.f32 %v670, 0.044715
      %v673 = vadd.f32 %v660, %v671
      %v674 = vadd.f32 %v663, %v672
      %v675 = vmul.f32 %v673, 0.7978846
      %v676 = vmul.f32 %v674, 0.7978846
      %v677 = vtanh.pop %v675
      %v678 = vtanh.pop %v676
      %v679 = vadd.f32 %v677, 1.0
      %v680 = vadd.f32 %v678, 1.0
      %v681 = vmul.f32 %v665, %v679
      %v682 = vmul.f32 %v666, %v680
      %v683 = vpack.c.bf16 %v681, %v681
      %v684 = vpack.c.bf16 %v682, %v682
      %v687 = vrot.slane %v683, 2
      %v688 = vrot.slane %v684, 2
      %vm689 = vcmask 1041408
      %v692 = vsel %vm689, %v683, %v687
      %vm693 = vcmask 1043458
      %v694 = vsel %vm693, %v683, %v687
      %v696 = vrot.slane %v694, 2
      %v699 = vsel %vm689, %v684, %v688
      %v700 = vsel %vm693, %v684, %v688
      %v702 = vrot.slane %v700, 2
      %703 = vst [vmem:[#allocation1] ss:$2 sm:$0xff] %v692
      %v704 = vld.sshfl [vmem:[#allocation1] sm:$0xff pattern:$0x75643120]
      %s706 = scalar_lea.vmem [#allocation1], 16
      %707 = vst [vmem:[%s706] ss:$2 sm:$0xff] %v696
      %v708 = vld.sshfl [vmem:[#allocation1 + $0x10] sm:$0xff pattern:$0x75643120]
      %s709 = scalar_lea.vmem [#allocation1], 32
      %710 = vst [vmem:[%s709] ss:$2 sm:$0xff] %v699
      %v711 = vld.sshfl [vmem:[#allocation1 + $0x20] sm:$0xff pattern:$0x75643120]
      %s713 = scalar_lea.vmem [#allocation1], 48
      %714 = vst [vmem:[%s713] ss:$2 sm:$0xff] %v702
      %v715 = vld.sshfl [vmem:[#allocation1 + $0x30] sm:$0xff pattern:$0x75643120]
      %v716 = vshrl.u32 %v704, 16
      %v718 = vrot.slane %v716, 7
      %v719 = vshll.u32 %v704, 16
      %v721 = vor.u32 %v718, %v719
      %v722 = vshrl.u32 %v708, 16
      %v724 = vrot.slane %v722, 7
      %v725 = vshll.u32 %v708, 16
      %v727 = vor.u32 %v724, %v725
      %v728 = vshrl.u32 %v711, 16
      %v730 = vrot.slane %v728, 7
      %v731 = vshll.u32 %v711, 16
      %v733 = vor.u32 %v730, %v731
      %v734 = vshrl.u32 %v715, 16
      %v736 = vrot.slane %v734, 7
      %v737 = vshll.u32 %v715, 16
      %v739 = vor.u32 %v736, %v737
      %s744 = scalar_lea.vmem [#allocation2], 4
      %vm745 = vsmask.f32 2306
      %vm746 = vmand %vm496, %vm745
      %v747 = vld [vmem:[%s744] sm:$0x7]
      %v748 = vsel %vm746, %v721, %v747
      %749 = vst [vmem:[%s744] sm:$0x7] %v748
      %v750 = vld [vmem:[%s744 + $0x4] sm:$0x7]
      %v751 = vsel %vm746, %v727, %v750
      %752 = vst [vmem:[%s744 + $0x4] sm:$0x7] %v751
      %v753 = vld [vmem:[%s744 + $0x8] sm:$0x7]
      %v754 = vsel %vm746, %v733, %v753
      %755 = vst [vmem:[%s744 + $0x8] sm:$0x7] %v754
      %v756 = vld [vmem:[%s744 + $0xc] sm:$0x7]
      %v757 = vsel %vm746, %v739, %v756
      %758 = vst [vmem:[%s744 + $0xc] sm:$0x7] %v757
      %s759 = scalar_lea.vmem %s490, 16
      %v760 = vld [vmem:[%s759] sm:$0xff]
      %v761 = vld [vmem:[%s759 + $0x8] sm:$0xff]
      %v763 = vsel %vm635, %v760, 0
      %v766 = vsel %vm635, %v761, 0
      %768 = vmatpush.msra.mxu0 0.0
      %769 = vmatpush.msra.mxu0 0.0
      %770 = vmatpush.msra.mxu0 0.0
      %771 = vmatpush.msra.mxu0 0.0
      %772 = vmatpush.msra.mxu0 0.0
      %773 = vmatpush.msra.mxu0 0.0
      %774 = vmatpush.msra.mxu0 0.0
      %775 = vmatpush.msra.mxu0 0.0
      %776 = vmatpush.msra.mxu0 0.0
      %777 = vmatpush.msra.mxu0 0.0
      %778 = vmatpush.msra.mxu0 0.0
      %779 = vmatpush.msra.mxu0 0.0
      %780 = vmatpush.msra.mxu0 0.0
      %781 = vmatpush.msra.mxu0 0.0
      %782 = vmatpush.msra.mxu0 %v628
      %783 = vmatpush.msra.mxu0 %v627
      %784 = vmatmul.f32.gmra.mxu0 %v763
      %v785 = vpop.f32.mrf.mxu0
      %v786 = vadd.f32 %v633, %v785
      %787 = vmatmul.f32.gmra.mxu0 %v766
      %v788 = vpop.f32.mrf.mxu0
      %v789 = vadd.f32 %v633, %v788
      %790 = vdwg.mxu0
      %v791 = vmul.f32 %v786, 0.5
      %v792 = vmul.f32 %v789, 0.5
      %v793 = vmul.f32 %v786, %v786
      %v794 = vmul.f32 %v789, %v789
      %v795 = vmul.f32 %v793, %v786
      %v796 = vmul.f32 %v794, %v789
      %v797 = vmul.f32 %v795, 0.044715
      %v798 = vmul.f32 %v796, 0.044715
      %v799 = vadd.f32 %v786, %v797
      %v800 = vadd.f32 %v789, %v798
      %v801 = vmul.f32 %v799, 0.7978846
      %v802 = vmul.f32 %v800, 0.7978846
      %v803 = vtanh.pop %v801
      %v804 = vtanh.pop %v802
      %v805 = vadd.f32 %v803, 1.0
      %v806 = vadd.f32 %v804, 1.0
      %v807 = vmul.f32 %v791, %v805
      %v808 = vmul.f32 %v792, %v806
      %v809 = vpack.c.bf16 %v807, %v807
      %v810 = vpack.c.bf16 %v808, %v808
      %v813 = vrot.slane %v809, 2
      %v814 = vrot.slane %v810, 2
      %v817 = vsel %vm689, %v809, %v813
      %v818 = vsel %vm693, %v809, %v813
      %v820 = vrot.slane %v818, 2
      %v823 = vsel %vm689, %v810, %v814
      %v824 = vsel %vm693, %v810, %v814
      %v826 = vrot.slane %v824, 2
      %827 = vst [vmem:[#allocation1] ss:$2 sm:$0xff] %v817
      %v828 = vld.sshfl [vmem:[#allocation1] sm:$0xff pattern:$0x75643120]
      %s830 = scalar_lea.vmem [#allocation1], 16
      %831 = vst [vmem:[%s830] ss:$2 sm:$0xff] %v820
      %v832 = vld.sshfl [vmem:[#allocation1 + $0x10] sm:$0xff pattern:$0x75643120]
      %s833 = scalar_lea.vmem [#allocation1], 32
      %834 = vst [vmem:[%s833] ss:$2 sm:$0xff] %v823
      %v835 = vld.sshfl [vmem:[#allocation1 + $0x20] sm:$0xff pattern:$0x75643120]
      %s837 = scalar_lea.vmem [#allocation1], 48
      %838 = vst [vmem:[%s837] ss:$2 sm:$0xff] %v826
      %v839 = vld.sshfl [vmem:[#allocation1 + $0x30] sm:$0xff pattern:$0x75643120]
      %v840 = vshrl.u32 %v828, 16
      %v842 = vrot.slane %v840, 7
      %v843 = vshll.u32 %v828, 16
      %v845 = vor.u32 %v842, %v843
      %v846 = vshrl.u32 %v832, 16
      %v848 = vrot.slane %v846, 7
      %v849 = vshll.u32 %v832, 16
      %v851 = vor.u32 %v848, %v849
      %v852 = vshrl.u32 %v835, 16
      %v854 = vrot.slane %v852, 7
      %v855 = vshll.u32 %v835, 16
      %v857 = vor.u32 %v854, %v855
      %v858 = vshrl.u32 %v839, 16
      %v860 = vrot.slane %v858, 7
      %v861 = vshll.u32 %v839, 16
      %v863 = vor.u32 %v860, %v861
      %s868 = scalar_lea.vmem [#allocation2], 24
      %v869 = vld [vmem:[%s868] sm:$0x7]
      %v870 = vsel %vm746, %v845, %v869
      %871 = vst [vmem:[%s868] sm:$0x7] %v870
      %v872 = vld [vmem:[%s868 + $0x4] sm:$0x7]
      %v873 = vsel %vm746, %v851, %v872
      %874 = vst [vmem:[%s868 + $0x4] sm:$0x7] %v873
      %v875 = vld [vmem:[%s868 + $0x8] sm:$0x7]
      %v876 = vsel %vm746, %v857, %v875
      %877 = vst [vmem:[%s868 + $0x8] sm:$0x7] %v876
      %v878 = vld [vmem:[%s868 + $0xc] sm:$0x7]
      %v879 = vsel %vm746, %v863, %v878
      %880 = vst [vmem:[%s868 + $0xc] sm:$0x7] %v879
      %s881 = scalar_lea.vmem %s490, 32
      %v882 = vld [vmem:[%s881] sm:$0xff]
      %v883 = vld [vmem:[%s881 + $0x8] sm:$0xff]
      %v885 = vsel %vm635, %v882, 0
      %v888 = vsel %vm635, %v883, 0
      %890 = vmatpush.msra.mxu0 0.0
      %891 = vmatpush.msra.mxu0 0.0
      %892 = vmatpush.msra.mxu0 0.0
      %893 = vmatpush.msra.mxu0 0.0
      %894 = vmatpush.msra.mxu0 0.0
      %895 = vmatpush.msra.mxu0 0.0
      %896 = vmatpush.msra.mxu0 0.0
      %897 = vmatpush.msra.mxu0 0.0
      %898 = vmatpush.msra.mxu0 0.0
      %899 = vmatpush.msra.mxu0 0.0
      %900 = vmatpush.msra.mxu0 0.0
      %901 = vmatpush.msra.mxu0 0.0
      %902 = vmatpush.msra.mxu0 0.0
      %903 = vmatpush.msra.mxu0 0.0
      %904 = vmatpush.msra.mxu0 %v628
      %905 = vmatpush.msra.mxu0 %v627
      %906 = vmatmul.f32.gmra.mxu0 %v885
      %v907 = vpop.f32.mrf.mxu0
      %v908 = vadd.f32 %v633, %v907
      %909 = vmatmul.f32.gmra.mxu0 %v888
      %v910 = vpop.f32.mrf.mxu0
      %v911 = vadd.f32 %v633, %v910
      %912 = vdwg.mxu0
      %v913 = vmul.f32 %v908, 0.5
      %v914 = vmul.f32 %v911, 0.5
      %v915 = vmul.f32 %v908, %v908
      %v916 = vmul.f32 %v911, %v911
      %v917 = vmul.f32 %v915, %v908
      %v918 = vmul.f32 %v916, %v911
      %v919 = vmul.f32 %v917, 0.044715
      %v920 = vmul.f32 %v918, 0.044715
      %v921 = vadd.f32 %v908, %v919
      %v922 = vadd.f32 %v911, %v920
      %v923 = vmul.f32 %v921, 0.7978846
      %v924 = vmul.f32 %v922, 0.7978846
      %v925 = vtanh.pop %v923
      %v926 = vtanh.pop %v924
      %v927 = vadd.f32 %v925, 1.0
      %v928 = vadd.f32 %v926, 1.0
      %v929 = vmul.f32 %v913, %v927
      %v930 = vmul.f32 %v914, %v928
      %v931 = vpack.c.bf16 %v929, %v929
      %v932 = vpack.c.bf16 %v930, %v930
      %v935 = vrot.slane %v931, 2
      %v936 = vrot.slane %v932, 2
      %v939 = vsel %vm689, %v931, %v935
      %v940 = vsel %vm693, %v931, %v935
      %v942 = vrot.slane %v940, 2
      %v945 = vsel %vm689, %v932, %v936
      %v946 = vsel %vm693, %v932, %v936
      %v948 = vrot.slane %v946, 2
      %949 = vst [vmem:[#allocation1] ss:$2 sm:$0xff] %v939
      %v950 = vld.sshfl [vmem:[#allocation1] sm:$0xff pattern:$0x75643120]
      %s952 = scalar_lea.vmem [#allocation1], 16
      %953 = vst [vmem:[%s952] ss:$2 sm:$0xff] %v942
      %v954 = vld.sshfl [vmem:[#allocation1 + $0x10] sm:$0xff pattern:$0x75643120]
      %s955 = scalar_lea.vmem [#allocation1], 32
      %956 = vst [vmem:[%s955] ss:$2 sm:$0xff] %v945
      %v957 = vld.sshfl [vmem:[#allocation1 + $0x20] sm:$0xff pattern:$0x75643120]
      %s959 = scalar_lea.vmem [#allocation1], 48
      %960 = vst [vmem:[%s959] ss:$2 sm:$0xff] %v948
      %v961 = vld.sshfl [vmem:[#allocation1 + $0x30] sm:$0xff pattern:$0x75643120]
      %v962 = vshrl.u32 %v950, 16
      %v964 = vrot.slane %v962, 7
      %v965 = vshll.u32 %v950, 16
      %v967 = vor.u32 %v964, %v965
      %v968 = vshrl.u32 %v954, 16
      %v970 = vrot.slane %v968, 7
      %v971 = vshll.u32 %v954, 16
      %v973 = vor.u32 %v970, %v971
      %v974 = vshrl.u32 %v957, 16
      %v976 = vrot.slane %v974, 7
      %v977 = vshll.u32 %v957, 16
      %v979 = vor.u32 %v976, %v977
      %v980 = vshrl.u32 %v961, 16
      %v982 = vrot.slane %v980, 7
      %v983 = vshll.u32 %v961, 16
      %v985 = vor.u32 %v982, %v983
      %s990 = scalar_lea.vmem [#allocation2], 44
      %v991 = vld [vmem:[%s990] sm:$0x7]
      %v992 = vsel %vm746, %v967, %v991
      %993 = vst [vmem:[%s990] sm:$0x7] %v992
      %v994 = vld [vmem:[%s990 + $0x4] sm:$0x7]
      %v995 = vsel %vm746, %v973, %v994
      %996 = vst [vmem:[%s990 + $0x4] sm:$0x7] %v995
      %v997 = vld [vmem:[%s990 + $0x8] sm:$0x7]
      %v998 = vsel %vm746, %v979, %v997
      %999 = vst [vmem:[%s990 + $0x8] sm:$0x7] %v998
      %v1000 = vld [vmem:[%s990 + $0xc] sm:$0x7]
      %v1001 = vsel %vm746, %v985, %v1000
      %1002 = vst [vmem:[%s990 + $0xc] sm:$0x7] %v1001
      %s1003 = scalar_lea.vmem %s490, 48
      %v1004 = vld [vmem:[%s1003] sm:$0xff]
      %v1005 = vld [vmem:[%s1003 + $0x8] sm:$0xff]
      %v1007 = vsel %vm635, %v1004, 0
      %v1010 = vsel %vm635, %v1005, 0
      %1012 = vmatpush.msra.mxu0 0.0
      %1013 = vmatpush.msra.mxu0 0.0
      %1014 = vmatpush.msra.mxu0 0.0
      %1015 = vmatpush.msra.mxu0 0.0
      %1016 = vmatpush.msra.mxu0 0.0
      %1017 = vmatpush.msra.mxu0 0.0
      %1018 = vmatpush.msra.mxu0 0.0
      %1019 = vmatpush.msra.mxu0 0.0
      %1020 = vmatpush.msra.mxu0 0.0
      %1021 = vmatpush.msra.mxu0 0.0
      %1022 = vmatpush.msra.mxu0 0.0
      %1023 = vmatpush.msra.mxu0 0.0
      %1024 = vmatpush.msra.mxu0 0.0
      %1025 = vmatpush.msra.mxu0 0.0
      %1026 = vmatpush.msra.mxu0 %v628
      %1027 = vmatpush.msra.mxu0 %v627
      %1028 = vmatmul.f32.gmra.mxu0 %v1007
      %v1029 = vpop.f32.mrf.mxu0
      %v1030 = vadd.f32 %v633, %v1029
      %1031 = vmatmul.f32.gmra.mxu0 %v1010
      %v1032 = vpop.f32.mrf.mxu0
      %v1033 = vadd.f32 %v633, %v1032
      %1034 = vdwg.mxu0
      %v1035 = vmul.f32 %v1030, 0.5
      %v1036 = vmul.f32 %v1033, 0.5
      %v1037 = vmul.f32 %v1030, %v1030
      %v1038 = vmul.f32 %v1033, %v1033
      %v1039 = vmul.f32 %v1037, %v1030
      %v1040 = vmul.f32 %v1038, %v1033
      %v1041 = vmul.f32 %v1039, 0.044715
      %v1042 = vmul.f32 %v1040, 0.044715
      %v1043 = vadd.f32 %v1030, %v1041
      %v1044 = vadd.f32 %v1033, %v1042
      %v1045 = vmul.f32 %v1043, 0.7978846
      %v1046 = vmul.f32 %v1044, 0.7978846
      %v1047 = vtanh.pop %v1045
      %v1048 = vtanh.pop %v1046
      %v1049 = vadd.f32 %v1047, 1.0
      %v1050 = vadd.f32 %v1048, 1.0
      %v1051 = vmul.f32 %v1035, %v1049
      %v1052 = vmul.f32 %v1036, %v1050
      %v1053 = vpack.c.bf16 %v1051, %v1051
      %v1054 = vpack.c.bf16 %v1052, %v1052
      %v1057 = vrot.slane %v1053, 2
      %v1058 = vrot.slane %v1054, 2
      %v1061 = vsel %vm689, %v1053, %v1057
      %v1062 = vsel %vm693, %v1053, %v1057
      %v1064 = vrot.slane %v1062, 2
      %v1067 = vsel %vm689, %v1054, %v1058
      %v1068 = vsel %vm693, %v1054, %v1058
      %v1070 = vrot.slane %v1068, 2
      %1071 = vst [vmem:[#allocation1] ss:$2 sm:$0xff] %v1061
      %v1072 = vld.sshfl [vmem:[#allocation1] sm:$0xff pattern:$0x75643120]
      %s1074 = scalar_lea.vmem [#allocation1], 16
      %1075 = vst [vmem:[%s1074] ss:$2 sm:$0xff] %v1064
      %v1076 = vld.sshfl [vmem:[#allocation1 + $0x10] sm:$0xff pattern:$0x75643120]
      %s1077 = scalar_lea.vmem [#allocation1], 32
      %1078 = vst [vmem:[%s1077] ss:$2 sm:$0xff] %v1067
      %v1079 = vld.sshfl [vmem:[#allocation1 + $0x20] sm:$0xff pattern:$0x75643120]
      %s1081 = scalar_lea.vmem [#allocation1], 48
      %1082 = vst [vmem:[%s1081] ss:$2 sm:$0xff] %v1070
      %v1083 = vld.sshfl [vmem:[#allocation1 + $0x30] sm:$0xff pattern:$0x75643120]
      %v1084 = vshrl.u32 %v1072, 16
      %v1086 = vrot.slane %v1084, 7
      %v1087 = vshll.u32 %v1072, 16
      %v1089 = vor.u32 %v1086, %v1087
      %v1090 = vshrl.u32 %v1076, 16
      %v1092 = vrot.slane %v1090, 7
      %v1093 = vshll.u32 %v1076, 16
      %v1095 = vor.u32 %v1092, %v1093
      %v1096 = vshrl.u32 %v1079, 16
      %v1098 = vrot.slane %v1096, 7
      %v1099 = vshll.u32 %v1079, 16
      %v1101 = vor.u32 %v1098, %v1099
      %v1102 = vshrl.u32 %v1083, 16
      %v1104 = vrot.slane %v1102, 7
      %v1105 = vshll.u32 %v1083, 16
      %v1107 = vor.u32 %v1104, %v1105
      %s1112 = scalar_lea.vmem [#allocation2], 64
      %v1113 = vld [vmem:[%s1112] sm:$0x7]
      %v1114 = vsel %vm746, %v1089, %v1113
      %1115 = vst [vmem:[%s1112] sm:$0x7] %v1114
      %v1116 = vld [vmem:[%s1112 + $0x4] sm:$0x7]
      %v1117 = vsel %vm746, %v1095, %v1116
      %1118 = vst [vmem:[%s1112 + $0x4] sm:$0x7] %v1117
      %v1119 = vld [vmem:[%s1112 + $0x8] sm:$0x7]
      %v1120 = vsel %vm746, %v1101, %v1119
      %1121 = vst [vmem:[%s1112 + $0x8] sm:$0x7] %v1120
      %v1122 = vld [vmem:[%s1112 + $0xc] sm:$0x7]
      %v1123 = vsel %vm746, %v1107, %v1122
      %1124 = vst [vmem:[%s1112 + $0xc] sm:$0x7] %v1123
      %s1125 = scalar_lea.vmem [#allocation2], 60
      %v1126 = vld [vmem:[%s1125] sm:$0x3]
      %v1127 = vld [vmem:[%s1125 + $0x4] sm:$0x3]
      %v1128 = vld [vmem:[%s1125 + $0x8] sm:$0x3]
      %v1129 = vld [vmem:[%s1125 + $0xc] sm:$0x3]
      %v1130 = vld [vmem:[%s3] sm:$0xf]
      %v1131 = vld [vmem:[%s3 + $0x4] sm:$0xf]
      %v1132 = vld [vmem:[%s3 + $0x8] sm:$0xf]
      %v1133 = vld [vmem:[%s3 + $0xc] sm:$0xf]
      %v1134 = vld [vmem:[%s3 + $0x10] sm:$0xf]
      %v1135 = vld [vmem:[%s3 + $0x14] sm:$0xf]
      %v1136 = vld [vmem:[%s3 + $0x18] sm:$0xf]
      %v1137 = vld [vmem:[%s3 + $0x1c] sm:$0xf]
      %s1138 = scalar_lea.vmem [#allocation2], 40
      %v1139 = vld [vmem:[%s1138] sm:$0x7]
      %v1140 = vld [vmem:[%s1138 + $0x4] sm:$0x7]
      %v1141 = vld [vmem:[%s1138 + $0x8] sm:$0x7]
      %v1142 = vld [vmem:[%s1138 + $0xc] sm:$0x7]
      %v1147 = vrot.slane %v1139, 2
      %v1148 = vrot.slane %v1140, 2
      %v1149 = vrot.slane %v1141, 2
      %v1150 = vrot.slane %v1142, 2
      %v1153 = vsel %vm689, %v1139, %v1147
      %v1154 = vsel %vm693, %v1139, %v1147
      %v1156 = vrot.slane %v1154, 2
      %v1159 = vsel %vm689, %v1140, %v1148
      %v1160 = vsel %vm693, %v1140, %v1148
      %v1162 = vrot.slane %v1160, 2
      %v1165 = vsel %vm689, %v1141, %v1149
      %v1166 = vsel %vm693, %v1141, %v1149
      %v1168 = vrot.slane %v1166, 2
      %v1171 = vsel %vm689, %v1142, %v1150
      %v1172 = vsel %vm693, %v1142, %v1150
      %v1174 = vrot.slane %v1172, 2
      %vm1175 = vsmask.f32 3336
      %vm1176 = vmor %vm575, %vm1175
      %vm1177 = vsmask.f32 5392
      %vm1178 = vmor %vm1176, %vm1177
      %vm1179 = vsmask.f32 7448
      %vm1180 = vmor %vm1178, %vm1179
      %v1181 = vshrl.u32 %v1153, 16
      %v1183 = vrot.slane %v1181, 6
      %v1184 = vshll.u32 %v1153, 16
      %v1186 = vrot.slane %v1184, 7
      %v1187 = vor.u32 %v1183, %v1186
      %v1188 = vrot.slane %v1187, 2
      %v1190 = vshll.u32 %v1156, 16
      %v1192 = vrot.slane %v1190, 7
      %v1193 = vsel %vm1180, %v1188, %v1192
      %v1194 = vshrl.u32 %v1159, 16
      %v1196 = vrot.slane %v1194, 6
      %v1197 = vshll.u32 %v1159, 16
      %v1199 = vrot.slane %v1197, 7
      %v1200 = vor.u32 %v1196, %v1199
      %v1201 = vrot.slane %v1200, 2
      %v1203 = vshll.u32 %v1162, 16
      %v1205 = vrot.slane %v1203, 7
      %v1206 = vsel %vm1180, %v1201, %v1205
      %v1207 = vshrl.u32 %v1165, 16
      %v1209 = vrot.slane %v1207, 6
      %v1210 = vshll.u32 %v1165, 16
      %v1212 = vrot.slane %v1210, 7
      %v1213 = vor.u32 %v1209, %v1212
      %v1214 = vrot.slane %v1213, 2
      %v1216 = vshll.u32 %v1168, 16
      %v1218 = vrot.slane %v1216, 7
      %v1219 = vsel %vm1180, %v1214, %v1218
      %v1220 = vshrl.u32 %v1171, 16
      %v1222 = vrot.slane %v1220, 6
      %v1223 = vshll.u32 %v1171, 16
      %v1225 = vrot.slane %v1223, 7
      %v1226 = vor.u32 %v1222, %v1225
      %v1227 = vrot.slane %v1226, 2
      %v1229 = vshll.u32 %v1174, 16
      %v1231 = vrot.slane %v1229, 7
      %v1232 = vsel %vm1180, %v1227, %v1231
      %s1233 = scalar_lea.vmem %s3, 32
      %v1234 = vld [vmem:[%s1233] sm:$0xf]
      %v1235 = vld [vmem:[%s1233 + $0x4] sm:$0xf]
      %v1236 = vld [vmem:[%s1233 + $0x8] sm:$0xf]
      %v1237 = vld [vmem:[%s1233 + $0xc] sm:$0xf]
      %v1238 = vld [vmem:[%s1233 + $0x10] sm:$0xf]
      %v1239 = vld [vmem:[%s1233 + $0x14] sm:$0xf]
      %v1240 = vld [vmem:[%s1233 + $0x18] sm:$0xf]
      %v1241 = vld [vmem:[%s1233 + $0x1c] sm:$0xf]
      %1243 = vst [vmem:[#allocation1] ss:$4 sm:$0xff] %v1193
      %s1245 = scalar_lea.vmem [#allocation1], 1
      %1246 = vst [vmem:[%s1245] ss:$4 sm:$0xff] %v1206
      %s1248 = scalar_lea.vmem [#allocation1], 2
      %1249 = vst [vmem:[%s1248] ss:$4 sm:$0xff] %v1219
      %s1251 = scalar_lea.vmem [#allocation1], 3
      %1252 = vst [vmem:[%s1251] ss:$4 sm:$0xff] %v1232
      %v1253 = vld.sshfl [vmem:[#allocation1] sm:$0xff pattern:$0x73625140]
      %v1262 = vunpack.c.l.b16 %v1234
      %v1263 = vunpack.c.l.b16 %v1235
      %v1264 = vunpack.c.l.b16 %v1236
      %v1265 = vunpack.c.l.b16 %v1237
      %v1266 = vunpack.c.l.b16 %v1238
      %v1267 = vunpack.c.l.b16 %v1239
      %v1268 = vunpack.c.l.b16 %v1240
      %v1269 = vunpack.c.l.b16 %v1241
      %v1270 = vpack.c.b16 %v1263, %v1262
      %v1271 = vpack.c.b16 %v1265, %v1264
      %v1272 = vpack.c.b16 %v1267, %v1266
      %v1273 = vpack.c.b16 %v1269, %v1268
      %vm1278 = vcmask 523264
      %v1279 = vsel %vm1278, %v1253, 0
      %1281 = vmatpush.bf16.msra.mxu0 0
      %1282 = vmatpush.bf16.msra.mxu0 0
      %1283 = vmatpush.bf16.msra.mxu0 0
      %1284 = vmatpush.bf16.msra.mxu0 0
      %1285 = vmatpush.bf16.msra.mxu0 %v1273
      %1286 = vmatpush.bf16.msra.mxu0 %v1272
      %1287 = vmatpush.bf16.msra.mxu0 %v1271
      %1288 = vmatpush.bf16.msra.mxu0 %v1270
      %1289 = vmatmul.bf16.gmra.mxu0 %v1279
      %v1290 = vpop.f32.mrf.mxu0
      %v1291 = vadd.f32 0.0, %v1290
      %v1292 = vpop.f32.mrf.mxu0
      %v1293 = vadd.f32 0.0, %v1292
      %1294 = vdwg.mxu0
      %1296 = vst [vmem:[#allocation1] ss:$4 sm:$0xff] %v1126
      %s1298 = scalar_lea.vmem [#allocation1], 1
      %1299 = vst [vmem:[%s1298] ss:$4 sm:$0xff] %v1127
      %s1301 = scalar_lea.vmem [#allocation1], 2
      %1302 = vst [vmem:[%s1301] ss:$4 sm:$0xff] %v1128
      %s1304 = scalar_lea.vmem [#allocation1], 3
      %1305 = vst [vmem:[%s1304] ss:$4 sm:$0xff] %v1129
      %v1306 = vld.sshfl [vmem:[#allocation1] sm:$0xff pattern:$0x73625140]
      %v1315 = vunpack.c.l.b16 %v1130
      %v1316 = vunpack.c.l.b16 %v1131
      %v1317 = vunpack.c.l.b16 %v1132
      %v1318 = vunpack.c.l.b16 %v1133
      %v1319 = vunpack.c.l.b16 %v1134
      %v1320 = vunpack.c.l.b16 %v1135
      %v1321 = vunpack.c.l.b16 %v1136
      %v1322 = vunpack.c.l.b16 %v1137
      %v1323 = vpack.c.b16 %v1316, %v1315
      %v1324 = vpack.c.b16 %v1318, %v1317
      %v1325 = vpack.c.b16 %v1320, %v1319
      %v1326 = vpack.c.b16 %v1322, %v1321
      %v1331 = vsel %vm1278, %v1306, 0
      %1333 = vmatpush.bf16.msra.mxu0 0
      %1334 = vmatpush.bf16.msra.mxu0 0
      %1335 = vmatpush.bf16.msra.mxu0 0
      %1336 = vmatpush.bf16.msra.mxu0 0
      %1337 = vmatpush.bf16.msra.mxu0 %v1326
      %1338 = vmatpush.bf16.msra.mxu0 %v1325
      %1339 = vmatpush.bf16.msra.mxu0 %v1324
      %1340 = vmatpush.bf16.msra.mxu0 %v1323
      %1341 = vmatmul.bf16.gmra.mxu0 %v1331
      %v1342 = vpop.f32.mrf.mxu0
      %v1343 = vadd.f32 %v1291, %v1342
      %v1344 = vpop.f32.mrf.mxu0
      %v1345 = vadd.f32 %v1293, %v1344
      %1346 = vdwg.mxu0
      %v1347 = vld [vmem:[%s1125] sm:$0x7]
      %v1348 = vld [vmem:[%s1125 + $0x4] sm:$0x7]
      %v1349 = vld [vmem:[%s1125 + $0x8] sm:$0x7]
      %v1350 = vld [vmem:[%s1125 + $0xc] sm:$0x7]
      %v1355 = vrot.slane %v1347, 2
      %v1356 = vrot.slane %v1348, 2
      %v1357 = vrot.slane %v1349, 2
      %v1358 = vrot.slane %v1350, 2
      %v1361 = vsel %vm689, %v1347, %v1355
      %v1362 = vsel %vm693, %v1347, %v1355
      %v1364 = vrot.slane %v1362, 2
      %v1367 = vsel %vm689, %v1348, %v1356
      %v1368 = vsel %vm693, %v1348, %v1356
      %v1370 = vrot.slane %v1368, 2
      %v1373 = vsel %vm689, %v1349, %v1357
      %v1374 = vsel %vm693, %v1349, %v1357
      %v1376 = vrot.slane %v1374, 2
      %v1379 = vsel %vm689, %v1350, %v1358
      %v1380 = vsel %vm693, %v1350, %v1358
      %v1382 = vrot.slane %v1380, 2
      %v1383 = vshrl.u32 %v1361, 16
      %v1385 = vrot.slane %v1383, 6
      %v1386 = vshll.u32 %v1361, 16
      %v1388 = vrot.slane %v1386, 7
      %v1389 = vor.u32 %v1385, %v1388
      %v1390 = vrot.slane %v1389, 2
      %v1392 = vshll.u32 %v1364, 16
      %v1394 = vrot.slane %v1392, 7
      %v1395 = vsel %vm1180, %v1390, %v1394
      %v1396 = vshrl.u32 %v1367, 16
      %v1398 = vrot.slane %v1396, 6
      %v1399 = vshll.u32 %v1367, 16
      %v1401 = vrot.slane %v1399, 7
      %v1402 = vor.u32 %v1398, %v1401
      %v1403 = vrot.slane %v1402, 2
      %v1405 = vshll.u32 %v1370, 16
      %v1407 = vrot.slane %v1405, 7
      %v1408 = vsel %vm1180, %v1403, %v1407
      %v1409 = vshrl.u32 %v1373, 16
      %v1411 = vrot.slane %v1409, 6
      %v1412 = vshll.u32 %v1373, 16
      %v1414 = vrot.slane %v1412, 7
      %v1415 = vor.u32 %v1411, %v1414
      %v1416 = vrot.slane %v1415, 2
      %v1418 = vshll.u32 %v1376, 16
      %v1420 = vrot.slane %v1418, 7
      %v1421 = vsel %vm1180, %v1416, %v1420
      %v1422 = vshrl.u32 %v1379, 16
      %v1424 = vrot.slane %v1422, 6
      %v1425 = vshll.u32 %v1379, 16
      %v1427 = vrot.slane %v1425, 7
      %v1428 = vor.u32 %v1424, %v1427
      %v1429 = vrot.slane %v1428, 2
      %v1431 = vshll.u32 %v1382, 16
      %v1433 = vrot.slane %v1431, 7
      %v1434 = vsel %vm1180, %v1429, %v1433
      %s1435 = scalar_lea.vmem %s3, 64
      %v1436 = vld [vmem:[%s1435] sm:$0xf]
      %v1437 = vld [vmem:[%s1435 + $0x4] sm:$0xf]
      %v1438 = vld [vmem:[%s1435 + $0x8] sm:$0xf]
      %v1439 = vld [vmem:[%s1435 + $0xc] sm:$0xf]
      %v1440 = vld [vmem:[%s1435 + $0x10] sm:$0xf]
      %v1441 = vld [vmem:[%s1435 + $0x14] sm:$0xf]
      %v1442 = vld [vmem:[%s1435 + $0x18] sm:$0xf]
      %v1443 = vld [vmem:[%s1435 + $0x1c] sm:$0xf]
      %1445 = vst [vmem:[#allocation1] ss:$4 sm:$0xff] %v1395
      %s1447 = scalar_lea.vmem [#allocation1], 1
      %1448 = vst [vmem:[%s1447] ss:$4 sm:$0xff] %v1408
      %s1450 = scalar_lea.vmem [#allocation1], 2
      %1451 = vst [vmem:[%s1450] ss:$4 sm:$0xff] %v1421
      %s1453 = scalar_lea.vmem [#allocation1], 3
      %1454 = vst [vmem:[%s1453] ss:$4 sm:$0xff] %v1434
      %v1455 = vld.sshfl [vmem:[#allocation1] sm:$0xff pattern:$0x73625140]
      %v1464 = vunpack.c.l.b16 %v1436
      %v1465 = vunpack.c.l.b16 %v1437
      %v1466 = vunpack.c.l.b16 %v1438
      %v1467 = vunpack.c.l.b16 %v1439
      %v1468 = vunpack.c.l.b16 %v1440
      %v1469 = vunpack.c.l.b16 %v1441
      %v1470 = vunpack.c.l.b16 %v1442
      %v1471 = vunpack.c.l.b16 %v1443
      %v1472 = vpack.c.b16 %v1465, %v1464
      %v1473 = vpack.c.b16 %v1467, %v1466
      %v1474 = vpack.c.b16 %v1469, %v1468
      %v1475 = vpack.c.b16 %v1471, %v1470
      %v1480 = vsel %vm1278, %v1455, 0
      %1482 = vmatpush.bf16.msra.mxu0 0
      %1483 = vmatpush.bf16.msra.mxu0 0
      %1484 = vmatpush.bf16.msra.mxu0 0
      %1485 = vmatpush.bf16.msra.mxu0 0
      %1486 = vmatpush.bf16.msra.mxu0 %v1475
      %1487 = vmatpush.bf16.msra.mxu0 %v1474
      %1488 = vmatpush.bf16.msra.mxu0 %v1473
      %1489 = vmatpush.bf16.msra.mxu0 %v1472
      %1490 = vmatmul.bf16.gmra.mxu0 %v1480
      %v1491 = vpop.f32.mrf.mxu0
      %v1492 = vadd.f32 0.0, %v1491
      %v1493 = vpop.f32.mrf.mxu0
      %v1494 = vadd.f32 0.0, %v1493
      %1495 = vdwg.mxu0
      %v1496 = vadd.f32 %v1343, %v1492
      %v1497 = vadd.f32 %v1345, %v1494
      %v1498 = vld [vmem:[%s868] sm:$0x3]
      %v1499 = vld [vmem:[%s868 + $0x4] sm:$0x3]
      %v1500 = vld [vmem:[%s868 + $0x8] sm:$0x3]
      %v1501 = vld [vmem:[%s868 + $0xc] sm:$0x3]
      %s1502 = scalar_lea.vmem %s3, 96
      %v1503 = vld [vmem:[%s1502] sm:$0xf]
      %v1504 = vld [vmem:[%s1502 + $0x4] sm:$0xf]
      %v1505 = vld [vmem:[%s1502 + $0x8] sm:$0xf]
      %v1506 = vld [vmem:[%s1502 + $0xc] sm:$0xf]
      %v1507 = vld [vmem:[%s1502 + $0x10] sm:$0xf]
      %v1508 = vld [vmem:[%s1502 + $0x14] sm:$0xf]
      %v1509 = vld [vmem:[%s1502 + $0x18] sm:$0xf]
      %v1510 = vld [vmem:[%s1502 + $0x1c] sm:$0xf]
      %1512 = vst [vmem:[#allocation1] ss:$4 sm:$0xff] %v1498
      %s1514 = scalar_lea.vmem [#allocation1], 1
      %1515 = vst [vmem:[%s1514] ss:$4 sm:$0xff] %v1499
      %s1517 = scalar_lea.vmem [#allocation1], 2
      %1518 = vst [vmem:[%s1517] ss:$4 sm:$0xff] %v1500
      %s1520 = scalar_lea.vmem [#allocation1], 3
      %1521 = vst [vmem:[%s1520] ss:$4 sm:$0xff] %v1501
      %v1522 = vld.sshfl [vmem:[#allocation1] sm:$0xff pattern:$0x73625140]
      %v1531 = vunpack.c.l.b16 %v1503
      %v1532 = vunpack.c.l.b16 %v1504
      %v1533 = vunpack.c.l.b16 %v1505
      %v1534 = vunpack.c.l.b16 %v1506
      %v1535 = vunpack.c.l.b16 %v1507
      %v1536 = vunpack.c.l.b16 %v1508
      %v1537 = vunpack.c.l.b16 %v1509
      %v1538 = vunpack.c.l.b16 %v1510
      %v1539 = vpack.c.b16 %v1532, %v1531
      %v1540 = vpack.c.b16 %v1534, %v1533
      %v1541 = vpack.c.b16 %v1536, %v1535
      %v1542 = vpack.c.b16 %v1538, %v1537
      %v1547 = vsel %vm1278, %v1522, 0
      %1549 = vmatpush.bf16.msra.mxu0 0
      %1550 = vmatpush.bf16.msra.mxu0 0
      %1551 = vmatpush.bf16.msra.mxu0 0
      %1552 = vmatpush.bf16.msra.mxu0 0
      %1553 = vmatpush.bf16.msra.mxu0 %v1542
      %1554 = vmatpush.bf16.msra.mxu0 %v1541
      %1555 = vmatpush.bf16.msra.mxu0 %v1540
      %1556 = vmatpush.bf16.msra.mxu0 %v1539
      %1557 = vmatmul.bf16.gmra.mxu0 %v1547
      %v1558 = vpop.f32.mrf.mxu0
      %v1559 = vadd.f32 0.0, %v1558
      %v1560 = vpop.f32.mrf.mxu0
      %v1561 = vadd.f32 0.0, %v1560
      %1562 = vdwg.mxu0
      %v1563 = vadd.f32 %v1496, %v1559
      %v1564 = vadd.f32 %v1497, %v1561
      %v1565 = vld [vmem:[%s744] sm:$0x7]
      %v1566 = vld [vmem:[%s744 + $0x4] sm:$0x7]
      %v1567 = vld [vmem:[%s744 + $0x8] sm:$0x7]
      %v1568 = vld [vmem:[%s744 + $0xc] sm:$0x7]
      %v1573 = vrot.slane %v1565, 2
      %v1574 = vrot.slane %v1566, 2
      %v1575 = vrot.slane %v1567, 2
      %v1576 = vrot.slane %v1568, 2
      %v1579 = vsel %vm689, %v1565, %v1573
      %v1580 = vsel %vm693, %v1565, %v1573
      %v1582 = vrot.slane %v1580, 2
      %v1585 = vsel %vm689, %v1566, %v1574
      %v1586 = vsel %vm693, %v1566, %v1574
      %v1588 = vrot.slane %v1586, 2
      %v1591 = vsel %vm689, %v1567, %v1575
      %v1592 = vsel %vm693, %v1567, %v1575
      %v1594 = vrot.slane %v1592, 2
      %v1597 = vsel %vm689, %v1568, %v1576
      %v1598 = vsel %vm693, %v1568, %v1576
      %v1600 = vrot.slane %v1598, 2
      %v1601 = vshrl.u32 %v1579, 16
      %v1603 = vrot.slane %v1601, 6
      %v1604 = vshll.u32 %v1579, 16
      %v1606 = vrot.slane %v1604, 7
      %v1607 = vor.u32 %v1603, %v1606
      %v1608 = vrot.slane %v1607, 2
      %v1610 = vshll.u32 %v1582, 16
      %v1612 = vrot.slane %v1610, 7
      %v1613 = vsel %vm1180, %v1608, %v1612
      %v1614 = vshrl.u32 %v1585, 16
      %v1616 = vrot.slane %v1614, 6
      %v1617 = vshll.u32 %v1585, 16
      %v1619 = vrot.slane %v1617, 7
      %v1620 = vor.u32 %v1616, %v1619
      %v1621 = vrot.slane %v1620, 2
      %v1623 = vshll.u32 %v1588, 16
      %v1625 = vrot.slane %v1623, 7
      %v1626 = vsel %vm1180, %v1621, %v1625
      %v1627 = vshrl.u32 %v1591, 16
      %v1629 = vrot.slane %v1627, 6
      %v1630 = vshll.u32 %v1591, 16
      %v1632 = vrot.slane %v1630, 7
      %v1633 = vor.u32 %v1629, %v1632
      %v1634 = vrot.slane %v1633, 2
      %v1636 = vshll.u32 %v1594, 16
      %v1638 = vrot.slane %v1636, 7
      %v1639 = vsel %vm1180, %v1634, %v1638
      %v1640 = vshrl.u32 %v1597, 16
      %v1642 = vrot.slane %v1640, 6
      %v1643 = vshll.u32 %v1597, 16
      %v1645 = vrot.slane %v1643, 7
      %v1646 = vor.u32 %v1642, %v1645
      %v1647 = vrot.slane %v1646, 2
      %v1649 = vshll.u32 %v1600, 16
      %v1651 = vrot.slane %v1649, 7
      %v1652 = vsel %vm1180, %v1647, %v1651
      %s1653 = scalar_lea.vmem %s3, 128
      %v1654 = vld [vmem:[%s1653] sm:$0xf]
      %v1655 = vld [vmem:[%s1653 + $0x4] sm:$0xf]
      %v1656 = vld [vmem:[%s1653 + $0x8] sm:$0xf]
      %v1657 = vld [vmem:[%s1653 + $0xc] sm:$0xf]
      %v1658 = vld [vmem:[%s1653 + $0x10] sm:$0xf]
      %v1659 = vld [vmem:[%s1653 + $0x14] sm:$0xf]
      %v1660 = vld [vmem:[%s1653 + $0x18] sm:$0xf]
      %v1661 = vld [vmem:[%s1653 + $0x1c] sm:$0xf]
      %1663 = vst [vmem:[#allocation1] ss:$4 sm:$0xff] %v1613
      %s1665 = scalar_lea.vmem [#allocation1], 1
      %1666 = vst [vmem:[%s1665] ss:$4 sm:$0xff] %v1626
      %s1668 = scalar_lea.vmem [#allocation1], 2
      %1669 = vst [vmem:[%s1668] ss:$4 sm:$0xff] %v1639
      %s1671 = scalar_lea.vmem [#allocation1], 3
      %1672 = vst [vmem:[%s1671] ss:$4 sm:$0xff] %v1652
      %v1673 = vld.sshfl [vmem:[#allocation1] sm:$0xff pattern:$0x73625140]
      %v1682 = vunpack.c.l.b16 %v1654
      %v1683 = vunpack.c.l.b16 %v1655
      %v1684 = vunpack.c.l.b16 %v1656
      %v1685 = vunpack.c.l.b16 %v1657
      %v1686 = vunpack.c.l.b16 %v1658
      %v1687 = vunpack.c.l.b16 %v1659
      %v1688 = vunpack.c.l.b16 %v1660
      %v1689 = vunpack.c.l.b16 %v1661
      %v1690 = vpack.c.b16 %v1683, %v1682
      %v1691 = vpack.c.b16 %v1685, %v1684
      %v1692 = vpack.c.b16 %v1687, %v1686
      %v1693 = vpack.c.b16 %v1689, %v1688
      %v1698 = vsel %vm1278, %v1673, 0
      %1700 = vmatpush.bf16.msra.mxu0 0
      %1701 = vmatpush.bf16.msra.mxu0 0
      %1702 = vmatpush.bf16.msra.mxu0 0
      %1703 = vmatpush.bf16.msra.mxu0 0
      %1704 = vmatpush.bf16.msra.mxu0 %v1693
      %1705 = vmatpush.bf16.msra.mxu0 %v1692
      %1706 = vmatpush.bf16.msra.mxu0 %v1691
      %1707 = vmatpush.bf16.msra.mxu0 %v1690
      %1708 = vmatmul.bf16.gmra.mxu0 %v1698
      %v1709 = vpop.f32.mrf.mxu0
      %v1710 = vadd.f32 0.0, %v1709
      %v1711 = vpop.f32.mrf.mxu0
      %v1712 = vadd.f32 0.0, %v1711
      %1713 = vdwg.mxu0
      %v1714 = vadd.f32 %v1563, %v1710
      %v1715 = vadd.f32 %v1564, %v1712
      %v1716 = vld [vmem:[%s868] sm:$0x7]
      %v1717 = vld [vmem:[%s868 + $0x4] sm:$0x7]
      %v1718 = vld [vmem:[%s868 + $0x8] sm:$0x7]
      %v1719 = vld [vmem:[%s868 + $0xc] sm:$0x7]
      %v1724 = vrot.slane %v1716, 2
      %v1725 = vrot.slane %v1717, 2
      %v1726 = vrot.slane %v1718, 2
      %v1727 = vrot.slane %v1719, 2
      %v1730 = vsel %vm689, %v1716, %v1724
      %v1731 = vsel %vm693, %v1716, %v1724
      %v1733 = vrot.slane %v1731, 2
      %v1736 = vsel %vm689, %v1717, %v1725
      %v1737 = vsel %vm693, %v1717, %v1725
      %v1739 = vrot.slane %v1737, 2
      %v1742 = vsel %vm689, %v1718, %v1726
      %v1743 = vsel %vm693, %v1718, %v1726
      %v1745 = vrot.slane %v1743, 2
      %v1748 = vsel %vm689, %v1719, %v1727
      %v1749 = vsel %vm693, %v1719, %v1727
      %v1751 = vrot.slane %v1749, 2
      %v1752 = vshrl.u32 %v1730, 16
      %v1754 = vrot.slane %v1752, 6
      %v1755 = vshll.u32 %v1730, 16
      %v1757 = vrot.slane %v1755, 7
      %v1758 = vor.u32 %v1754, %v1757
      %v1759 = vrot.slane %v1758, 2
      %v1761 = vshll.u32 %v1733, 16
      %v1763 = vrot.slane %v1761, 7
      %v1764 = vsel %vm1180, %v1759, %v1763
      %v1765 = vshrl.u32 %v1736, 16
      %v1767 = vrot.slane %v1765, 6
      %v1768 = vshll.u32 %v1736, 16
      %v1770 = vrot.slane %v1768, 7
      %v1771 = vor.u32 %v1767, %v1770
      %v1772 = vrot.slane %v1771, 2
      %v1774 = vshll.u32 %v1739, 16
      %v1776 = vrot.slane %v1774, 7
      %v1777 = vsel %vm1180, %v1772, %v1776
      %v1778 = vshrl.u32 %v1742, 16
      %v1780 = vrot.slane %v1778, 6
      %v1781 = vshll.u32 %v1742, 16
      %v1783 = vrot.slane %v1781, 7
      %v1784 = vor.u32 %v1780, %v1783
      %v1785 = vrot.slane %v1784, 2
      %v1787 = vshll.u32 %v1745, 16
      %v1789 = vrot.slane %v1787, 7
      %v1790 = vsel %vm1180, %v1785, %v1789
      %v1791 = vshrl.u32 %v1748, 16
      %v1793 = vrot.slane %v1791, 6
      %v1794 = vshll.u32 %v1748, 16
      %v1796 = vrot.slane %v1794, 7
      %v1797 = vor.u32 %v1793, %v1796
      %v1798 = vrot.slane %v1797, 2
      %v1800 = vshll.u32 %v1751, 16
      %v1802 = vrot.slane %v1800, 7
      %v1803 = vsel %vm1180, %v1798, %v1802
      %s1804 = scalar_lea.vmem %s3, 160
      %v1805 = vld [vmem:[%s1804] sm:$0xf]
      %v1806 = vld [vmem:[%s1804 + $0x4] sm:$0xf]
      %v1807 = vld [vmem:[%s1804 + $0x8] sm:$0xf]
      %v1808 = vld [vmem:[%s1804 + $0xc] sm:$0xf]
      %v1809 = vld [vmem:[%s1804 + $0x10] sm:$0xf]
      %v1810 = vld [vmem:[%s1804 + $0x14] sm:$0xf]
      %v1811 = vld [vmem:[%s1804 + $0x18] sm:$0xf]
      %v1812 = vld [vmem:[%s1804 + $0x1c] sm:$0xf]
      %1814 = vst [vmem:[#allocation1] ss:$4 sm:$0xff] %v1764
      %s1816 = scalar_lea.vmem [#allocation1], 1
      %1817 = vst [vmem:[%s1816] ss:$4 sm:$0xff] %v1777
      %s1819 = scalar_lea.vmem [#allocation1], 2
      %1820 = vst [vmem:[%s1819] ss:$4 sm:$0xff] %v1790
      %s1822 = scalar_lea.vmem [#allocation1], 3
      %1823 = vst [vmem:[%s1822] ss:$4 sm:$0xff] %v1803
      %v1824 = vld.sshfl [vmem:[#allocation1] sm:$0xff pattern:$0x73625140]
      %v1833 = vunpack.c.l.b16 %v1805
      %v1834 = vunpack.c.l.b16 %v1806
      %v1835 = vunpack.c.l.b16 %v1807
      %v1836 = vunpack.c.l.b16 %v1808
      %v1837 = vunpack.c.l.b16 %v1809
      %v1838 = vunpack.c.l.b16 %v1810
      %v1839 = vunpack.c.l.b16 %v1811
      %v1840 = vunpack.c.l.b16 %v1812
      %v1841 = vpack.c.b16 %v1834, %v1833
      %v1842 = vpack.c.b16 %v1836, %v1835
      %v1843 = vpack.c.b16 %v1838, %v1837
      %v1844 = vpack.c.b16 %v1840, %v1839
      %v1849 = vsel %vm1278, %v1824, 0
      %1851 = vmatpush.bf16.msra.mxu0 0
      %1852 = vmatpush.bf16.msra.mxu0 0
      %1853 = vmatpush.bf16.msra.mxu0 0
      %1854 = vmatpush.bf16.msra.mxu0 0
      %1855 = vmatpush.bf16.msra.mxu0 %v1844
      %1856 = vmatpush.bf16.msra.mxu0 %v1843
      %1857 = vmatpush.bf16.msra.mxu0 %v1842
      %1858 = vmatpush.bf16.msra.mxu0 %v1841
      %1859 = vmatmul.bf16.gmra.mxu0 %v1849
      %v1860 = vpop.f32.mrf.mxu0
      %v1861 = vadd.f32 0.0, %v1860
      %v1862 = vpop.f32.mrf.mxu0
      %v1863 = vadd.f32 0.0, %v1862
      %1864 = vdwg.mxu0
      %v1865 = vadd.f32 %v1714, %v1861
      %v1866 = vadd.f32 %v1715, %v1863
      %v1867 = vld [vmem:[%s1112] sm:$0x3]
      %v1868 = vld [vmem:[%s1112 + $0x4] sm:$0x3]
      %v1869 = vld [vmem:[%s1112 + $0x8] sm:$0x3]
      %v1870 = vld [vmem:[%s1112 + $0xc] sm:$0x3]
      %s1871 = scalar_lea.vmem %s3, 192
      %v1872 = vld [vmem:[%s1871] sm:$0xf]
      %v1873 = vld [vmem:[%s1871 + $0x4] sm:$0xf]
      %v1874 = vld [vmem:[%s1871 + $0x8] sm:$0xf]
      %v1875 = vld [vmem:[%s1871 + $0xc] sm:$0xf]
      %v1876 = vld [vmem:[%s1871 + $0x10] sm:$0xf]
      %v1877 = vld [vmem:[%s1871 + $0x14] sm:$0xf]
      %v1878 = vld [vmem:[%s1871 + $0x18] sm:$0xf]
      %v1879 = vld [vmem:[%s1871 + $0x1c] sm:$0xf]
      %1881 = vst [vmem:[#allocation1] ss:$4 sm:$0xff] %v1867
      %s1883 = scalar_lea.vmem [#allocation1], 1
      %1884 = vst [vmem:[%s1883] ss:$4 sm:$0xff] %v1868
      %s1886 = scalar_lea.vmem [#allocation1], 2
      %1887 = vst [vmem:[%s1886] ss:$4 sm:$0xff] %v1869
      %s1889 = scalar_lea.vmem [#allocation1], 3
      %1890 = vst [vmem:[%s1889] ss:$4 sm:$0xff] %v1870
      %v1891 = vld.sshfl [vmem:[#allocation1] sm:$0xff pattern:$0x73625140]
      %v1900 = vunpack.c.l.b16 %v1872
      %v1901 = vunpack.c.l.b16 %v1873
      %v1902 = vunpack.c.l.b16 %v1874
      %v1903 = vunpack.c.l.b16 %v1875
      %v1904 = vunpack.c.l.b16 %v1876
      %v1905 = vunpack.c.l.b16 %v1877
      %v1906 = vunpack.c.l.b16 %v1878
      %v1907 = vunpack.c.l.b16 %v1879
      %v1908 = vpack.c.b16 %v1901, %v1900
      %v1909 = vpack.c.b16 %v1903, %v1902
      %v1910 = vpack.c.b16 %v1905, %v1904
      %v1911 = vpack.c.b16 %v1907, %v1906
      %v1916 = vsel %vm1278, %v1891, 0
      %1918 = vmatpush.bf16.msra.mxu0 0
      %1919 = vmatpush.bf16.msra.mxu0 0
      %1920 = vmatpush.bf16.msra.mxu0 0
      %1921 = vmatpush.bf16.msra.mxu0 0
      %1922 = vmatpush.bf16.msra.mxu0 %v1911
      %1923 = vmatpush.bf16.msra.mxu0 %v1910
      %1924 = vmatpush.bf16.msra.mxu0 %v1909
      %1925 = vmatpush.bf16.msra.mxu0 %v1908
      %1926 = vmatmul.bf16.gmra.mxu0 %v1916
      %v1927 = vpop.f32.mrf.mxu0
      %v1928 = vadd.f32 0.0, %v1927
      %v1929 = vpop.f32.mrf.mxu0
      %v1930 = vadd.f32 0.0, %v1929
      %1931 = vdwg.mxu0
      %v1932 = vadd.f32 %v1865, %v1928
      %v1933 = vadd.f32 %v1866, %v1930
      %v1934 = vld [vmem:[%s990] sm:$0x7]
      %v1935 = vld [vmem:[%s990 + $0x4] sm:$0x7]
      %v1936 = vld [vmem:[%s990 + $0x8] sm:$0x7]
      %v1937 = vld [vmem:[%s990 + $0xc] sm:$0x7]
      %v1942 = vrot.slane %v1934, 2
      %v1943 = vrot.slane %v1935, 2
      %v1944 = vrot.slane %v1936, 2
      %v1945 = vrot.slane %v1937, 2
      %v1948 = vsel %vm689, %v1934, %v1942
      %v1949 = vsel %vm693, %v1934, %v1942
      %v1951 = vrot.slane %v1949, 2
      %v1954 = vsel %vm689, %v1935, %v1943
      %v1955 = vsel %vm693, %v1935, %v1943
      %v1957 = vrot.slane %v1955, 2
      %v1960 = vsel %vm689, %v1936, %v1944
      %v1961 = vsel %vm693, %v1936, %v1944
      %v1963 = vrot.slane %v1961, 2
      %v1966 = vsel %vm689, %v1937, %v1945
      %v1967 = vsel %vm693, %v1937, %v1945
      %v1969 = vrot.slane %v1967, 2
      %v1970 = vshrl.u32 %v1948, 16
      %v1972 = vrot.slane %v1970, 6
      %v1973 = vshll.u32 %v1948, 16
      %v1975 = vrot.slane %v1973, 7
      %v1976 = vor.u32 %v1972, %v1975
      %v1977 = vrot.slane %v1976, 2
      %v1979 = vshll.u32 %v1951, 16
      %v1981 = vrot.slane %v1979, 7
      %v1982 = vsel %vm1180, %v1977, %v1981
      %v1983 = vshrl.u32 %v1954, 16
      %v1985 = vrot.slane %v1983, 6
      %v1986 = vshll.u32 %v1954, 16
      %v1988 = vrot.slane %v1986, 7
      %v1989 = vor.u32 %v1985, %v1988
      %v1990 = vrot.slane %v1989, 2
      %v1992 = vshll.u32 %v1957, 16
      %v1994 = vrot.slane %v1992, 7
      %v1995 = vsel %vm1180, %v1990, %v1994
      %v1996 = vshrl.u32 %v1960, 16
      %v1998 = vrot.slane %v1996, 6
      %v1999 = vshll.u32 %v1960, 16
      %v2001 = vrot.slane %v1999, 7
      %v2002 = vor.u32 %v1998, %v2001
      %v2003 = vrot.slane %v2002, 2
      %v2005 = vshll.u32 %v1963, 16
      %v2007 = vrot.slane %v2005, 7
      %v2008 = vsel %vm1180, %v2003, %v2007
      %v2009 = vshrl.u32 %v1966, 16
      %v2011 = vrot.slane %v2009, 6
      %v2012 = vshll.u32 %v1966, 16
      %v2014 = vrot.slane %v2012, 7
      %v2015 = vor.u32 %v2011, %v2014
      %v2016 = vrot.slane %v2015, 2
      %v2018 = vshll.u32 %v1969, 16
      %v2020 = vrot.slane %v2018, 7
      %v2021 = vsel %vm1180, %v2016, %v2020
      %s2022 = scalar_lea.vmem %s3, 224
      %v2023 = vld [vmem:[%s2022] sm:$0xf]
      %v2024 = vld [vmem:[%s2022 + $0x4] sm:$0xf]
      %v2025 = vld [vmem:[%s2022 + $0x8] sm:$0xf]
      %v2026 = vld [vmem:[%s2022 + $0xc] sm:$0xf]
      %v2027 = vld [vmem:[%s2022 + $0x10] sm:$0xf]
      %v2028 = vld [vmem:[%s2022 + $0x14] sm:$0xf]
      %v2029 = vld [vmem:[%s2022 + $0x18] sm:$0xf]
      %v2030 = vld [vmem:[%s2022 + $0x1c] sm:$0xf]
      %2032 = vst [vmem:[#allocation1] ss:$4 sm:$0xff] %v1982
      %s2034 = scalar_lea.vmem [#allocation1], 1
      %2035 = vst [vmem:[%s2034] ss:$4 sm:$0xff] %v1995
      %s2037 = scalar_lea.vmem [#allocation1], 2
      %2038 = vst [vmem:[%s2037] ss:$4 sm:$0xff] %v2008
      %s2040 = scalar_lea.vmem [#allocation1], 3
      %2041 = vst [vmem:[%s2040] ss:$4 sm:$0xff] %v2021
      %v2042 = vld.sshfl [vmem:[#allocation1] sm:$0xff pattern:$0x73625140]
      %v2051 = vunpack.c.l.b16 %v2023
      %v2052 = vunpack.c.l.b16 %v2024
      %v2053 = vunpack.c.l.b16 %v2025
      %v2054 = vunpack.c.l.b16 %v2026
      %v2055 = vunpack.c.l.b16 %v2027
      %v2056 = vunpack.c.l.b16 %v2028
      %v2057 = vunpack.c.l.b16 %v2029
      %v2058 = vunpack.c.l.b16 %v2030
      %v2059 = vpack.c.b16 %v2052, %v2051
      %v2060 = vpack.c.b16 %v2054, %v2053
      %v2061 = vpack.c.b16 %v2056, %v2055
      %v2062 = vpack.c.b16 %v2058, %v2057
      %v2067 = vsel %vm1278, %v2042, 0
      %2069 = vmatpush.bf16.msra.mxu0 0
      %2070 = vmatpush.bf16.msra.mxu0 0
      %2071 = vmatpush.bf16.msra.mxu0 0
      %2072 = vmatpush.bf16.msra.mxu0 0
      %2073 = vmatpush.bf16.msra.mxu0 %v2062
      %2074 = vmatpush.bf16.msra.mxu0 %v2061
      %2075 = vmatpush.bf16.msra.mxu0 %v2060
      %2076 = vmatpush.bf16.msra.mxu0 %v2059
      %2077 = vmatmul.bf16.gmra.mxu0 %v2067
      %v2078 = vpop.f32.mrf.mxu0
      %v2079 = vadd.f32 0.0, %v2078
      %v2080 = vpop.f32.mrf.mxu0
      %v2081 = vadd.f32 0.0, %v2080
      %2082 = vdwg.mxu0
      %v2083 = vadd.f32 %v1932, %v2079
      %v2084 = vadd.f32 %v1933, %v2081
      %v2085 = vld [vmem:[%s1112] sm:$0x7]
      %v2086 = vld [vmem:[%s1112 + $0x4] sm:$0x7]
      %v2087 = vld [vmem:[%s1112 + $0x8] sm:$0x7]
      %v2088 = vld [vmem:[%s1112 + $0xc] sm:$0x7]
      %v2093 = vrot.slane %v2085, 2
      %v2094 = vrot.slane %v2086, 2
      %v2095 = vrot.slane %v2087, 2
      %v2096 = vrot.slane %v2088, 2
      %v2099 = vsel %vm689, %v2085, %v2093
      %v2100 = vsel %vm693, %v2085, %v2093
      %v2102 = vrot.slane %v2100, 2
      %v2105 = vsel %vm689, %v2086, %v2094
      %v2106 = vsel %vm693, %v2086, %v2094
      %v2108 = vrot.slane %v2106, 2
      %v2111 = vsel %vm689, %v2087, %v2095
      %v2112 = vsel %vm693, %v2087, %v2095
      %v2114 = vrot.slane %v2112, 2
      %v2117 = vsel %vm689, %v2088, %v2096
      %v2118 = vsel %vm693, %v2088, %v2096
      %v2120 = vrot.slane %v2118, 2
      %v2121 = vshrl.u32 %v2099, 16
      %v2123 = vrot.slane %v2121, 6
      %v2124 = vshll.u32 %v2099, 16
      %v2126 = vrot.slane %v2124, 7
      %v2127 = vor.u32 %v2123, %v2126
      %v2128 = vrot.slane %v2127, 2
      %v2130 = vshll.u32 %v2102, 16
      %v2132 = vrot.slane %v2130, 7
      %v2133 = vsel %vm1180, %v2128, %v2132
      %v2134 = vshrl.u32 %v2105, 16
      %v2136 = vrot.slane %v2134, 6
      %v2137 = vshll.u32 %v2105, 16
      %v2139 = vrot.slane %v2137, 7
      %v2140 = vor.u32 %v2136, %v2139
      %v2141 = vrot.slane %v2140, 2
      %v2143 = vshll.u32 %v2108, 16
      %v2145 = vrot.slane %v2143, 7
      %v2146 = vsel %vm1180, %v2141, %v2145
      %v2147 = vshrl.u32 %v2111, 16
      %v2149 = vrot.slane %v2147, 6
      %v2150 = vshll.u32 %v2111, 16
      %v2152 = vrot.slane %v2150, 7
      %v2153 = vor.u32 %v2149, %v2152
      %v2154 = vrot.slane %v2153, 2
      %v2156 = vshll.u32 %v2114, 16
      %v2158 = vrot.slane %v2156, 7
      %v2159 = vsel %vm1180, %v2154, %v2158
      %v2160 = vshrl.u32 %v2117, 16
      %v2162 = vrot.slane %v2160, 6
      %v2163 = vshll.u32 %v2117, 16
      %v2165 = vrot.slane %v2163, 7
      %v2166 = vor.u32 %v2162, %v2165
      %v2167 = vrot.slane %v2166, 2
      %v2169 = vshll.u32 %v2120, 16
      %v2171 = vrot.slane %v2169, 7
      %v2172 = vsel %vm1180, %v2167, %v2171
      %s2173 = scalar_lea.vmem %s3, 256
      %v2174 = vld [vmem:[%s2173] sm:$0xf]
      %v2175 = vld [vmem:[%s2173 + $0x4] sm:$0xf]
      %v2176 = vld [vmem:[%s2173 + $0x8] sm:$0xf]
      %v2177 = vld [vmem:[%s2173 + $0xc] sm:$0xf]
      %v2178 = vld [vmem:[%s2173 + $0x10] sm:$0xf]
      %v2179 = vld [vmem:[%s2173 + $0x14] sm:$0xf]
      %v2180 = vld [vmem:[%s2173 + $0x18] sm:$0xf]
      %v2181 = vld [vmem:[%s2173 + $0x1c] sm:$0xf]
      %2183 = vst [vmem:[#allocation1] ss:$4 sm:$0xff] %v2133
      %s2185 = scalar_lea.vmem [#allocation1], 1
      %2186 = vst [vmem:[%s2185] ss:$4 sm:$0xff] %v2146
      %s2188 = scalar_lea.vmem [#allocation1], 2
      %2189 = vst [vmem:[%s2188] ss:$4 sm:$0xff] %v2159
      %s2191 = scalar_lea.vmem [#allocation1], 3
      %2192 = vst [vmem:[%s2191] ss:$4 sm:$0xff] %v2172
      %v2193 = vld.sshfl [vmem:[#allocation1] sm:$0xff pattern:$0x73625140]
      %v2202 = vunpack.c.l.b16 %v2174
      %v2203 = vunpack.c.l.b16 %v2175
      %v2204 = vunpack.c.l.b16 %v2176
      %v2205 = vunpack.c.l.b16 %v2177
      %v2206 = vunpack.c.l.b16 %v2178
      %v2207 = vunpack.c.l.b16 %v2179
      %v2208 = vunpack.c.l.b16 %v2180
      %v2209 = vunpack.c.l.b16 %v2181
      %v2210 = vpack.c.b16 %v2203, %v2202
      %v2211 = vpack.c.b16 %v2205, %v2204
      %v2212 = vpack.c.b16 %v2207, %v2206
      %v2213 = vpack.c.b16 %v2209, %v2208
      %v2218 = vsel %vm1278, %v2193, 0
      %2220 = vmatpush.bf16.msra.mxu0 0
      %2221 = vmatpush.bf16.msra.mxu0 0
      %2222 = vmatpush.bf16.msra.mxu0 0
      %2223 = vmatpush.bf16.msra.mxu0 0
      %2224 = vmatpush.bf16.msra.mxu0 %v2213
      %2225 = vmatpush.bf16.msra.mxu0 %v2212
      %2226 = vmatpush.bf16.msra.mxu0 %v2211
      %2227 = vmatpush.bf16.msra.mxu0 %v2210
      %2228 = vmatmul.bf16.gmra.mxu0 %v2218
      %v2229 = vpop.f32.mrf.mxu0
      %v2230 = vadd.f32 0.0, %v2229
      %v2231 = vpop.f32.mrf.mxu0
      %v2232 = vadd.f32 0.0, %v2231
      %2233 = vdwg.mxu0
      %v2234 = vadd.f32 %v2083, %v2230
      %v2235 = vadd.f32 %v2084, %v2232
      %v2236 = vld [vmem:[%s4] sm:$0x1]
      %v2238 = vperm.slane %v2236, 0
      %v2240 = vadd.f32 %v2234, %v2238
      %v2241 = vadd.f32 %v2235, %v2238
      %v2242 = vmul.f32 %v2240, 0.5
      %v2243 = vmul.f32 %v2241, 0.5
      %v2244 = vmul.f32 %v2240, %v2240
      %v2245 = vmul.f32 %v2241, %v2241
      %v2246 = vmul.f32 %v2244, %v2240
      %v2247 = vmul.f32 %v2245, %v2241
      %v2248 = vmul.f32 %v2246, 0.044715
      %v2249 = vmul.f32 %v2247, 0.044715
      %v2250 = vadd.f32 %v2240, %v2248
      %v2251 = vadd.f32 %v2241, %v2249
      %v2252 = vmul.f32 %v2250, 0.7978846
      %v2253 = vmul.f32 %v2251, 0.7978846
      %v2254 = vtanh.pop %v2252
      %v2255 = vtanh.pop %v2253
      %v2256 = vadd.f32 %v2254, 1.0
      %v2257 = vadd.f32 %v2255, 1.0
      %v2258 = vmul.f32 %v2242, %v2256
      %v2259 = vmul.f32 %v2243, %v2257
      %v2260 = vpack.c.bf16 %v2258, %v2258
      %v2261 = vpack.c.bf16 %v2259, %v2259
      %v2264 = vrot.slane %v2260, 3
      %v2265 = vrot.slane %v2261, 3
      %vm2266 = vcmask 1040384
      %v2269 = vsel %vm2266, %v2260, %v2264
      %vm2270 = vcmask 1041409
      %v2271 = vsel %vm2270, %v2260, %v2264
      %v2273 = vrot.slane %v2271, 1
      %vm2274 = vcmask 1042434
      %v2275 = vsel %vm2274, %v2260, %v2264
      %v2277 = vrot.slane %v2275, 2
      %vm2278 = vcmask 1043459
      %v2279 = vsel %vm2278, %v2260, %v2264
      %v2281 = vrot.slane %v2279, 3
      %v2284 = vsel %vm2266, %v2261, %v2265
      %v2285 = vsel %vm2270, %v2261, %v2265
      %v2287 = vrot.slane %v2285, 1
      %v2288 = vsel %vm2274, %v2261, %v2265
      %v2290 = vrot.slane %v2288, 2
      %v2291 = vsel %vm2278, %v2261, %v2265
      %v2293 = vrot.slane %v2291, 3
      %2294 = vst [vmem:[#allocation1] ss:$2 sm:$0xff] %v2269
      %v2295 = vld [vmem:[#allocation1] sm:$0xff]
      %s2297 = scalar_lea.vmem [#allocation1], 16
      %2298 = vst [vmem:[%s2297] ss:$2 sm:$0xff] %v2273
      %v2299 = vld [vmem:[#allocation1 + $0x10] sm:$0xff]
      %s2300 = scalar_lea.vmem [#allocation1], 32
      %2301 = vst [vmem:[%s2300] ss:$2 sm:$0xff] %v2284
      %v2302 = vld [vmem:[#allocation1 + $0x20] sm:$0xff]
      %s2304 = scalar_lea.vmem [#allocation1], 48
      %2305 = vst [vmem:[%s2304] ss:$2 sm:$0xff] %v2287
      %v2306 = vld [vmem:[#allocation1 + $0x30] sm:$0xff]
      %2307 = vst [vmem:[#allocation1] ss:$2 sm:$0xff] %v2295
      %v2308 = vld.sshfl [vmem:[#allocation1] sm:$0xff pattern:$0x75643120]
      %s2310 = scalar_lea.vmem [#allocation1], 16
      %2311 = vst [vmem:[%s2310] ss:$2 sm:$0xff] %v2299
      %v2312 = vld.sshfl [vmem:[#allocation1 + $0x10] sm:$0xff pattern:$0x75643120]
      %s2314 = scalar_lea.vmem [#allocation1], 32
      %2315 = vst [vmem:[%s2314] ss:$2 sm:$0xff] %v2302
      %v2316 = vld.sshfl [vmem:[#allocation1 + $0x20] sm:$0xff pattern:$0x75643120]
      %s2318 = scalar_lea.vmem [#allocation1], 48
      %2319 = vst [vmem:[%s2318] ss:$2 sm:$0xff] %v2306
      %v2320 = vld.sshfl [vmem:[#allocation1 + $0x30] sm:$0xff pattern:$0x75643120]
      %v2322 = vunpack.c.l.b16 %v2308
      %v2323 = vunpack.c.l.b16 %v2312
      %v2324 = vunpack.c.l.b16 %v2316
      %v2325 = vunpack.c.l.b16 %v2320
      %v2326 = vrot.slane %v2322, 7
      %v2327 = vrot.slane %v2323, 6
      %v2328 = vsel %vm2274, %v2327, %v2326
      %v2329 = vrot.slane %v2324, 7
      %v2330 = vrot.slane %v2325, 6
      %v2331 = vsel %vm2274, %v2330, %v2329
      %v2332 = vpack.c.b16 %v2328, %v2328
      %v2333 = vpack.c.b16 %v2331, %v2331
      %v2334 = vrot.slane %v2332, 2
      %v2335 = vrot.slane %v2333, 2
      %v2338 = vsel %vm689, %v2332, %v2334
      %v2341 = vsel %vm689, %v2333, %v2335
      %s2344 = scalar_lea.vmem [#allocation3], 2
      %vm2345 = vsmask.f32 1282
      %vm2346 = vmand %vm574, %vm2345
      %v2347 = vld [vmem:[%s2344] sm:$0x3]
      %v2348 = vsel %vm2346, %v2338, %v2347
      %2349 = vst [vmem:[%s2344] sm:$0x3] %v2348
      %v2350 = vld [vmem:[%s2344 + $0x2] sm:$0x3]
      %v2351 = vsel %vm2346, %v2341, %v2350
      %2352 = vst [vmem:[%s2344 + $0x2] sm:$0x3] %v2351
      %2353 = vst [vmem:[#allocation1] ss:$2 sm:$0xff] %v2269
      %v2354 = vld [vmem:[#allocation1] sm:$0xff]
      %s2355 = scalar_lea.vmem [#allocation1], 16
      %2356 = vst [vmem:[%s2355] ss:$2 sm:$0xff] %v2273
      %v2357 = vld [vmem:[#allocation1 + $0x10] sm:$0xff]
      %s2358 = scalar_lea.vmem [#allocation1], 32
      %2359 = vst [vmem:[%s2358] ss:$2 sm:$0xff] %v2284
      %v2360 = vld [vmem:[#allocation1 + $0x20] sm:$0xff]
      %s2361 = scalar_lea.vmem [#allocation1], 48
      %2362 = vst [vmem:[%s2361] ss:$2 sm:$0xff] %v2287
      %v2363 = vld [vmem:[#allocation1 + $0x30] sm:$0xff]
      %2364 = vst [vmem:[#allocation1] ss:$2 sm:$0xff] %v2354
      %v2365 = vld.sshfl [vmem:[#allocation1] sm:$0xff pattern:$0x75643120]
      %s2367 = scalar_lea.vmem [#allocation1], 16
      %2368 = vst [vmem:[%s2367] ss:$2 sm:$0xff] %v2357
      %v2369 = vld.sshfl [vmem:[#allocation1 + $0x10] sm:$0xff pattern:$0x75643120]
      %s2371 = scalar_lea.vmem [#allocation1], 32
      %2372 = vst [vmem:[%s2371] ss:$2 sm:$0xff] %v2360
      %v2373 = vld.sshfl [vmem:[#allocation1 + $0x20] sm:$0xff pattern:$0x75643120]
      %s2375 = scalar_lea.vmem [#allocation1], 48
      %2376 = vst [vmem:[%s2375] ss:$2 sm:$0xff] %v2363
      %v2377 = vld.sshfl [vmem:[#allocation1 + $0x30] sm:$0xff pattern:$0x75643120]
      %v2379 = vunpack.c.l.b16 %v2365
      %v2380 = vunpack.c.l.b16 %v2369
      %v2381 = vunpack.c.l.b16 %v2373
      %v2382 = vunpack.c.l.b16 %v2377
      %v2383 = vrot.slane %v2380, 7
      %v2384 = vsel %vm2274, %v2383, %v2379
      %v2385 = vrot.slane %v2382, 7
      %v2386 = vsel %vm2274, %v2385, %v2381
      %v2387 = vpack.c.b16 %v2384, %v2384
      %v2388 = vpack.c.b16 %v2386, %v2386
      %v2389 = vrot.slane %v2387, 2
      %v2390 = vrot.slane %v2388, 2
      %v2393 = vsel %vm689, %v2387, %v2389
      %v2396 = vsel %vm689, %v2388, %v2390
      %s2399 = scalar_lea.vmem [#allocation3], 8
      %v2400 = vld [vmem:[%s2399] sm:$0x3]
      %v2401 = vsel %vm2346, %v2393, %v2400
      %2402 = vst [vmem:[%s2399] sm:$0x3] %v2401
      %v2403 = vld [vmem:[%s2399 + $0x2] sm:$0x3]
      %v2404 = vsel %vm2346, %v2396, %v2403
      %2405 = vst [vmem:[%s2399 + $0x2] sm:$0x3] %v2404
      %2407 = vst [vmem:[#allocation1] ss:$2 sm:$0xff] %v2277
      %v2408 = vld [vmem:[#allocation1] sm:$0xff]
      %s2410 = scalar_lea.vmem [#allocation1], 16
      %2411 = vst [vmem:[%s2410] ss:$2 sm:$0xff] %v2281
      %v2412 = vld [vmem:[#allocation1 + $0x10] sm:$0xff]
      %s2414 = scalar_lea.vmem [#allocation1], 32
      %2415 = vst [vmem:[%s2414] ss:$2 sm:$0xff] %v2290
      %v2416 = vld [vmem:[#allocation1 + $0x20] sm:$0xff]
      %s2418 = scalar_lea.vmem [#allocation1], 48
      %2419 = vst [vmem:[%s2418] ss:$2 sm:$0xff] %v2293
      %v2420 = vld [vmem:[#allocation1 + $0x30] sm:$0xff]
      %2421 = vst [vmem:[#allocation1] ss:$2 sm:$0xff] %v2408
      %v2422 = vld.sshfl [vmem:[#allocation1] sm:$0xff pattern:$0x75643120]
      %s2424 = scalar_lea.vmem [#allocation1], 16
      %2425 = vst [vmem:[%s2424] ss:$2 sm:$0xff] %v2412
      %v2426 = vld.sshfl [vmem:[#allocation1 + $0x10] sm:$0xff pattern:$0x75643120]
      %s2428 = scalar_lea.vmem [#allocation1], 32
      %2429 = vst [vmem:[%s2428] ss:$2 sm:$0xff] %v2416
      %v2430 = vld.sshfl [vmem:[#allocation1 + $0x20] sm:$0xff pattern:$0x75643120]
      %s2432 = scalar_lea.vmem [#allocation1], 48
      %2433 = vst [vmem:[%s2432] ss:$2 sm:$0xff] %v2420
      %v2434 = vld.sshfl [vmem:[#allocation1 + $0x30] sm:$0xff pattern:$0x75643120]
      %v2436 = vunpack.c.l.b16 %v2422
      %v2437 = vunpack.c.l.b16 %v2426
      %v2438 = vunpack.c.l.b16 %v2430
      %v2439 = vunpack.c.l.b16 %v2434
      %v2440 = vrot.slane %v2436, 7
      %v2441 = vrot.slane %v2437, 6
      %v2442 = vsel %vm2274, %v2441, %v2440
      %v2443 = vrot.slane %v2438, 7
      %v2444 = vrot.slane %v2439, 6
      %v2445 = vsel %vm2274, %v2444, %v2443
      %v2446 = vpack.c.b16 %v2442, %v2442
      %v2447 = vpack.c.b16 %v2445, %v2445
      %v2448 = vrot.slane %v2446, 2
      %v2449 = vrot.slane %v2447, 2
      %v2452 = vsel %vm689, %v2446, %v2448
      %v2455 = vsel %vm689, %v2447, %v2449
      %s2458 = scalar_lea.vmem [#allocation3], 14
      %v2459 = vld [vmem:[%s2458] sm:$0x3]
      %v2460 = vsel %vm2346, %v2452, %v2459
      %2461 = vst [vmem:[%s2458] sm:$0x3] %v2460
      %v2462 = vld [vmem:[%s2458 + $0x2] sm:$0x3]
      %v2463 = vsel %vm2346, %v2455, %v2462
      %2464 = vst [vmem:[%s2458 + $0x2] sm:$0x3] %v2463
      %2465 = vst [vmem:[#allocation1] ss:$2 sm:$0xff] %v2277
      %v2466 = vld [vmem:[#allocation1] sm:$0xff]
      %s2467 = scalar_lea.vmem [#allocation1], 16
      %2468 = vst [vmem:[%s2467] ss:$2 sm:$0xff] %v2281
      %v2469 = vld [vmem:[#allocation1 + $0x10] sm:$0xff]
      %s2470 = scalar_lea.vmem [#allocation1], 32
      %2471 = vst [vmem:[%s2470] ss:$2 sm:$0xff] %v2290
      %v2472 = vld [vmem:[#allocation1 + $0x20] sm:$0xff]
      %s2473 = scalar_lea.vmem [#allocation1], 48
      %2474 = vst [vmem:[%s2473] ss:$2 sm:$0xff] %v2293
      %v2475 = vld [vmem:[#allocation1 + $0x30] sm:$0xff]
      %2476 = vst [vmem:[#allocation1] ss:$2 sm:$0xff] %v2466
      %v2477 = vld.sshfl [vmem:[#allocation1] sm:$0xff pattern:$0x75643120]
      %s2479 = scalar_lea.vmem [#allocation1], 16
      %2480 = vst [vmem:[%s2479] ss:$2 sm:$0xff] %v2469
      %v2481 = vld.sshfl [vmem:[#allocation1 + $0x10] sm:$0xff pattern:$0x75643120]
      %s2483 = scalar_lea.vmem [#allocation1], 32
      %2484 = vst [vmem:[%s2483] ss:$2 sm:$0xff] %v2472
      %v2485 = vld.sshfl [vmem:[#allocation1 + $0x20] sm:$0xff pattern:$0x75643120]
      %s2487 = scalar_lea.vmem [#allocation1], 48
      %2488 = vst [vmem:[%s2487] ss:$2 sm:$0xff] %v2475
      %v2489 = vld.sshfl [vmem:[#allocation1 + $0x30] sm:$0xff pattern:$0x75643120]
      %v2491 = vunpack.c.l.b16 %v2477
      %v2492 = vunpack.c.l.b16 %v2481
      %v2493 = vunpack.c.l.b16 %v2485
      %v2494 = vunpack.c.l.b16 %v2489
      %v2495 = vrot.slane %v2492, 7
      %v2496 = vsel %vm2274, %v2495, %v2491
      %v2497 = vrot.slane %v2494, 7
      %v2498 = vsel %vm2274, %v2497, %v2493
      %v2499 = vpack.c.b16 %v2496, %v2496
      %v2500 = vpack.c.b16 %v2498, %v2498
      %v2501 = vrot.slane %v2499, 2
      %v2502 = vrot.slane %v2500, 2
      %v2505 = vsel %vm689, %v2499, %v2501
      %v2508 = vsel %vm689, %v2500, %v2502
      %s2511 = scalar_lea.vmem [#allocation3], 20
      %v2512 = vld [vmem:[%s2511] sm:$0x3]
      %v2513 = vsel %vm2346, %v2505, %v2512
      %2514 = vst [vmem:[%s2511] sm:$0x3] %v2513
      %v2515 = vld [vmem:[%s2511 + $0x2] sm:$0x3]
      %v2516 = vsel %vm2346, %v2508, %v2515
      %2517 = vst [vmem:[%s2511 + $0x2] sm:$0x3] %v2516
      %s2518 = scalar_lea.vmem [#allocation3], 18
      %v2519 = vld [vmem:[%s2518] sm:$0x1]
      %v2520 = vld [vmem:[%s2518 + $0x2] sm:$0x1]
      %v2521 = vld [vmem:[%s5] sm:$0xff]
      %v2522 = vld [vmem:[%s5 + $0x8] sm:$0xff]
      %v2523 = vld [vmem:[%s5 + $0x10] sm:$0xff]
      %v2524 = vld [vmem:[%s5 + $0x18] sm:$0xff]
      %v2525 = vld [vmem:[%s5 + $0x20] sm:$0xff]
      %v2526 = vld [vmem:[%s5 + $0x28] sm:$0xff]
      %v2527 = vld [vmem:[%s5 + $0x30] sm:$0xff]
      %v2528 = vld [vmem:[%s5 + $0x38] sm:$0xff]
      %v2529 = vld [vmem:[%s5 + $0x40] sm:$0xff]
      %v2530 = vld [vmem:[%s5 + $0x48] sm:$0xff]
      %v2531 = vld [vmem:[%s5 + $0x50] sm:$0xff]
      %v2532 = vld [vmem:[%s5 + $0x58] sm:$0xff]
      %v2533 = vld [vmem:[%s5 + $0x60] sm:$0xff]
      %v2534 = vld [vmem:[%s5 + $0x68] sm:$0xff]
      %v2535 = vld [vmem:[%s5 + $0x70] sm:$0xff]
      %v2536 = vld [vmem:[%s5 + $0x78] sm:$0xff]
      %s2537 = scalar_lea.vmem [#allocation3], 12
      %v2538 = vld [vmem:[%s2537] sm:$0x3]
      %v2539 = vld [vmem:[%s2537 + $0x2] sm:$0x3]
      %v2542 = vrot.slane %v2538, 1
      %v2543 = vrot.slane %v2538, 2
      %v2544 = vrot.slane %v2538, 3
      %v2545 = vrot.slane %v2539, 1
      %v2546 = vrot.slane %v2539, 2
      %v2547 = vrot.slane %v2539, 3
      %v2550 = vsel %vm2266, %v2538, %v2542
      %v2553 = vsel %vm2274, %v2543, %v2544
      %v2554 = vsel %vm689, %v2550, %v2553
      %v2555 = vsel %vm2270, %v2538, %v2542
      %v2556 = vsel %vm2278, %v2543, %v2544
      %vm2557 = vcmask 1042433
      %v2558 = vsel %vm2557, %v2555, %v2556
      %v2560 = vrot.slane %v2558, 1
      %v2563 = vsel %vm2266, %v2539, %v2545
      %v2566 = vsel %vm2274, %v2546, %v2547
      %v2567 = vsel %vm689, %v2563, %v2566
      %v2568 = vsel %vm2270, %v2539, %v2545
      %v2569 = vsel %vm2278, %v2546, %v2547
      %v2570 = vsel %vm2557, %v2568, %v2569
      %v2572 = vrot.slane %v2570, 1
      %vm2573 = vsmask.f32 1284
      %vm2574 = vmor %vm512, %vm2573
      %vm2575 = vsmask.f32 2312
      %vm2576 = vmor %vm2574, %vm2575
      %vm2577 = vsmask.f32 3340
      %vm2578 = vmor %vm2576, %vm2577
      %vm2579 = vsmask.f32 4368
      %vm2580 = vmor %vm2578, %vm2579
      %vm2581 = vsmask.f32 5396
      %vm2582 = vmor %vm2580, %vm2581
      %vm2583 = vsmask.f32 6424
      %vm2584 = vmor %vm2582, %vm2583
      %vm2585 = vsmask.f32 7452
      %vm2586 = vmor %vm2584, %vm2585
      %v2587 = vshrl.u32 %v2554, 16
      %v2589 = vrot.slane %v2587, 7
      %v2590 = vrot.slane %v2589, 1
      %v2592 = vshll.u32 %v2560, 16
      %v2594 = vsel %vm2586, %v2590, %v2592
      %v2595 = vshrl.u32 %v2567, 16
      %v2597 = vrot.slane %v2595, 7
      %v2598 = vrot.slane %v2597, 1
      %v2600 = vshll.u32 %v2572, 16
      %v2602 = vsel %vm2586, %v2598, %v2600
      %s2603 = scalar_lea.vmem %s5, 128
      %v2604 = vld [vmem:[%s2603] sm:$0xff]
      %v2605 = vld [vmem:[%s2603 + $0x8] sm:$0xff]
      %v2606 = vld [vmem:[%s2603 + $0x10] sm:$0xff]
      %v2607 = vld [vmem:[%s2603 + $0x18] sm:$0xff]
      %v2608 = vld [vmem:[%s2603 + $0x20] sm:$0xff]
      %v2609 = vld [vmem:[%s2603 + $0x28] sm:$0xff]
      %v2610 = vld [vmem:[%s2603 + $0x30] sm:$0xff]
      %v2611 = vld [vmem:[%s2603 + $0x38] sm:$0xff]
      %v2612 = vld [vmem:[%s2603 + $0x40] sm:$0xff]
      %v2613 = vld [vmem:[%s2603 + $0x48] sm:$0xff]
      %v2614 = vld [vmem:[%s2603 + $0x50] sm:$0xff]
      %v2615 = vld [vmem:[%s2603 + $0x58] sm:$0xff]
      %v2616 = vld [vmem:[%s2603 + $0x60] sm:$0xff]
      %v2617 = vld [vmem:[%s2603 + $0x68] sm:$0xff]
      %v2618 = vld [vmem:[%s2603 + $0x70] sm:$0xff]
      %v2619 = vld [vmem:[%s2603 + $0x78] sm:$0xff]
      %2621 = vst [vmem:[#allocation1] ss:$9 sm:$0xff] %v2594
      %s2623 = scalar_lea.vmem [#allocation1], 1
      %2624 = vst [vmem:[%s2623] ss:$9 sm:$0xff] %v2602
      %v2625 = vld [vmem:[#allocation1] sm:$0xff]
      %v2643 = vunpack.c.l.b16 %v2604
      %v2644 = vunpack.c.h.b16 %v2604
      %v2645 = vunpack.c.l.b16 %v2605
      %v2646 = vunpack.c.h.b16 %v2605
      %v2647 = vunpack.c.l.b16 %v2606
      %v2648 = vunpack.c.h.b16 %v2606
      %v2649 = vunpack.c.l.b16 %v2607
      %v2650 = vunpack.c.h.b16 %v2607
      %v2651 = vunpack.c.l.b16 %v2608
      %v2652 = vunpack.c.h.b16 %v2608
      %v2653 = vunpack.c.l.b16 %v2609
      %v2654 = vunpack.c.h.b16 %v2609
      %v2655 = vunpack.c.l.b16 %v2610
      %v2656 = vunpack.c.h.b16 %v2610
      %v2657 = vunpack.c.l.b16 %v2611
      %v2658 = vunpack.c.h.b16 %v2611
      %v2659 = vunpack.c.l.b16 %v2612
      %v2660 = vunpack.c.h.b16 %v2612
      %v2661 = vunpack.c.l.b16 %v2613
      %v2662 = vunpack.c.h.b16 %v2613
      %v2663 = vunpack.c.l.b16 %v2614
      %v2664 = vunpack.c.h.b16 %v2614
      %v2665 = vunpack.c.l.b16 %v2615
      %v2666 = vunpack.c.h.b16 %v2615
      %v2667 = vunpack.c.l.b16 %v2616
      %v2668 = vunpack.c.h.b16 %v2616
      %v2669 = vunpack.c.l.b16 %v2617
      %v2670 = vunpack.c.h.b16 %v2617
      %v2671 = vunpack.c.l.b16 %v2618
      %v2672 = vunpack.c.h.b16 %v2618
      %v2673 = vunpack.c.l.b16 %v2619
      %v2674 = vunpack.c.h.b16 %v2619
      %v2675 = vpack.c.b16 %v2645, %v2643
      %v2676 = vpack.c.b16 %v2646, %v2644
      %v2677 = vpack.c.b16 %v2649, %v2647
      %v2678 = vpack.c.b16 %v2650, %v2648
      %v2679 = vpack.c.b16 %v2653, %v2651
      %v2680 = vpack.c.b16 %v2654, %v2652
      %v2681 = vpack.c.b16 %v2657, %v2655
      %v2682 = vpack.c.b16 %v2658, %v2656
      %v2683 = vpack.c.b16 %v2661, %v2659
      %v2684 = vpack.c.b16 %v2662, %v2660
      %v2685 = vpack.c.b16 %v2665, %v2663
      %v2686 = vpack.c.b16 %v2666, %v2664
      %v2687 = vpack.c.b16 %v2669, %v2667
      %v2688 = vpack.c.b16 %v2670, %v2668
      %v2689 = vpack.c.b16 %v2673, %v2671
      %v2690 = vpack.c.b16 %v2674, %v2672
      %2707 = vmatpush.bf16.msra.mxu0 %v2689
      %2708 = vmatpush.bf16.msra.mxu0 %v2687
      %2709 = vmatpush.bf16.msra.mxu0 %v2685
      %2710 = vmatpush.bf16.msra.mxu0 %v2683
      %2711 = vmatpush.bf16.msra.mxu0 %v2681
      %2712 = vmatpush.bf16.msra.mxu0 %v2679
      %2713 = vmatpush.bf16.msra.mxu0 %v2677
      %2714 = vmatpush.bf16.msra.mxu0 %v2675
      %2715 = vmatmul.bf16.gmra.mxu0 %v2625
      %v2716 = vpop.f32.mrf.mxu0
      %v2717 = vadd.f32 0.0, %v2716
      %v2718 = vpop.f32.mrf.mxu0
      %2719 = vdwg.mxu0
      %2720 = vmatpush.bf16.msra.mxu0 %v2690
      %2721 = vmatpush.bf16.msra.mxu0 %v2688
      %2722 = vmatpush.bf16.msra.mxu0 %v2686
      %2723 = vmatpush.bf16.msra.mxu0 %v2684
      %2724 = vmatpush.bf16.msra.mxu0 %v2682
      %2725 = vmatpush.bf16.msra.mxu0 %v2680
      %2726 = vmatpush.bf16.msra.mxu0 %v2678
      %2727 = vmatpush.bf16.msra.mxu0 %v2676
      %2728 = vmatmul.bf16.gmra.mxu0 %v2625
      %v2729 = vpop.f32.mrf.mxu0
      %v2730 = vadd.f32 0.0, %v2729
      %v2731 = vpop.f32.mrf.mxu0
      %2732 = vdwg.mxu0
      %2734 = vst [vmem:[#allocation1] ss:$9 sm:$0xff] %v2519
      %s2736 = scalar_lea.vmem [#allocation1], 1
      %2737 = vst [vmem:[%s2736] ss:$9 sm:$0xff] %v2520
      %v2738 = vld [vmem:[#allocation1] sm:$0xff]
      %v2756 = vunpack.c.l.b16 %v2521
      %v2757 = vunpack.c.h.b16 %v2521
      %v2758 = vunpack.c.l.b16 %v2522
      %v2759 = vunpack.c.h.b16 %v2522
      %v2760 = vunpack.c.l.b16 %v2523
      %v2761 = vunpack.c.h.b16 %v2523
      %v2762 = vunpack.c.l.b16 %v2524
      %v2763 = vunpack.c.h.b16 %v2524
      %v2764 = vunpack.c.l.b16 %v2525
      %v2765 = vunpack.c.h.b16 %v2525
      %v2766 = vunpack.c.l.b16 %v2526
      %v2767 = vunpack.c.h.b16 %v2526
      %v2768 = vunpack.c.l.b16 %v2527
      %v2769 = vunpack.c.h.b16 %v2527
      %v2770 = vunpack.c.l.b16 %v2528
      %v2771 = vunpack.c.h.b16 %v2528
      %v2772 = vunpack.c.l.b16 %v2529
      %v2773 = vunpack.c.h.b16 %v2529
      %v2774 = vunpack.c.l.b16 %v2530
      %v2775 = vunpack.c.h.b16 %v2530
      %v2776 = vunpack.c.l.b16 %v2531
      %v2777 = vunpack.c.h.b16 %v2531
      %v2778 = vunpack.c.l.b16 %v2532
      %v2779 = vunpack.c.h.b16 %v2532
      %v2780 = vunpack.c.l.b16 %v2533
      %v2781 = vunpack.c.h.b16 %v2533
      %v2782 = vunpack.c.l.b16 %v2534
      %v2783 = vunpack.c.h.b16 %v2534
      %v2784 = vunpack.c.l.b16 %v2535
      %v2785 = vunpack.c.h.b16 %v2535
      %v2786 = vunpack.c.l.b16 %v2536
      %v2787 = vunpack.c.h.b16 %v2536
      %v2788 = vpack.c.b16 %v2758, %v2756
      %v2789 = vpack.c.b16 %v2759, %v2757
      %v2790 = vpack.c.b16 %v2762, %v2760
      %v2791 = vpack.c.b16 %v2763, %v2761
      %v2792 = vpack.c.b16 %v2766, %v2764
      %v2793 = vpack.c.b16 %v2767, %v2765
      %v2794 = vpack.c.b16 %v2770, %v2768
      %v2795 = vpack.c.b16 %v2771, %v2769
      %v2796 = vpack.c.b16 %v2774, %v2772
      %v2797 = vpack.c.b16 %v2775, %v2773
      %v2798 = vpack.c.b16 %v2778, %v2776
      %v2799 = vpack.c.b16 %v2779, %v2777
      %v2800 = vpack.c.b16 %v2782, %v2780
      %v2801 = vpack.c.b16 %v2783, %v2781
      %v2802 = vpack.c.b16 %v2786, %v2784
      %v2803 = vpack.c.b16 %v2787, %v2785
      %2820 = vmatpush.bf16.msra.mxu0 %v2802
      %2821 = vmatpush.bf16.msra.mxu0 %v2800
      %2822 = vmatpush.bf16.msra.mxu0 %v2798
      %2823 = vmatpush.bf16.msra.mxu0 %v2796
      %2824 = vmatpush.bf16.msra.mxu0 %v2794
      %2825 = vmatpush.bf16.msra.mxu0 %v2792
      %2826 = vmatpush.bf16.msra.mxu0 %v2790
      %2827 = vmatpush.bf16.msra.mxu0 %v2788
      %2828 = vmatmul.bf16.gmra.mxu0 %v2738
      %v2829 = vpop.f32.mrf.mxu0
      %v2830 = vadd.f32 %v2717, %v2829
      %v2831 = vpop.f32.mrf.mxu0
      %2832 = vdwg.mxu0
      %2833 = vmatpush.bf16.msra.mxu0 %v2803
      %2834 = vmatpush.bf16.msra.mxu0 %v2801
      %2835 = vmatpush.bf16.msra.mxu0 %v2799
      %2836 = vmatpush.bf16.msra.mxu0 %v2797
      %2837 = vmatpush.bf16.msra.mxu0 %v2795
      %2838 = vmatpush.bf16.msra.mxu0 %v2793
      %2839 = vmatpush.bf16.msra.mxu0 %v2791
      %2840 = vmatpush.bf16.msra.mxu0 %v2789
      %2841 = vmatmul.bf16.gmra.mxu0 %v2738
      %v2842 = vpop.f32.mrf.mxu0
      %v2843 = vadd.f32 %v2730, %v2842
      %v2844 = vpop.f32.mrf.mxu0
      %2845 = vdwg.mxu0
      %v2846 = vld [vmem:[%s2518] sm:$0x3]
      %v2847 = vld [vmem:[%s2518 + $0x2] sm:$0x3]
      %v2850 = vrot.slane %v2846, 1
      %v2851 = vrot.slane %v2846, 2
      %v2852 = vrot.slane %v2846, 3
      %v2853 = vrot.slane %v2847, 1
      %v2854 = vrot.slane %v2847, 2
      %v2855 = vrot.slane %v2847, 3
      %v2858 = vsel %vm2266, %v2846, %v2850
      %v2861 = vsel %vm2274, %v2851, %v2852
      %v2862 = vsel %vm689, %v2858, %v2861
      %v2863 = vsel %vm2270, %v2846, %v2850
      %v2864 = vsel %vm2278, %v2851, %v2852
      %v2865 = vsel %vm2557, %v2863, %v2864
      %v2867 = vrot.slane %v2865, 1
      %v2870 = vsel %vm2266, %v2847, %v2853
      %v2873 = vsel %vm2274, %v2854, %v2855
      %v2874 = vsel %vm689, %v2870, %v2873
      %v2875 = vsel %vm2270, %v2847, %v2853
      %v2876 = vsel %vm2278, %v2854, %v2855
      %v2877 = vsel %vm2557, %v2875, %v2876
      %v2879 = vrot.slane %v2877, 1
      %v2880 = vshrl.u32 %v2862, 16
      %v2882 = vrot.slane %v2880, 7
      %v2883 = vrot.slane %v2882, 1
      %v2885 = vshll.u32 %v2867, 16
      %v2887 = vsel %vm2586, %v2883, %v2885
      %v2888 = vshrl.u32 %v2874, 16
      %v2890 = vrot.slane %v2888, 7
      %v2891 = vrot.slane %v2890, 1
      %v2893 = vshll.u32 %v2879, 16
      %v2895 = vsel %vm2586, %v2891, %v2893
      %s2896 = scalar_lea.vmem %s5, 256
      %v2897 = vld [vmem:[%s2896] sm:$0xff]
      %v2898 = vld [vmem:[%s2896 + $0x8] sm:$0xff]
      %v2899 = vld [vmem:[%s2896 + $0x10] sm:$0xff]
      %v2900 = vld [vmem:[%s2896 + $0x18] sm:$0xff]
      %v2901 = vld [vmem:[%s2896 + $0x20] sm:$0xff]
      %v2902 = vld [vmem:[%s2896 + $0x28] sm:$0xff]
      %v2903 = vld [vmem:[%s2896 + $0x30] sm:$0xff]
      %v2904 = vld [vmem:[%s2896 + $0x38] sm:$0xff]
      %v2905 = vld [vmem:[%s2896 + $0x40] sm:$0xff]
      %v2906 = vld [vmem:[%s2896 + $0x48] sm:$0xff]
      %v2907 = vld [vmem:[%s2896 + $0x50] sm:$0xff]
      %v2908 = vld [vmem:[%s2896 + $0x58] sm:$0xff]
      %v2909 = vld [vmem:[%s2896 + $0x60] sm:$0xff]
      %v2910 = vld [vmem:[%s2896 + $0x68] sm:$0xff]
      %v2911 = vld [vmem:[%s2896 + $0x70] sm:$0xff]
      %v2912 = vld [vmem:[%s2896 + $0x78] sm:$0xff]
      %2914 = vst [vmem:[#allocation1] ss:$9 sm:$0xff] %v2887
      %s2916 = scalar_lea.vmem [#allocation1], 1
      %2917 = vst [vmem:[%s2916] ss:$9 sm:$0xff] %v2895
      %v2918 = vld [vmem:[#allocation1] sm:$0xff]
      %v2936 = vunpack.c.l.b16 %v2897
      %v2937 = vunpack.c.h.b16 %v2897
      %v2938 = vunpack.c.l.b16 %v2898
      %v2939 = vunpack.c.h.b16 %v2898
      %v2940 = vunpack.c.l.b16 %v2899
      %v2941 = vunpack.c.h.b16 %v2899
      %v2942 = vunpack.c.l.b16 %v2900
      %v2943 = vunpack.c.h.b16 %v2900
      %v2944 = vunpack.c.l.b16 %v2901
      %v2945 = vunpack.c.h.b16 %v2901
      %v2946 = vunpack.c.l.b16 %v2902
      %v2947 = vunpack.c.h.b16 %v2902
      %v2948 = vunpack.c.l.b16 %v2903
      %v2949 = vunpack.c.h.b16 %v2903
      %v2950 = vunpack.c.l.b16 %v2904
      %v2951 = vunpack.c.h.b16 %v2904
      %v2952 = vunpack.c.l.b16 %v2905
      %v2953 = vunpack.c.h.b16 %v2905
      %v2954 = vunpack.c.l.b16 %v2906
      %v2955 = vunpack.c.h.b16 %v2906
      %v2956 = vunpack.c.l.b16 %v2907
      %v2957 = vunpack.c.h.b16 %v2907
      %v2958 = vunpack.c.l.b16 %v2908
      %v2959 = vunpack.c.h.b16 %v2908
      %v2960 = vunpack.c.l.b16 %v2909
      %v2961 = vunpack.c.h.b16 %v2909
      %v2962 = vunpack.c.l.b16 %v2910
      %v2963 = vunpack.c.h.b16 %v2910
      %v2964 = vunpack.c.l.b16 %v2911
      %v2965 = vunpack.c.h.b16 %v2911
      %v2966 = vunpack.c.l.b16 %v2912
      %v2967 = vunpack.c.h.b16 %v2912
      %v2968 = vpack.c.b16 %v2938, %v2936
      %v2969 = vpack.c.b16 %v2939, %v2937
      %v2970 = vpack.c.b16 %v2942, %v2940
      %v2971 = vpack.c.b16 %v2943, %v2941
      %v2972 = vpack.c.b16 %v2946, %v2944
      %v2973 = vpack.c.b16 %v2947, %v2945
      %v2974 = vpack.c.b16 %v2950, %v2948
      %v2975 = vpack.c.b16 %v2951, %v2949
      %v2976 = vpack.c.b16 %v2954, %v2952
      %v2977 = vpack.c.b16 %v2955, %v2953
      %v2978 = vpack.c.b16 %v2958, %v2956
      %v2979 = vpack.c.b16 %v2959, %v2957
      %v2980 = vpack.c.b16 %v2962, %v2960
      %v2981 = vpack.c.b16 %v2963, %v2961
      %v2982 = vpack.c.b16 %v2966, %v2964
      %v2983 = vpack.c.b16 %v2967, %v2965
      %3000 = vmatpush.bf16.msra.mxu0 %v2982
      %3001 = vmatpush.bf16.msra.mxu0 %v2980
      %3002 = vmatpush.bf16.msra.mxu0 %v2978
      %3003 = vmatpush.bf16.msra.mxu0 %v2976
      %3004 = vmatpush.bf16.msra.mxu0 %v2974
      %3005 = vmatpush.bf16.msra.mxu0 %v2972
      %3006 = vmatpush.bf16.msra.mxu0 %v2970
      %3007 = vmatpush.bf16.msra.mxu0 %v2968
      %3008 = vmatmul.bf16.gmra.mxu0 %v2918
      %v3009 = vpop.f32.mrf.mxu0
      %v3010 = vadd.f32 0.0, %v3009
      %v3011 = vpop.f32.mrf.mxu0
      %3012 = vdwg.mxu0
      %3013 = vmatpush.bf16.msra.mxu0 %v2983
      %3014 = vmatpush.bf16.msra.mxu0 %v2981
      %3015 = vmatpush.bf16.msra.mxu0 %v2979
      %3016 = vmatpush.bf16.msra.mxu0 %v2977
      %3017 = vmatpush.bf16.msra.mxu0 %v2975
      %3018 = vmatpush.bf16.msra.mxu0 %v2973
      %3019 = vmatpush.bf16.msra.mxu0 %v2971
      %3020 = vmatpush.bf16.msra.mxu0 %v2969
      %3021 = vmatmul.bf16.gmra.mxu0 %v2918
      %v3022 = vpop.f32.mrf.mxu0
      %v3023 = vadd.f32 0.0, %v3022
      %v3024 = vpop.f32.mrf.mxu0
      %3025 = vdwg.mxu0
      %v3026 = vadd.f32 %v2830, %v3010
      %v3027 = vadd.f32 %v2843, %v3023
      %v3028 = vld [vmem:[%s2399] sm:$0x1]
      %v3029 = vld [vmem:[%s2399 + $0x2] sm:$0x1]
      %s3030 = scalar_lea.vmem %s5, 384
      %v3031 = vld [vmem:[%s3030] sm:$0xff]
      %v3032 = vld [vmem:[%s3030 + $0x8] sm:$0xff]
      %v3033 = vld [vmem:[%s3030 + $0x10] sm:$0xff]
      %v3034 = vld [vmem:[%s3030 + $0x18] sm:$0xff]
      %v3035 = vld [vmem:[%s3030 + $0x20] sm:$0xff]
      %v3036 = vld [vmem:[%s3030 + $0x28] sm:$0xff]
      %v3037 = vld [vmem:[%s3030 + $0x30] sm:$0xff]
      %v3038 = vld [vmem:[%s3030 + $0x38] sm:$0xff]
      %v3039 = vld [vmem:[%s3030 + $0x40] sm:$0xff]
      %v3040 = vld [vmem:[%s3030 + $0x48] sm:$0xff]
      %v3041 = vld [vmem:[%s3030 + $0x50] sm:$0xff]
      %v3042 = vld [vmem:[%s3030 + $0x58] sm:$0xff]
      %v3043 = vld [vmem:[%s3030 + $0x60] sm:$0xff]
      %v3044 = vld [vmem:[%s3030 + $0x68] sm:$0xff]
      %v3045 = vld [vmem:[%s3030 + $0x70] sm:$0xff]
      %v3046 = vld [vmem:[%s3030 + $0x78] sm:$0xff]
      %3048 = vst [vmem:[#allocation1] ss:$9 sm:$0xff] %v3028
      %s3050 = scalar_lea.vmem [#allocation1], 1
      %3051 = vst [vmem:[%s3050] ss:$9 sm:$0xff] %v3029
      %v3052 = vld [vmem:[#allocation1] sm:$0xff]
      %v3070 = vunpack.c.l.b16 %v3031
      %v3071 = vunpack.c.h.b16 %v3031
      %v3072 = vunpack.c.l.b16 %v3032
      %v3073 = vunpack.c.h.b16 %v3032
      %v3074 = vunpack.c.l.b16 %v3033
      %v3075 = vunpack.c.h.b16 %v3033
      %v3076 = vunpack.c.l.b16 %v3034
      %v3077 = vunpack.c.h.b16 %v3034
      %v3078 = vunpack.c.l.b16 %v3035
      %v3079 = vunpack.c.h.b16 %v3035
      %v3080 = vunpack.c.l.b16 %v3036
      %v3081 = vunpack.c.h.b16 %v3036
      %v3082 = vunpack.c.l.b16 %v3037
      %v3083 = vunpack.c.h.b16 %v3037
      %v3084 = vunpack.c.l.b16 %v3038
      %v3085 = vunpack.c.h.b16 %v3038
      %v3086 = vunpack.c.l.b16 %v3039
      %v3087 = vunpack.c.h.b16 %v3039
      %v3088 = vunpack.c.l.b16 %v3040
      %v3089 = vunpack.c.h.b16 %v3040
      %v3090 = vunpack.c.l.b16 %v3041
      %v3091 = vunpack.c.h.b16 %v3041
      %v3092 = vunpack.c.l.b16 %v3042
      %v3093 = vunpack.c.h.b16 %v3042
      %v3094 = vunpack.c.l.b16 %v3043
      %v3095 = vunpack.c.h.b16 %v3043
      %v3096 = vunpack.c.l.b16 %v3044
      %v3097 = vunpack.c.h.b16 %v3044
      %v3098 = vunpack.c.l.b16 %v3045
      %v3099 = vunpack.c.h.b16 %v3045
      %v3100 = vunpack.c.l.b16 %v3046
      %v3101 = vunpack.c.h.b16 %v3046
      %v3102 = vpack.c.b16 %v3072, %v3070
      %v3103 = vpack.c.b16 %v3073, %v3071
      %v3104 = vpack.c.b16 %v3076, %v3074
      %v3105 = vpack.c.b16 %v3077, %v3075
      %v3106 = vpack.c.b16 %v3080, %v3078
      %v3107 = vpack.c.b16 %v3081, %v3079
      %v3108 = vpack.c.b16 %v3084, %v3082
      %v3109 = vpack.c.b16 %v3085, %v3083
      %v3110 = vpack.c.b16 %v3088, %v3086
      %v3111 = vpack.c.b16 %v3089, %v3087
      %v3112 = vpack.c.b16 %v3092, %v3090
      %v3113 = vpack.c.b16 %v3093, %v3091
      %v3114 = vpack.c.b16 %v3096, %v3094
      %v3115 = vpack.c.b16 %v3097, %v3095
      %v3116 = vpack.c.b16 %v3100, %v3098
      %v3117 = vpack.c.b16 %v3101, %v3099
      %3134 = vmatpush.bf16.msra.mxu0 %v3116
      %3135 = vmatpush.bf16.msra.mxu0 %v3114
      %3136 = vmatpush.bf16.msra.mxu0 %v3112
      %3137 = vmatpush.bf16.msra.mxu0 %v3110
      %3138 = vmatpush.bf16.msra.mxu0 %v3108
      %3139 = vmatpush.bf16.msra.mxu0 %v3106
      %3140 = vmatpush.bf16.msra.mxu0 %v3104
      %3141 = vmatpush.bf16.msra.mxu0 %v3102
      %3142 = vmatmul.bf16.gmra.mxu0 %v3052
      %v3143 = vpop.f32.mrf.mxu0
      %v3144 = vadd.f32 0.0, %v3143
      %v3145 = vpop.f32.mrf.mxu0
      %3146 = vdwg.mxu0
      %3147 = vmatpush.bf16.msra.mxu0 %v3117
      %3148 = vmatpush.bf16.msra.mxu0 %v3115
      %3149 = vmatpush.bf16.msra.mxu0 %v3113
      %3150 = vmatpush.bf16.msra.mxu0 %v3111
      %3151 = vmatpush.bf16.msra.mxu0 %v3109
      %3152 = vmatpush.bf16.msra.mxu0 %v3107
      %3153 = vmatpush.bf16.msra.mxu0 %v3105
      %3154 = vmatpush.bf16.msra.mxu0 %v3103
      %3155 = vmatmul.bf16.gmra.mxu0 %v3052
      %v3156 = vpop.f32.mrf.mxu0
      %v3157 = vadd.f32 0.0, %v3156
      %v3158 = vpop.f32.mrf.mxu0
      %3159 = vdwg.mxu0
      %v3160 = vadd.f32 %v3026, %v3144
      %v3161 = vadd.f32 %v3027, %v3157
      %v3162 = vld [vmem:[%s2344] sm:$0x3]
      %v3163 = vld [vmem:[%s2344 + $0x2] sm:$0x3]
      %v3166 = vrot.slane %v3162, 1
      %v3167 = vrot.slane %v3162, 2
      %v3168 = vrot.slane %v3162, 3
      %v3169 = vrot.slane %v3163, 1
      %v3170 = vrot.slane %v3163, 2
      %v3171 = vrot.slane %v3163, 3
      %v3174 = vsel %vm2266, %v3162, %v3166
      %v3177 = vsel %vm2274, %v3167, %v3168
      %v3178 = vsel %vm689, %v3174, %v3177
      %v3179 = vsel %vm2270, %v3162, %v3166
      %v3180 = vsel %vm2278, %v3167, %v3168
      %v3181 = vsel %vm2557, %v3179, %v3180
      %v3183 = vrot.slane %v3181, 1
      %v3186 = vsel %vm2266, %v3163, %v3169
      %v3189 = vsel %vm2274, %v3170, %v3171
      %v3190 = vsel %vm689, %v3186, %v3189
      %v3191 = vsel %vm2270, %v3163, %v3169
      %v3192 = vsel %vm2278, %v3170, %v3171
      %v3193 = vsel %vm2557, %v3191, %v3192
      %v3195 = vrot.slane %v3193, 1
      %v3196 = vshrl.u32 %v3178, 16
      %v3198 = vrot.slane %v3196, 7
      %v3199 = vrot.slane %v3198, 1
      %v3201 = vshll.u32 %v3183, 16
      %v3203 = vsel %vm2586, %v3199, %v3201
      %v3204 = vshrl.u32 %v3190, 16
      %v3206 = vrot.slane %v3204, 7
      %v3207 = vrot.slane %v3206, 1
      %v3209 = vshll.u32 %v3195, 16
      %v3211 = vsel %vm2586, %v3207, %v3209
      %s3212 = scalar_lea.vmem %s5, 512
      %v3213 = vld [vmem:[%s3212] sm:$0xff]
      %v3214 = vld [vmem:[%s3212 + $0x8] sm:$0xff]
      %v3215 = vld [vmem:[%s3212 + $0x10] sm:$0xff]
      %v3216 = vld [vmem:[%s3212 + $0x18] sm:$0xff]
      %v3217 = vld [vmem:[%s3212 + $0x20] sm:$0xff]
      %v3218 = vld [vmem:[%s3212 + $0x28] sm:$0xff]
      %v3219 = vld [vmem:[%s3212 + $0x30] sm:$0xff]
      %v3220 = vld [vmem:[%s3212 + $0x38] sm:$0xff]
      %v3221 = vld [vmem:[%s3212 + $0x40] sm:$0xff]
      %v3222 = vld [vmem:[%s3212 + $0x48] sm:$0xff]
      %v3223 = vld [vmem:[%s3212 + $0x50] sm:$0xff]
      %v3224 = vld [vmem:[%s3212 + $0x58] sm:$0xff]
      %v3225 = vld [vmem:[%s3212 + $0x60] sm:$0xff]
      %v3226 = vld [vmem:[%s3212 + $0x68] sm:$0xff]
      %v3227 = vld [vmem:[%s3212 + $0x70] sm:$0xff]
      %v3228 = vld [vmem:[%s3212 + $0x78] sm:$0xff]
      %3230 = vst [vmem:[#allocation1] ss:$9 sm:$0xff] %v3203
      %s3232 = scalar_lea.vmem [#allocation1], 1
      %3233 = vst [vmem:[%s3232] ss:$9 sm:$0xff] %v3211
      %v3234 = vld [vmem:[#allocation1] sm:$0xff]
      %v3252 = vunpack.c.l.b16 %v3213
      %v3253 = vunpack.c.h.b16 %v3213
      %v3254 = vunpack.c.l.b16 %v3214
      %v3255 = vunpack.c.h.b16 %v3214
      %v3256 = vunpack.c.l.b16 %v3215
      %v3257 = vunpack.c.h.b16 %v3215
      %v3258 = vunpack.c.l.b16 %v3216
      %v3259 = vunpack.c.h.b16 %v3216
      %v3260 = vunpack.c.l.b16 %v3217
      %v3261 = vunpack.c.h.b16 %v3217
      %v3262 = vunpack.c.l.b16 %v3218
      %v3263 = vunpack.c.h.b16 %v3218
      %v3264 = vunpack.c.l.b16 %v3219
      %v3265 = vunpack.c.h.b16 %v3219
      %v3266 = vunpack.c.l.b16 %v3220
      %v3267 = vunpack.c.h.b16 %v3220
      %v3268 = vunpack.c.l.b16 %v3221
      %v3269 = vunpack.c.h.b16 %v3221
      %v3270 = vunpack.c.l.b16 %v3222
      %v3271 = vunpack.c.h.b16 %v3222
      %v3272 = vunpack.c.l.b16 %v3223
      %v3273 = vunpack.c.h.b16 %v3223
      %v3274 = vunpack.c.l.b16 %v3224
      %v3275 = vunpack.c.h.b16 %v3224
      %v3276 = vunpack.c.l.b16 %v3225
      %v3277 = vunpack.c.h.b16 %v3225
      %v3278 = vunpack.c.l.b16 %v3226
      %v3279 = vunpack.c.h.b16 %v3226
      %v3280 = vunpack.c.l.b16 %v3227
      %v3281 = vunpack.c.h.b16 %v3227
      %v3282 = vunpack.c.l.b16 %v3228
      %v3283 = vunpack.c.h.b16 %v3228
      %v3284 = vpack.c.b16 %v3254, %v3252
      %v3285 = vpack.c.b16 %v3255, %v3253
      %v3286 = vpack.c.b16 %v3258, %v3256
      %v3287 = vpack.c.b16 %v3259, %v3257
      %v3288 = vpack.c.b16 %v3262, %v3260
      %v3289 = vpack.c.b16 %v3263, %v3261
      %v3290 = vpack.c.b16 %v3266, %v3264
      %v3291 = vpack.c.b16 %v3267, %v3265
      %v3292 = vpack.c.b16 %v3270, %v3268
      %v3293 = vpack.c.b16 %v3271, %v3269
      %v3294 = vpack.c.b16 %v3274, %v3272
      %v3295 = vpack.c.b16 %v3275, %v3273
      %v3296 = vpack.c.b16 %v3278, %v3276
      %v3297 = vpack.c.b16 %v3279, %v3277
      %v3298 = vpack.c.b16 %v3282, %v3280
      %v3299 = vpack.c.b16 %v3283, %v3281
      %3316 = vmatpush.bf16.msra.mxu0 %v3298
      %3317 = vmatpush.bf16.msra.mxu0 %v3296
      %3318 = vmatpush.bf16.msra.mxu0 %v3294
      %3319 = vmatpush.bf16.msra.mxu0 %v3292
      %3320 = vmatpush.bf16.msra.mxu0 %v3290
      %3321 = vmatpush.bf16.msra.mxu0 %v3288
      %3322 = vmatpush.bf16.msra.mxu0 %v3286
      %3323 = vmatpush.bf16.msra.mxu0 %v3284
      %3324 = vmatmul.bf16.gmra.mxu0 %v3234
      %v3325 = vpop.f32.mrf.mxu0
      %v3326 = vadd.f32 0.0, %v3325
      %v3327 = vpop.f32.mrf.mxu0
      %3328 = vdwg.mxu0
      %3329 = vmatpush.bf16.msra.mxu0 %v3299
      %3330 = vmatpush.bf16.msra.mxu0 %v3297
      %3331 = vmatpush.bf16.msra.mxu0 %v3295
      %3332 = vmatpush.bf16.msra.mxu0 %v3293
      %3333 = vmatpush.bf16.msra.mxu0 %v3291
      %3334 = vmatpush.bf16.msra.mxu0 %v3289
      %3335 = vmatpush.bf16.msra.mxu0 %v3287
      %3336 = vmatpush.bf16.msra.mxu0 %v3285
      %3337 = vmatmul.bf16.gmra.mxu0 %v3234
      %v3338 = vpop.f32.mrf.mxu0
      %v3339 = vadd.f32 0.0, %v3338
      %v3340 = vpop.f32.mrf.mxu0
      %3341 = vdwg.mxu0
      %v3342 = vadd.f32 %v3160, %v3326
      %v3343 = vadd.f32 %v3161, %v3339
      %v3344 = vld [vmem:[%s2399] sm:$0x3]
      %v3345 = vld [vmem:[%s2399 + $0x2] sm:$0x3]
      %v3348 = vrot.slane %v3344, 1
      %v3349 = vrot.slane %v3344, 2
      %v3350 = vrot.slane %v3344, 3
      %v3351 = vrot.slane %v3345, 1
      %v3352 = vrot.slane %v3345, 2
      %v3353 = vrot.slane %v3345, 3
      %v3356 = vsel %vm2266, %v3344, %v3348
      %v3359 = vsel %vm2274, %v3349, %v3350
      %v3360 = vsel %vm689, %v3356, %v3359
      %v3361 = vsel %vm2270, %v3344, %v3348
      %v3362 = vsel %vm2278, %v3349, %v3350
      %v3363 = vsel %vm2557, %v3361, %v3362
      %v3365 = vrot.slane %v3363, 1
      %v3368 = vsel %vm2266, %v3345, %v3351
      %v3371 = vsel %vm2274, %v3352, %v3353
      %v3372 = vsel %vm689, %v3368, %v3371
      %v3373 = vsel %vm2270, %v3345, %v3351
      %v3374 = vsel %vm2278, %v3352, %v3353
      %v3375 = vsel %vm2557, %v3373, %v3374
      %v3377 = vrot.slane %v3375, 1
      %v3378 = vshrl.u32 %v3360, 16
      %v3380 = vrot.slane %v3378, 7
      %v3381 = vrot.slane %v3380, 1
      %v3383 = vshll.u32 %v3365, 16
      %v3385 = vsel %vm2586, %v3381, %v3383
      %v3386 = vshrl.u32 %v3372, 16
      %v3388 = vrot.slane %v3386, 7
      %v3389 = vrot.slane %v3388, 1
      %v3391 = vshll.u32 %v3377, 16
      %v3393 = vsel %vm2586, %v3389, %v3391
      %s3394 = scalar_lea.vmem %s5, 640
      %v3395 = vld [vmem:[%s3394] sm:$0xff]
      %v3396 = vld [vmem:[%s3394 + $0x8] sm:$0xff]
      %v3397 = vld [vmem:[%s3394 + $0x10] sm:$0xff]
      %v3398 = vld [vmem:[%s3394 + $0x18] sm:$0xff]
      %v3399 = vld [vmem:[%s3394 + $0x20] sm:$0xff]
      %v3400 = vld [vmem:[%s3394 + $0x28] sm:$0xff]
      %v3401 = vld [vmem:[%s3394 + $0x30] sm:$0xff]
      %v3402 = vld [vmem:[%s3394 + $0x38] sm:$0xff]
      %v3403 = vld [vmem:[%s3394 + $0x40] sm:$0xff]
      %v3404 = vld [vmem:[%s3394 + $0x48] sm:$0xff]
      %v3405 = vld [vmem:[%s3394 + $0x50] sm:$0xff]
      %v3406 = vld [vmem:[%s3394 + $0x58] sm:$0xff]
      %v3407 = vld [vmem:[%s3394 + $0x60] sm:$0xff]
      %v3408 = vld [vmem:[%s3394 + $0x68] sm:$0xff]
      %v3409 = vld [vmem:[%s3394 + $0x70] sm:$0xff]
      %v3410 = vld [vmem:[%s3394 + $0x78] sm:$0xff]
      %3412 = vst [vmem:[#allocation1] ss:$9 sm:$0xff] %v3385
      %s3414 = scalar_lea.vmem [#allocation1], 1
      %3415 = vst [vmem:[%s3414] ss:$9 sm:$0xff] %v3393
      %v3416 = vld [vmem:[#allocation1] sm:$0xff]
      %v3434 = vunpack.c.l.b16 %v3395
      %v3435 = vunpack.c.h.b16 %v3395
      %v3436 = vunpack.c.l.b16 %v3396
      %v3437 = vunpack.c.h.b16 %v3396
      %v3438 = vunpack.c.l.b16 %v3397
      %v3439 = vunpack.c.h.b16 %v3397
      %v3440 = vunpack.c.l.b16 %v3398
      %v3441 = vunpack.c.h.b16 %v3398
      %v3442 = vunpack.c.l.b16 %v3399
      %v3443 = vunpack.c.h.b16 %v3399
      %v3444 = vunpack.c.l.b16 %v3400
      %v3445 = vunpack.c.h.b16 %v3400
      %v3446 = vunpack.c.l.b16 %v3401
      %v3447 = vunpack.c.h.b16 %v3401
      %v3448 = vunpack.c.l.b16 %v3402
      %v3449 = vunpack.c.h.b16 %v3402
      %v3450 = vunpack.c.l.b16 %v3403
      %v3451 = vunpack.c.h.b16 %v3403
      %v3452 = vunpack.c.l.b16 %v3404
      %v3453 = vunpack.c.h.b16 %v3404
      %v3454 = vunpack.c.l.b16 %v3405
      %v3455 = vunpack.c.h.b16 %v3405
      %v3456 = vunpack.c.l.b16 %v3406
      %v3457 = vunpack.c.h.b16 %v3406
      %v3458 = vunpack.c.l.b16 %v3407
      %v3459 = vunpack.c.h.b16 %v3407
      %v3460 = vunpack.c.l.b16 %v3408
      %v3461 = vunpack.c.h.b16 %v3408
      %v3462 = vunpack.c.l.b16 %v3409
      %v3463 = vunpack.c.h.b16 %v3409
      %v3464 = vunpack.c.l.b16 %v3410
      %v3465 = vunpack.c.h.b16 %v3410
      %v3466 = vpack.c.b16 %v3436, %v3434
      %v3467 = vpack.c.b16 %v3437, %v3435
      %v3468 = vpack.c.b16 %v3440, %v3438
      %v3469 = vpack.c.b16 %v3441, %v3439
      %v3470 = vpack.c.b16 %v3444, %v3442
      %v3471 = vpack.c.b16 %v3445, %v3443
      %v3472 = vpack.c.b16 %v3448, %v3446
      %v3473 = vpack.c.b16 %v3449, %v3447
      %v3474 = vpack.c.b16 %v3452, %v3450
      %v3475 = vpack.c.b16 %v3453, %v3451
      %v3476 = vpack.c.b16 %v3456, %v3454
      %v3477 = vpack.c.b16 %v3457, %v3455
      %v3478 = vpack.c.b16 %v3460, %v3458
      %v3479 = vpack.c.b16 %v3461, %v3459
      %v3480 = vpack.c.b16 %v3464, %v3462
      %v3481 = vpack.c.b16 %v3465, %v3463
      %3498 = vmatpush.bf16.msra.mxu0 %v3480
      %3499 = vmatpush.bf16.msra.mxu0 %v3478
      %3500 = vmatpush.bf16.msra.mxu0 %v3476
      %3501 = vmatpush.bf16.msra.mxu0 %v3474
      %3502 = vmatpush.bf16.msra.mxu0 %v3472
      %3503 = vmatpush.bf16.msra.mxu0 %v3470
      %3504 = vmatpush.bf16.msra.mxu0 %v3468
      %3505 = vmatpush.bf16.msra.mxu0 %v3466
      %3506 = vmatmul.bf16.gmra.mxu0 %v3416
      %v3507 = vpop.f32.mrf.mxu0
      %v3508 = vadd.f32 0.0, %v3507
      %v3509 = vpop.f32.mrf.mxu0
      %3510 = vdwg.mxu0
      %3511 = vmatpush.bf16.msra.mxu0 %v3481
      %3512 = vmatpush.bf16.msra.mxu0 %v3479
      %3513 = vmatpush.bf16.msra.mxu0 %v3477
      %3514 = vmatpush.bf16.msra.mxu0 %v3475
      %3515 = vmatpush.bf16.msra.mxu0 %v3473
      %3516 = vmatpush.bf16.msra.mxu0 %v3471
      %3517 = vmatpush.bf16.msra.mxu0 %v3469
      %3518 = vmatpush.bf16.msra.mxu0 %v3467
      %3519 = vmatmul.bf16.gmra.mxu0 %v3416
      %v3520 = vpop.f32.mrf.mxu0
      %v3521 = vadd.f32 0.0, %v3520
      %v3522 = vpop.f32.mrf.mxu0
      %3523 = vdwg.mxu0
      %v3524 = vadd.f32 %v3342, %v3508
      %v3525 = vadd.f32 %v3343, %v3521
      %v3526 = vld [vmem:[%s2511] sm:$0x1]
      %v3527 = vld [vmem:[%s2511 + $0x2] sm:$0x1]
      %s3528 = scalar_lea.vmem %s5, 768
      %v3529 = vld [vmem:[%s3528] sm:$0xff]
      %v3530 = vld [vmem:[%s3528 + $0x8] sm:$0xff]
      %v3531 = vld [vmem:[%s3528 + $0x10] sm:$0xff]
      %v3532 = vld [vmem:[%s3528 + $0x18] sm:$0xff]
      %v3533 = vld [vmem:[%s3528 + $0x20] sm:$0xff]
      %v3534 = vld [vmem:[%s3528 + $0x28] sm:$0xff]
      %v3535 = vld [vmem:[%s3528 + $0x30] sm:$0xff]
      %v3536 = vld [vmem:[%s3528 + $0x38] sm:$0xff]
      %v3537 = vld [vmem:[%s3528 + $0x40] sm:$0xff]
      %v3538 = vld [vmem:[%s3528 + $0x48] sm:$0xff]
      %v3539 = vld [vmem:[%s3528 + $0x50] sm:$0xff]
      %v3540 = vld [vmem:[%s3528 + $0x58] sm:$0xff]
      %v3541 = vld [vmem:[%s3528 + $0x60] sm:$0xff]
      %v3542 = vld [vmem:[%s3528 + $0x68] sm:$0xff]
      %v3543 = vld [vmem:[%s3528 + $0x70] sm:$0xff]
      %v3544 = vld [vmem:[%s3528 + $0x78] sm:$0xff]
      %3546 = vst [vmem:[#allocation1] ss:$9 sm:$0xff] %v3526
      %s3548 = scalar_lea.vmem [#allocation1], 1
      %3549 = vst [vmem:[%s3548] ss:$9 sm:$0xff] %v3527
      %v3550 = vld [vmem:[#allocation1] sm:$0xff]
      %v3568 = vunpack.c.l.b16 %v3529
      %v3569 = vunpack.c.h.b16 %v3529
      %v3570 = vunpack.c.l.b16 %v3530
      %v3571 = vunpack.c.h.b16 %v3530
      %v3572 = vunpack.c.l.b16 %v3531
      %v3573 = vunpack.c.h.b16 %v3531
      %v3574 = vunpack.c.l.b16 %v3532
      %v3575 = vunpack.c.h.b16 %v3532
      %v3576 = vunpack.c.l.b16 %v3533
      %v3577 = vunpack.c.h.b16 %v3533
      %v3578 = vunpack.c.l.b16 %v3534
      %v3579 = vunpack.c.h.b16 %v3534
      %v3580 = vunpack.c.l.b16 %v3535
      %v3581 = vunpack.c.h.b16 %v3535
      %v3582 = vunpack.c.l.b16 %v3536
      %v3583 = vunpack.c.h.b16 %v3536
      %v3584 = vunpack.c.l.b16 %v3537
      %v3585 = vunpack.c.h.b16 %v3537
      %v3586 = vunpack.c.l.b16 %v3538
      %v3587 = vunpack.c.h.b16 %v3538
      %v3588 = vunpack.c.l.b16 %v3539
      %v3589 = vunpack.c.h.b16 %v3539
      %v3590 = vunpack.c.l.b16 %v3540
      %v3591 = vunpack.c.h.b16 %v3540
      %v3592 = vunpack.c.l.b16 %v3541
      %v3593 = vunpack.c.h.b16 %v3541
      %v3594 = vunpack.c.l.b16 %v3542
      %v3595 = vunpack.c.h.b16 %v3542
      %v3596 = vunpack.c.l.b16 %v3543
      %v3597 = vunpack.c.h.b16 %v3543
      %v3598 = vunpack.c.l.b16 %v3544
      %v3599 = vunpack.c.h.b16 %v3544
      %v3600 = vpack.c.b16 %v3570, %v3568
      %v3601 = vpack.c.b16 %v3571, %v3569
      %v3602 = vpack.c.b16 %v3574, %v3572
      %v3603 = vpack.c.b16 %v3575, %v3573
      %v3604 = vpack.c.b16 %v3578, %v3576
      %v3605 = vpack.c.b16 %v3579, %v3577
      %v3606 = vpack.c.b16 %v3582, %v3580
      %v3607 = vpack.c.b16 %v3583, %v3581
      %v3608 = vpack.c.b16 %v3586, %v3584
      %v3609 = vpack.c.b16 %v3587, %v3585
      %v3610 = vpack.c.b16 %v3590, %v3588
      %v3611 = vpack.c.b16 %v3591, %v3589
      %v3612 = vpack.c.b16 %v3594, %v3592
      %v3613 = vpack.c.b16 %v3595, %v3593
      %v3614 = vpack.c.b16 %v3598, %v3596
      %v3615 = vpack.c.b16 %v3599, %v3597
      %3632 = vmatpush.bf16.msra.mxu0 %v3614
      %3633 = vmatpush.bf16.msra.mxu0 %v3612
      %3634 = vmatpush.bf16.msra.mxu0 %v3610
      %3635 = vmatpush.bf16.msra.mxu0 %v3608
      %3636 = vmatpush.bf16.msra.mxu0 %v3606
      %3637 = vmatpush.bf16.msra.mxu0 %v3604
      %3638 = vmatpush.bf16.msra.mxu0 %v3602
      %3639 = vmatpush.bf16.msra.mxu0 %v3600
      %3640 = vmatmul.bf16.gmra.mxu0 %v3550
      %v3641 = vpop.f32.mrf.mxu0
      %v3642 = vadd.f32 0.0, %v3641
      %v3643 = vpop.f32.mrf.mxu0
      %3644 = vdwg.mxu0
      %3645 = vmatpush.bf16.msra.mxu0 %v3615
      %3646 = vmatpush.bf16.msra.mxu0 %v3613
      %3647 = vmatpush.bf16.msra.mxu0 %v3611
      %3648 = vmatpush.bf16.msra.mxu0 %v3609
      %3649 = vmatpush.bf16.msra.mxu0 %v3607
      %3650 = vmatpush.bf16.msra.mxu0 %v3605
      %3651 = vmatpush.bf16.msra.mxu0 %v3603
      %3652 = vmatpush.bf16.msra.mxu0 %v3601
      %3653 = vmatmul.bf16.gmra.mxu0 %v3550
      %v3654 = vpop.f32.mrf.mxu0
      %v3655 = vadd.f32 0.0, %v3654
      %v3656 = vpop.f32.mrf.mxu0
      %3657 = vdwg.mxu0
      %v3658 = vadd.f32 %v3524, %v3642
      %v3659 = vadd.f32 %v3525, %v3655
      %v3660 = vld [vmem:[%s2458] sm:$0x3]
      %v3661 = vld [vmem:[%s2458 + $0x2] sm:$0x3]
      %v3664 = vrot.slane %v3660, 1
      %v3665 = vrot.slane %v3660, 2
      %v3666 = vrot.slane %v3660, 3
      %v3667 = vrot.slane %v3661, 1
      %v3668 = vrot.slane %v3661, 2
      %v3669 = vrot.slane %v3661, 3
      %v3672 = vsel %vm2266, %v3660, %v3664
      %v3675 = vsel %vm2274, %v3665, %v3666
      %v3676 = vsel %vm689, %v3672, %v3675
      %v3677 = vsel %vm2270, %v3660, %v3664
      %v3678 = vsel %vm2278, %v3665, %v3666
      %v3679 = vsel %vm2557, %v3677, %v3678
      %v3681 = vrot.slane %v3679, 1
      %v3684 = vsel %vm2266, %v3661, %v3667
      %v3687 = vsel %vm2274, %v3668, %v3669
      %v3688 = vsel %vm689, %v3684, %v3687
      %v3689 = vsel %vm2270, %v3661, %v3667
      %v3690 = vsel %vm2278, %v3668, %v3669
      %v3691 = vsel %vm2557, %v3689, %v3690
      %v3693 = vrot.slane %v3691, 1
      %v3694 = vshrl.u32 %v3676, 16
      %v3696 = vrot.slane %v3694, 7
      %v3697 = vrot.slane %v3696, 1
      %v3699 = vshll.u32 %v3681, 16
      %v3701 = vsel %vm2586, %v3697, %v3699
      %v3702 = vshrl.u32 %v3688, 16
      %v3704 = vrot.slane %v3702, 7
      %v3705 = vrot.slane %v3704, 1
      %v3707 = vshll.u32 %v3693, 16
      %v3709 = vsel %vm2586, %v3705, %v3707
      %s3710 = scalar_lea.vmem %s5, 896
      %v3711 = vld [vmem:[%s3710] sm:$0xff]
      %v3712 = vld [vmem:[%s3710 + $0x8] sm:$0xff]
      %v3713 = vld [vmem:[%s3710 + $0x10] sm:$0xff]
      %v3714 = vld [vmem:[%s3710 + $0x18] sm:$0xff]
      %v3715 = vld [vmem:[%s3710 + $0x20] sm:$0xff]
      %v3716 = vld [vmem:[%s3710 + $0x28] sm:$0xff]
      %v3717 = vld [vmem:[%s3710 + $0x30] sm:$0xff]
      %v3718 = vld [vmem:[%s3710 + $0x38] sm:$0xff]
      %v3719 = vld [vmem:[%s3710 + $0x40] sm:$0xff]
      %v3720 = vld [vmem:[%s3710 + $0x48] sm:$0xff]
      %v3721 = vld [vmem:[%s3710 + $0x50] sm:$0xff]
      %v3722 = vld [vmem:[%s3710 + $0x58] sm:$0xff]
      %v3723 = vld [vmem:[%s3710 + $0x60] sm:$0xff]
      %v3724 = vld [vmem:[%s3710 + $0x68] sm:$0xff]
      %v3725 = vld [vmem:[%s3710 + $0x70] sm:$0xff]
      %v3726 = vld [vmem:[%s3710 + $0x78] sm:$0xff]
      %3728 = vst [vmem:[#allocation1] ss:$9 sm:$0xff] %v3701
      %s3730 = scalar_lea.vmem [#allocation1], 1
      %3731 = vst [vmem:[%s3730] ss:$9 sm:$0xff] %v3709
      %v3732 = vld [vmem:[#allocation1] sm:$0xff]
      %v3750 = vunpack.c.l.b16 %v3711
      %v3751 = vunpack.c.h.b16 %v3711
      %v3752 = vunpack.c.l.b16 %v3712
      %v3753 = vunpack.c.h.b16 %v3712
      %v3754 = vunpack.c.l.b16 %v3713
      %v3755 = vunpack.c.h.b16 %v3713
      %v3756 = vunpack.c.l.b16 %v3714
      %v3757 = vunpack.c.h.b16 %v3714
      %v3758 = vunpack.c.l.b16 %v3715
      %v3759 = vunpack.c.h.b16 %v3715
      %v3760 = vunpack.c.l.b16 %v3716
      %v3761 = vunpack.c.h.b16 %v3716
      %v3762 = vunpack.c.l.b16 %v3717
      %v3763 = vunpack.c.h.b16 %v3717
      %v3764 = vunpack.c.l.b16 %v3718
      %v3765 = vunpack.c.h.b16 %v3718
      %v3766 = vunpack.c.l.b16 %v3719
      %v3767 = vunpack.c.h.b16 %v3719
      %v3768 = vunpack.c.l.b16 %v3720
      %v3769 = vunpack.c.h.b16 %v3720
      %v3770 = vunpack.c.l.b16 %v3721
      %v3771 = vunpack.c.h.b16 %v3721
      %v3772 = vunpack.c.l.b16 %v3722
      %v3773 = vunpack.c.h.b16 %v3722
      %v3774 = vunpack.c.l.b16 %v3723
      %v3775 = vunpack.c.h.b16 %v3723
      %v3776 = vunpack.c.l.b16 %v3724
      %v3777 = vunpack.c.h.b16 %v3724
      %v3778 = vunpack.c.l.b16 %v3725
      %v3779 = vunpack.c.h.b16 %v3725
      %v3780 = vunpack.c.l.b16 %v3726
      %v3781 = vunpack.c.h.b16 %v3726
      %v3782 = vpack.c.b16 %v3752, %v3750
      %v3783 = vpack.c.b16 %v3753, %v3751
      %v3784 = vpack.c.b16 %v3756, %v3754
      %v3785 = vpack.c.b16 %v3757, %v3755
      %v3786 = vpack.c.b16 %v3760, %v3758
      %v3787 = vpack.c.b16 %v3761, %v3759
      %v3788 = vpack.c.b16 %v3764, %v3762
      %v3789 = vpack.c.b16 %v3765, %v3763
      %v3790 = vpack.c.b16 %v3768, %v3766
      %v3791 = vpack.c.b16 %v3769, %v3767
      %v3792 = vpack.c.b16 %v3772, %v3770
      %v3793 = vpack.c.b16 %v3773, %v3771
      %v3794 = vpack.c.b16 %v3776, %v3774
      %v3795 = vpack.c.b16 %v3777, %v3775
      %v3796 = vpack.c.b16 %v3780, %v3778
      %v3797 = vpack.c.b16 %v3781, %v3779
      %3814 = vmatpush.bf16.msra.mxu0 %v3796
      %3815 = vmatpush.bf16.msra.mxu0 %v3794
      %3816 = vmatpush.bf16.msra.mxu0 %v3792
      %3817 = vmatpush.bf16.msra.mxu0 %v3790
      %3818 = vmatpush.bf16.msra.mxu0 %v3788
      %3819 = vmatpush.bf16.msra.mxu0 %v3786
      %3820 = vmatpush.bf16.msra.mxu0 %v3784
      %3821 = vmatpush.bf16.msra.mxu0 %v3782
      %3822 = vmatmul.bf16.gmra.mxu0 %v3732
      %v3823 = vpop.f32.mrf.mxu0
      %v3824 = vadd.f32 0.0, %v3823
      %v3825 = vpop.f32.mrf.mxu0
      %3826 = vdwg.mxu0
      %3827 = vmatpush.bf16.msra.mxu0 %v3797
      %3828 = vmatpush.bf16.msra.mxu0 %v3795
      %3829 = vmatpush.bf16.msra.mxu0 %v3793
      %3830 = vmatpush.bf16.msra.mxu0 %v3791
      %3831 = vmatpush.bf16.msra.mxu0 %v3789
      %3832 = vmatpush.bf16.msra.mxu0 %v3787
      %3833 = vmatpush.bf16.msra.mxu0 %v3785
      %3834 = vmatpush.bf16.msra.mxu0 %v3783
      %3835 = vmatmul.bf16.gmra.mxu0 %v3732
      %v3836 = vpop.f32.mrf.mxu0
      %v3837 = vadd.f32 0.0, %v3836
      %v3838 = vpop.f32.mrf.mxu0
      %3839 = vdwg.mxu0
      %v3840 = vadd.f32 %v3658, %v3824
      %v3841 = vadd.f32 %v3659, %v3837
      %v3842 = vld [vmem:[%s2511] sm:$0x3]
      %v3843 = vld [vmem:[%s2511 + $0x2] sm:$0x3]
      %v3846 = vrot.slane %v3842, 1
      %v3847 = vrot.slane %v3842, 2
      %v3848 = vrot.slane %v3842, 3
      %v3849 = vrot.slane %v3843, 1
      %v3850 = vrot.slane %v3843, 2
      %v3851 = vrot.slane %v3843, 3
      %v3854 = vsel %vm2266, %v3842, %v3846
      %v3857 = vsel %vm2274, %v3847, %v3848
      %v3858 = vsel %vm689, %v3854, %v3857
      %v3859 = vsel %vm2270, %v3842, %v3846
      %v3860 = vsel %vm2278, %v3847, %v3848
      %v3861 = vsel %vm2557, %v3859, %v3860
      %v3863 = vrot.slane %v3861, 1
      %v3866 = vsel %vm2266, %v3843, %v3849
      %v3869 = vsel %vm2274, %v3850, %v3851
      %v3870 = vsel %vm689, %v3866, %v3869
      %v3871 = vsel %vm2270, %v3843, %v3849
      %v3872 = vsel %vm2278, %v3850, %v3851
      %v3873 = vsel %vm2557, %v3871, %v3872
      %v3875 = vrot.slane %v3873, 1
      %v3876 = vshrl.u32 %v3858, 16
      %v3878 = vrot.slane %v3876, 7
      %v3879 = vrot.slane %v3878, 1
      %v3881 = vshll.u32 %v3863, 16
      %v3883 = vsel %vm2586, %v3879, %v3881
      %v3884 = vshrl.u32 %v3870, 16
      %v3886 = vrot.slane %v3884, 7
      %v3887 = vrot.slane %v3886, 1
      %v3889 = vshll.u32 %v3875, 16
      %v3891 = vsel %vm2586, %v3887, %v3889
      %s3892 = scalar_lea.vmem %s5, 1024
      %v3893 = vld [vmem:[%s3892] sm:$0xff]
      %v3894 = vld [vmem:[%s3892 + $0x8] sm:$0xff]
      %v3895 = vld [vmem:[%s3892 + $0x10] sm:$0xff]
      %v3896 = vld [vmem:[%s3892 + $0x18] sm:$0xff]
      %v3897 = vld [vmem:[%s3892 + $0x20] sm:$0xff]
      %v3898 = vld [vmem:[%s3892 + $0x28] sm:$0xff]
      %v3899 = vld [vmem:[%s3892 + $0x30] sm:$0xff]
      %v3900 = vld [vmem:[%s3892 + $0x38] sm:$0xff]
      %v3901 = vld [vmem:[%s3892 + $0x40] sm:$0xff]
      %v3902 = vld [vmem:[%s3892 + $0x48] sm:$0xff]
      %v3903 = vld [vmem:[%s3892 + $0x50] sm:$0xff]
      %v3904 = vld [vmem:[%s3892 + $0x58] sm:$0xff]
      %v3905 = vld [vmem:[%s3892 + $0x60] sm:$0xff]
      %v3906 = vld [vmem:[%s3892 + $0x68] sm:$0xff]
      %v3907 = vld [vmem:[%s3892 + $0x70] sm:$0xff]
      %v3908 = vld [vmem:[%s3892 + $0x78] sm:$0xff]
      %3910 = vst [vmem:[#allocation1] ss:$9 sm:$0xff] %v3883
      %s3912 = scalar_lea.vmem [#allocation1], 1
      %3913 = vst [vmem:[%s3912] ss:$9 sm:$0xff] %v3891
      %v3914 = vld [vmem:[#allocation1] sm:$0xff]
      %v3932 = vunpack.c.l.b16 %v3893
      %v3933 = vunpack.c.h.b16 %v3893
      %v3934 = vunpack.c.l.b16 %v3894
      %v3935 = vunpack.c.h.b16 %v3894
      %v3936 = vunpack.c.l.b16 %v3895
      %v3937 = vunpack.c.h.b16 %v3895
      %v3938 = vunpack.c.l.b16 %v3896
      %v3939 = vunpack.c.h.b16 %v3896
      %v3940 = vunpack.c.l.b16 %v3897
      %v3941 = vunpack.c.h.b16 %v3897
      %v3942 = vunpack.c.l.b16 %v3898
      %v3943 = vunpack.c.h.b16 %v3898
      %v3944 = vunpack.c.l.b16 %v3899
      %v3945 = vunpack.c.h.b16 %v3899
      %v3946 = vunpack.c.l.b16 %v3900
      %v3947 = vunpack.c.h.b16 %v3900
      %v3948 = vunpack.c.l.b16 %v3901
      %v3949 = vunpack.c.h.b16 %v3901
      %v3950 = vunpack.c.l.b16 %v3902
      %v3951 = vunpack.c.h.b16 %v3902
      %v3952 = vunpack.c.l.b16 %v3903
      %v3953 = vunpack.c.h.b16 %v3903
      %v3954 = vunpack.c.l.b16 %v3904
      %v3955 = vunpack.c.h.b16 %v3904
      %v3956 = vunpack.c.l.b16 %v3905
      %v3957 = vunpack.c.h.b16 %v3905
      %v3958 = vunpack.c.l.b16 %v3906
      %v3959 = vunpack.c.h.b16 %v3906
      %v3960 = vunpack.c.l.b16 %v3907
      %v3961 = vunpack.c.h.b16 %v3907
      %v3962 = vunpack.c.l.b16 %v3908
      %v3963 = vunpack.c.h.b16 %v3908
      %v3964 = vpack.c.b16 %v3934, %v3932
      %v3965 = vpack.c.b16 %v3935, %v3933
      %v3966 = vpack.c.b16 %v3938, %v3936
      %v3967 = vpack.c.b16 %v3939, %v3937
      %v3968 = vpack.c.b16 %v3942, %v3940
      %v3969 = vpack.c.b16 %v3943, %v3941
      %v3970 = vpack.c.b16 %v3946, %v3944
      %v3971 = vpack.c.b16 %v3947, %v3945
      %v3972 = vpack.c.b16 %v3950, %v3948
      %v3973 = vpack.c.b16 %v3951, %v3949
      %v3974 = vpack.c.b16 %v3954, %v3952
      %v3975 = vpack.c.b16 %v3955, %v3953
      %v3976 = vpack.c.b16 %v3958, %v3956
      %v3977 = vpack.c.b16 %v3959, %v3957
      %v3978 = vpack.c.b16 %v3962, %v3960
      %v3979 = vpack.c.b16 %v3963, %v3961
      %3996 = vmatpush.bf16.msra.mxu0 %v3978
      %3997 = vmatpush.bf16.msra.mxu0 %v3976
      %3998 = vmatpush.bf16.msra.mxu0 %v3974
      %3999 = vmatpush.bf16.msra.mxu0 %v3972
      %4000 = vmatpush.bf16.msra.mxu0 %v3970
      %4001 = vmatpush.bf16.msra.mxu0 %v3968
      %4002 = vmatpush.bf16.msra.mxu0 %v3966
      %4003 = vmatpush.bf16.msra.mxu0 %v3964
      %4004 = vmatmul.bf16.gmra.mxu0 %v3914
      %v4005 = vpop.f32.mrf.mxu0
      %v4006 = vadd.f32 0.0, %v4005
      %v4007 = vpop.f32.mrf.mxu0
      %4008 = vdwg.mxu0
      %4009 = vmatpush.bf16.msra.mxu0 %v3979
      %4010 = vmatpush.bf16.msra.mxu0 %v3977
      %4011 = vmatpush.bf16.msra.mxu0 %v3975
      %4012 = vmatpush.bf16.msra.mxu0 %v3973
      %4013 = vmatpush.bf16.msra.mxu0 %v3971
      %4014 = vmatpush.bf16.msra.mxu0 %v3969
      %4015 = vmatpush.bf16.msra.mxu0 %v3967
      %4016 = vmatpush.bf16.msra.mxu0 %v3965
      %4017 = vmatmul.bf16.gmra.mxu0 %v3914
      %v4018 = vpop.f32.mrf.mxu0
      %v4019 = vadd.f32 0.0, %v4018
      %v4020 = vpop.f32.mrf.mxu0
      %4021 = vdwg.mxu0
      %v4022 = vadd.f32 %v3840, %v4006
      %v4023 = vadd.f32 %v3841, %v4019
      %v4024 = vld [vmem:[%s6] sm:$0x3]
      %v4026 = vperm.slane %v4024, 0
      %v4027 = vperm.slane %v4024, 1
      %v4030 = vadd.f32 %v4022, %v4026
      %v4031 = vadd.f32 %v4023, %v4027
      %v4032 = vmul.f32 %v4030, 0.5
      %v4033 = vmul.f32 %v4031, 0.5
      %v4034 = vmul.f32 %v4030, %v4030
      %v4035 = vmul.f32 %v4031, %v4031
      %v4036 = vmul.f32 %v4034, %v4030
      %v4037 = vmul.f32 %v4035, %v4031
      %v4038 = vmul.f32 %v4036, 0.044715
      %v4039 = vmul.f32 %v4037, 0.044715
      %v4040 = vadd.f32 %v4030, %v4038
      %v4041 = vadd.f32 %v4031, %v4039
      %v4042 = vmul.f32 %v4040, 0.7978846
      %v4043 = vmul.f32 %v4041, 0.7978846
      %v4044 = vtanh.pop %v4042
      %v4045 = vtanh.pop %v4043
      %v4046 = vadd.f32 %v4044, 1.0
      %v4047 = vadd.f32 %v4045, 1.0
      %v4048 = vmul.f32 %v4032, %v4046
      %v4049 = vmul.f32 %v4033, %v4047
      %v4050 = vpack.c.bf16 %v4048, %v4048
      %v4051 = vpack.c.bf16 %v4049, %v4049
      %v4052 = vld [vmem:[%s7] sm:$0xff]
      %v4053 = vld [vmem:[%s7 + $0x8] sm:$0xff]
      %v4054 = vld [vmem:[%s7 + $0x10] sm:$0xff]
      %v4055 = vld [vmem:[%s7 + $0x18] sm:$0xff]
      %v4056 = vld [vmem:[%s7 + $0x20] sm:$0xff]
      %v4057 = vld [vmem:[%s7 + $0x28] sm:$0xff]
      %v4058 = vld [vmem:[%s7 + $0x30] sm:$0xff]
      %v4059 = vld [vmem:[%s7 + $0x38] sm:$0xff]
      %v4060 = vld [vmem:[%s7 + $0x40] sm:$0xff]
      %v4061 = vld [vmem:[%s7 + $0x48] sm:$0xff]
      %v4062 = vld [vmem:[%s7 + $0x50] sm:$0xff]
      %v4063 = vld [vmem:[%s7 + $0x58] sm:$0xff]
      %v4064 = vld [vmem:[%s7 + $0x60] sm:$0xff]
      %v4065 = vld [vmem:[%s7 + $0x68] sm:$0xff]
      %v4066 = vld [vmem:[%s7 + $0x70] sm:$0xff]
      %v4067 = vld [vmem:[%s7 + $0x78] sm:$0xff]
      %v4068 = vld [vmem:[%s7 + $0x80] sm:$0xff]
      %v4069 = vld [vmem:[%s7 + $0x88] sm:$0xff]
      %v4070 = vld [vmem:[%s7 + $0x90] sm:$0xff]
      %v4071 = vld [vmem:[%s7 + $0x98] sm:$0xff]
      %v4072 = vld [vmem:[%s7 + $0xa0] sm:$0xff]
      %v4073 = vld [vmem:[%s7 + $0xa8] sm:$0xff]
      %v4074 = vld [vmem:[%s7 + $0xb0] sm:$0xff]
      %v4075 = vld [vmem:[%s7 + $0xb8] sm:$0xff]
      %v4076 = vld [vmem:[%s7 + $0xc0] sm:$0xff]
      %v4077 = vld [vmem:[%s7 + $0xc8] sm:$0xff]
      %v4078 = vld [vmem:[%s7 + $0xd0] sm:$0xff]
      %v4079 = vld [vmem:[%s7 + $0xd8] sm:$0xff]
      %v4080 = vld [vmem:[%s7 + $0xe0] sm:$0xff]
      %v4081 = vld [vmem:[%s7 + $0xe8] sm:$0xff]
      %v4082 = vld [vmem:[%s7 + $0xf0] sm:$0xff]
      %v4083 = vld [vmem:[%s7 + $0xf8] sm:$0xff]
      %v4084 = vld [vmem:[%s7 + $0x100] sm:$0xff]
      %v4085 = vld [vmem:[%s7 + $0x108] sm:$0xff]
      %v4086 = vld [vmem:[%s7 + $0x110] sm:$0xff]
      %v4087 = vld [vmem:[%s7 + $0x118] sm:$0xff]
      %v4088 = vld [vmem:[%s7 + $0x120] sm:$0xff]
      %v4089 = vld [vmem:[%s7 + $0x128] sm:$0xff]
      %v4090 = vld [vmem:[%s7 + $0x130] sm:$0xff]
      %v4091 = vld [vmem:[%s7 + $0x138] sm:$0xff]
      %v4092 = vld [vmem:[%s7 + $0x140] sm:$0xff]
      %v4093 = vld [vmem:[%s7 + $0x148] sm:$0xff]
      %v4094 = vld [vmem:[%s7 + $0x150] sm:$0xff]
      %v4095 = vld [vmem:[%s7 + $0x158] sm:$0xff]
      %v4096 = vld [vmem:[%s7 + $0x160] sm:$0xff]
      %v4097 = vld [vmem:[%s7 + $0x168] sm:$0xff]
      %v4098 = vld [vmem:[%s7 + $0x170] sm:$0xff]
      %v4099 = vld [vmem:[%s7 + $0x178] sm:$0xff]
      %v4100 = vld [vmem:[%s7 + $0x180] sm:$0xff]
      %v4101 = vld [vmem:[%s7 + $0x188] sm:$0xff]
      %v4102 = vld [vmem:[%s7 + $0x190] sm:$0xff]
      %v4103 = vld [vmem:[%s7 + $0x198] sm:$0xff]
      %v4104 = vld [vmem:[%s7 + $0x1a0] sm:$0xff]
      %v4105 = vld [vmem:[%s7 + $0x1a8] sm:$0xff]
      %v4106 = vld [vmem:[%s7 + $0x1b0] sm:$0xff]
      %v4107 = vld [vmem:[%s7 + $0x1b8] sm:$0xff]
      %v4108 = vld [vmem:[%s7 + $0x1c0] sm:$0xff]
      %v4109 = vld [vmem:[%s7 + $0x1c8] sm:$0xff]
      %v4110 = vld [vmem:[%s7 + $0x1d0] sm:$0xff]
      %v4111 = vld [vmem:[%s7 + $0x1d8] sm:$0xff]
      %v4112 = vld [vmem:[%s7 + $0x1e0] sm:$0xff]
      %v4113 = vld [vmem:[%s7 + $0x1e8] sm:$0xff]
      %v4114 = vld [vmem:[%s7 + $0x1f0] sm:$0xff]
      %v4115 = vld [vmem:[%s7 + $0x1f8] sm:$0xff]
      %v4180 = vunpack.c.l.b16 %v4052
      %v4181 = vunpack.c.h.b16 %v4052
      %v4182 = vunpack.c.l.b16 %v4053
      %v4183 = vunpack.c.h.b16 %v4053
      %v4184 = vunpack.c.l.b16 %v4054
      %v4185 = vunpack.c.h.b16 %v4054
      %v4186 = vunpack.c.l.b16 %v4055
      %v4187 = vunpack.c.h.b16 %v4055
      %v4188 = vunpack.c.l.b16 %v4056
      %v4189 = vunpack.c.h.b16 %v4056
      %v4190 = vunpack.c.l.b16 %v4057
      %v4191 = vunpack.c.h.b16 %v4057
      %v4192 = vunpack.c.l.b16 %v4058
      %v4193 = vunpack.c.h.b16 %v4058
      %v4194 = vunpack.c.l.b16 %v4059
      %v4195 = vunpack.c.h.b16 %v4059
      %v4196 = vunpack.c.l.b16 %v4060
      %v4197 = vunpack.c.h.b16 %v4060
      %v4198 = vunpack.c.l.b16 %v4061
      %v4199 = vunpack.c.h.b16 %v4061
      %v4200 = vunpack.c.l.b16 %v4062
      %v4201 = vunpack.c.h.b16 %v4062
      %v4202 = vunpack.c.l.b16 %v4063
      %v4203 = vunpack.c.h.b16 %v4063
      %v4204 = vunpack.c.l.b16 %v4064
      %v4205 = vunpack.c.h.b16 %v4064
      %v4206 = vunpack.c.l.b16 %v4065
      %v4207 = vunpack.c.h.b16 %v4065
      %v4208 = vunpack.c.l.b16 %v4066
      %v4209 = vunpack.c.h.b16 %v4066
      %v4210 = vunpack.c.l.b16 %v4067
      %v4211 = vunpack.c.h.b16 %v4067
      %v4212 = vunpack.c.l.b16 %v4068
      %v4213 = vunpack.c.h.b16 %v4068
      %v4214 = vunpack.c.l.b16 %v4069
      %v4215 = vunpack.c.h.b16 %v4069
      %v4216 = vunpack.c.l.b16 %v4070
      %v4217 = vunpack.c.h.b16 %v4070
      %v4218 = vunpack.c.l.b16 %v4071
      %v4219 = vunpack.c.h.b16 %v4071
      %v4220 = vunpack.c.l.b16 %v4072
      %v4221 = vunpack.c.h.b16 %v4072
      %v4222 = vunpack.c.l.b16 %v4073
      %v4223 = vunpack.c.h.b16 %v4073
      %v4224 = vunpack.c.l.b16 %v4074
      %v4225 = vunpack.c.h.b16 %v4074
      %v4226 = vunpack.c.l.b16 %v4075
      %v4227 = vunpack.c.h.b16 %v4075
      %v4228 = vunpack.c.l.b16 %v4076
      %v4229 = vunpack.c.h.b16 %v4076
      %v4230 = vunpack.c.l.b16 %v4077
      %v4231 = vunpack.c.h.b16 %v4077
      %v4232 = vunpack.c.l.b16 %v4078
      %v4233 = vunpack.c.h.b16 %v4078
      %v4234 = vunpack.c.l.b16 %v4079
      %v4235 = vunpack.c.h.b16 %v4079
      %v4236 = vunpack.c.l.b16 %v4080
      %v4237 = vunpack.c.h.b16 %v4080
      %v4238 = vunpack.c.l.b16 %v4081
      %v4239 = vunpack.c.h.b16 %v4081
      %v4240 = vunpack.c.l.b16 %v4082
      %v4241 = vunpack.c.h.b16 %v4082
      %v4242 = vunpack.c.l.b16 %v4083
      %v4243 = vunpack.c.h.b16 %v4083
      %v4244 = vunpack.c.l.b16 %v4084
      %v4245 = vunpack.c.h.b16 %v4084
      %v4246 = vunpack.c.l.b16 %v4085
      %v4247 = vunpack.c.h.b16 %v4085
      %v4248 = vunpack.c.l.b16 %v4086
      %v4249 = vunpack.c.h.b16 %v4086
      %v4250 = vunpack.c.l.b16 %v4087
      %v4251 = vunpack.c.h.b16 %v4087
      %v4252 = vunpack.c.l.b16 %v4088
      %v4253 = vunpack.c.h.b16 %v4088
      %v4254 = vunpack.c.l.b16 %v4089
      %v4255 = vunpack.c.h.b16 %v4089
      %v4256 = vunpack.c.l.b16 %v4090
      %v4257 = vunpack.c.h.b16 %v4090
      %v4258 = vunpack.c.l.b16 %v4091
      %v4259 = vunpack.c.h.b16 %v4091
      %v4260 = vunpack.c.l.b16 %v4092
      %v4261 = vunpack.c.h.b16 %v4092
      %v4262 = vunpack.c.l.b16 %v4093
      %v4263 = vunpack.c.h.b16 %v4093
      %v4264 = vunpack.c.l.b16 %v4094
      %v4265 = vunpack.c.h.b16 %v4094
      %v4266 = vunpack.c.l.b16 %v4095
      %v4267 = vunpack.c.h.b16 %v4095
      %v4268 = vunpack.c.l.b16 %v4096
      %v4269 = vunpack.c.h.b16 %v4096
      %v4270 = vunpack.c.l.b16 %v4097
      %v4271 = vunpack.c.h.b16 %v4097
      %v4272 = vunpack.c.l.b16 %v4098
      %v4273 = vunpack.c.h.b16 %v4098
      %v4274 = vunpack.c.l.b16 %v4099
      %v4275 = vunpack.c.h.b16 %v4099
      %v4276 = vunpack.c.l.b16 %v4100
      %v4277 = vunpack.c.h.b16 %v4100
      %v4278 = vunpack.c.l.b16 %v4101
      %v4279 = vunpack.c.h.b16 %v4101
      %v4280 = vunpack.c.l.b16 %v4102
      %v4281 = vunpack.c.h.b16 %v4102
      %v4282 = vunpack.c.l.b16 %v4103
      %v4283 = vunpack.c.h.b16 %v4103
      %v4284 = vunpack.c.l.b16 %v4104
      %v4285 = vunpack.c.h.b16 %v4104
      %v4286 = vunpack.c.l.b16 %v4105
      %v4287 = vunpack.c.h.b16 %v4105
      %v4288 = vunpack.c.l.b16 %v4106
      %v4289 = vunpack.c.h.b16 %v4106
      %v4290 = vunpack.c.l.b16 %v4107
      %v4291 = vunpack.c.h.b16 %v4107
      %v4292 = vunpack.c.l.b16 %v4108
      %v4293 = vunpack.c.h.b16 %v4108
      %v4294 = vunpack.c.l.b16 %v4109
      %v4295 = vunpack.c.h.b16 %v4109
      %v4296 = vunpack.c.l.b16 %v4110
      %v4297 = vunpack.c.h.b16 %v4110
      %v4298 = vunpack.c.l.b16 %v4111
      %v4299 = vunpack.c.h.b16 %v4111
      %v4300 = vunpack.c.l.b16 %v4112
      %v4301 = vunpack.c.h.b16 %v4112
      %v4302 = vunpack.c.l.b16 %v4113
      %v4303 = vunpack.c.h.b16 %v4113
      %v4304 = vunpack.c.l.b16 %v4114
      %v4305 = vunpack.c.h.b16 %v4114
      %v4306 = vunpack.c.l.b16 %v4115
      %v4307 = vunpack.c.h.b16 %v4115
      %v4308 = vpack.c.b16 %v4184, %v4180
      %v4309 = vpack.c.b16 %v4185, %v4181
      %v4310 = vpack.c.b16 %v4186, %v4182
      %v4311 = vpack.c.b16 %v4187, %v4183
      %v4312 = vpack.c.b16 %v4192, %v4188
      %v4313 = vpack.c.b16 %v4193, %v4189
      %v4314 = vpack.c.b16 %v4194, %v4190
      %v4315 = vpack.c.b16 %v4195, %v4191
      %v4316 = vpack.c.b16 %v4200, %v4196
      %v4317 = vpack.c.b16 %v4201, %v4197
      %v4318 = vpack.c.b16 %v4202, %v4198
      %v4319 = vpack.c.b16 %v4203, %v4199
      %v4320 = vpack.c.b16 %v4208, %v4204
      %v4321 = vpack.c.b16 %v4209, %v4205
      %v4322 = vpack.c.b16 %v4210, %v4206
      %v4323 = vpack.c.b16 %v4211, %v4207
      %v4324 = vpack.c.b16 %v4216, %v4212
      %v4325 = vpack.c.b16 %v4217, %v4213
      %v4326 = vpack.c.b16 %v4218, %v4214
      %v4327 = vpack.c.b16 %v4219, %v4215
      %v4328 = vpack.c.b16 %v4224, %v4220
      %v4329 = vpack.c.b16 %v4225, %v4221
      %v4330 = vpack.c.b16 %v4226, %v4222
      %v4331 = vpack.c.b16 %v4227, %v4223
      %v4332 = vpack.c.b16 %v4232, %v4228
      %v4333 = vpack.c.b16 %v4233, %v4229
      %v4334 = vpack.c.b16 %v4234, %v4230
      %v4335 = vpack.c.b16 %v4235, %v4231
      %v4336 = vpack.c.b16 %v4240, %v4236
      %v4337 = vpack.c.b16 %v4241, %v4237
      %v4338 = vpack.c.b16 %v4242, %v4238
      %v4339 = vpack.c.b16 %v4243, %v4239
      %v4340 = vpack.c.b16 %v4248, %v4244
      %v4341 = vpack.c.b16 %v4249, %v4245
      %v4342 = vpack.c.b16 %v4250, %v4246
      %v4343 = vpack.c.b16 %v4251, %v4247
      %v4344 = vpack.c.b16 %v4256, %v4252
      %v4345 = vpack.c.b16 %v4257, %v4253
      %v4346 = vpack.c.b16 %v4258, %v4254
      %v4347 = vpack.c.b16 %v4259, %v4255
      %v4348 = vpack.c.b16 %v4264, %v4260
      %v4349 = vpack.c.b16 %v4265, %v4261
      %v4350 = vpack.c.b16 %v4266, %v4262
      %v4351 = vpack.c.b16 %v4267, %v4263
      %v4352 = vpack.c.b16 %v4272, %v4268
      %v4353 = vpack.c.b16 %v4273, %v4269
      %v4354 = vpack.c.b16 %v4274, %v4270
      %v4355 = vpack.c.b16 %v4275, %v4271
      %v4356 = vpack.c.b16 %v4280, %v4276
      %v4357 = vpack.c.b16 %v4281, %v4277
      %v4358 = vpack.c.b16 %v4282, %v4278
      %v4359 = vpack.c.b16 %v4283, %v4279
      %v4360 = vpack.c.b16 %v4288, %v4284
      %v4361 = vpack.c.b16 %v4289, %v4285
      %v4362 = vpack.c.b16 %v4290, %v4286
      %v4363 = vpack.c.b16 %v4291, %v4287
      %v4364 = vpack.c.b16 %v4296, %v4292
      %v4365 = vpack.c.b16 %v4297, %v4293
      %v4366 = vpack.c.b16 %v4298, %v4294
      %v4367 = vpack.c.b16 %v4299, %v4295
      %v4368 = vpack.c.b16 %v4304, %v4300
      %v4369 = vpack.c.b16 %v4305, %v4301
      %v4370 = vpack.c.b16 %v4306, %v4302
      %v4371 = vpack.c.b16 %v4307, %v4303
      %4436 = vmatpush.bf16.msra.mxu0 %v4336
      %4437 = vmatpush.bf16.msra.mxu0 %v4332
      %4438 = vmatpush.bf16.msra.mxu0 %v4328
      %4439 = vmatpush.bf16.msra.mxu0 %v4324
      %4440 = vmatpush.bf16.msra.mxu0 %v4320
      %4441 = vmatpush.bf16.msra.mxu0 %v4316
      %4442 = vmatpush.bf16.msra.mxu0 %v4312
      %4443 = vmatpush.bf16.msra.mxu0 %v4308
      %4444 = vmatmul.bf16.gmra.mxu0 %v4050
      %v4445 = vpop.f32.mrf.mxu0
      %v4446 = vadd.f32 0.0, %v4445
      %v4447 = vpop.f32.mrf.mxu0
      %4448 = vdwg.mxu0
      %4449 = vmatpush.bf16.msra.mxu0 %v4368
      %4450 = vmatpush.bf16.msra.mxu0 %v4364
      %4451 = vmatpush.bf16.msra.mxu0 %v4360
      %4452 = vmatpush.bf16.msra.mxu0 %v4356
      %4453 = vmatpush.bf16.msra.mxu0 %v4352
      %4454 = vmatpush.bf16.msra.mxu0 %v4348
      %4455 = vmatpush.bf16.msra.mxu0 %v4344
      %4456 = vmatpush.bf16.msra.mxu0 %v4340
      %4457 = vmatmul.bf16.gmra.mxu0 %v4051
      %v4458 = vpop.f32.mrf.mxu0
      %v4459 = vadd.f32 %v4446, %v4458
      %v4460 = vpop.f32.mrf.mxu0
      %4461 = vdwg.mxu0
      %4462 = vmatpush.bf16.msra.mxu0 %v4337
      %4463 = vmatpush.bf16.msra.mxu0 %v4333
      %4464 = vmatpush.bf16.msra.mxu0 %v4329
      %4465 = vmatpush.bf16.msra.mxu0 %v4325
      %4466 = vmatpush.bf16.msra.mxu0 %v4321
      %4467 = vmatpush.bf16.msra.mxu0 %v4317
      %4468 = vmatpush.bf16.msra.mxu0 %v4313
      %4469 = vmatpush.bf16.msra.mxu0 %v4309
      %4470 = vmatmul.bf16.gmra.mxu0 %v4050
      %v4471 = vpop.f32.mrf.mxu0
      %v4472 = vadd.f32 0.0, %v4471
      %v4473 = vpop.f32.mrf.mxu0
      %4474 = vdwg.mxu0
      %4475 = vmatpush.bf16.msra.mxu0 %v4369
      %4476 = vmatpush.bf16.msra.mxu0 %v4365
      %4477 = vmatpush.bf16.msra.mxu0 %v4361
      %4478 = vmatpush.bf16.msra.mxu0 %v4357
      %4479 = vmatpush.bf16.msra.mxu0 %v4353
      %4480 = vmatpush.bf16.msra.mxu0 %v4349
      %4481 = vmatpush.bf16.msra.mxu0 %v4345
      %4482 = vmatpush.bf16.msra.mxu0 %v4341
      %4483 = vmatmul.bf16.gmra.mxu0 %v4051
      %v4484 = vpop.f32.mrf.mxu0
      %v4485 = vadd.f32 %v4472, %v4484
      %v4486 = vpop.f32.mrf.mxu0
      %4487 = vdwg.mxu0
      %4488 = vmatpush.bf16.msra.mxu0 %v4338
      %4489 = vmatpush.bf16.msra.mxu0 %v4334
      %4490 = vmatpush.bf16.msra.mxu0 %v4330
      %4491 = vmatpush.bf16.msra.mxu0 %v4326
      %4492 = vmatpush.bf16.msra.mxu0 %v4322
      %4493 = vmatpush.bf16.msra.mxu0 %v4318
      %4494 = vmatpush.bf16.msra.mxu0 %v4314
      %4495 = vmatpush.bf16.msra.mxu0 %v4310
      %4496 = vmatmul.bf16.gmra.mxu0 %v4050
      %v4497 = vpop.f32.mrf.mxu0
      %v4498 = vadd.f32 0.0, %v4497
      %v4499 = vpop.f32.mrf.mxu0
      %4500 = vdwg.mxu0
      %4501 = vmatpush.bf16.msra.mxu0 %v4370
      %4502 = vmatpush.bf16.msra.mxu0 %v4366
      %4503 = vmatpush.bf16.msra.mxu0 %v4362
      %4504 = vmatpush.bf16.msra.mxu0 %v4358
      %4505 = vmatpush.bf16.msra.mxu0 %v4354
      %4506 = vmatpush.bf16.msra.mxu0 %v4350
      %4507 = vmatpush.bf16.msra.mxu0 %v4346
      %4508 = vmatpush.bf16.msra.mxu0 %v4342
      %4509 = vmatmul.bf16.gmra.mxu0 %v4051
      %v4510 = vpop.f32.mrf.mxu0
      %v4511 = vadd.f32 %v4498, %v4510
      %v4512 = vpop.f32.mrf.mxu0
      %4513 = vdwg.mxu0
      %4514 = vmatpush.bf16.msra.mxu0 %v4339
      %4515 = vmatpush.bf16.msra.mxu0 %v4335
      %4516 = vmatpush.bf16.msra.mxu0 %v4331
      %4517 = vmatpush.bf16.msra.mxu0 %v4327
      %4518 = vmatpush.bf16.msra.mxu0 %v4323
      %4519 = vmatpush.bf16.msra.mxu0 %v4319
      %4520 = vmatpush.bf16.msra.mxu0 %v4315
      %4521 = vmatpush.bf16.msra.mxu0 %v4311
      %4522 = vmatmul.bf16.gmra.mxu0 %v4050
      %v4523 = vpop.f32.mrf.mxu0
      %v4524 = vadd.f32 0.0, %v4523
      %v4525 = vpop.f32.mrf.mxu0
      %4526 = vdwg.mxu0
      %4527 = vmatpush.bf16.msra.mxu0 %v4371
      %4528 = vmatpush.bf16.msra.mxu0 %v4367
      %4529 = vmatpush.bf16.msra.mxu0 %v4363
      %4530 = vmatpush.bf16.msra.mxu0 %v4359
      %4531 = vmatpush.bf16.msra.mxu0 %v4355
      %4532 = vmatpush.bf16.msra.mxu0 %v4351
      %4533 = vmatpush.bf16.msra.mxu0 %v4347
      %4534 = vmatpush.bf16.msra.mxu0 %v4343
      %4535 = vmatmul.bf16.gmra.mxu0 %v4051
      %v4536 = vpop.f32.mrf.mxu0
      %v4537 = vadd.f32 %v4524, %v4536
      %v4538 = vpop.f32.mrf.mxu0
      %4539 = vdwg.mxu0
      %v4541 = vrot.slane %v4485, 4
      %v4544 = vrot.slane %v4537, 4
      %vm4546 = vcmask 1043456
      %v4547 = vsel %vm4546, %v4459, %v4541
      %v4548 = vsel %vm4546, %v4511, %v4544
      %v4549 = vld [vmem:[%s8] sm:$0x1]
      %v4551 = vperm.slane %v4549, 0
      %v4553 = vadd.f32 %v4547, %v4551
      %v4554 = vadd.f32 %v4548, %v4551
      %v4555 = vmul.f32 %v4553, 0.5
      %v4556 = vmul.f32 %v4554, 0.5
      %v4557 = vmul.f32 %v4553, %v4553
      %v4558 = vmul.f32 %v4554, %v4554
      %v4559 = vmul.f32 %v4557, %v4553
      %v4560 = vmul.f32 %v4558, %v4554
      %v4561 = vmul.f32 %v4559, 0.044715
      %v4562 = vmul.f32 %v4560, 0.044715
      %v4563 = vadd.f32 %v4553, %v4561
      %v4564 = vadd.f32 %v4554, %v4562
      %v4565 = vmul.f32 %v4563, 0.7978846
      %v4566 = vmul.f32 %v4564, 0.7978846
      %v4567 = vtanh.pop %v4565
      %v4568 = vtanh.pop %v4566
      %v4569 = vadd.f32 %v4567, 1.0
      %v4570 = vadd.f32 %v4568, 1.0
      %v4571 = vmul.f32 %v4555, %v4569
      %v4572 = vmul.f32 %v4556, %v4570
      %v4573 = vpack.c.bf16 %v4572, %v4571
      %v4574 = vld [vmem:[%s9] sm:$0xff]
      %v4575 = vld [vmem:[%s9 + $0x8] sm:$0xff]
      %v4576 = vld [vmem:[%s9 + $0x10] sm:$0xff]
      %v4577 = vld [vmem:[%s9 + $0x18] sm:$0xff]
      %v4578 = vld [vmem:[%s9 + $0x20] sm:$0xff]
      %v4579 = vld [vmem:[%s9 + $0x28] sm:$0xff]
      %v4580 = vld [vmem:[%s9 + $0x30] sm:$0xff]
      %v4581 = vld [vmem:[%s9 + $0x38] sm:$0xff]
      %v4582 = vld [vmem:[%s9 + $0x40] sm:$0xff]
      %v4583 = vld [vmem:[%s9 + $0x48] sm:$0xff]
      %v4584 = vld [vmem:[%s9 + $0x50] sm:$0xff]
      %v4585 = vld [vmem:[%s9 + $0x58] sm:$0xff]
      %v4586 = vld [vmem:[%s9 + $0x60] sm:$0xff]
      %v4587 = vld [vmem:[%s9 + $0x68] sm:$0xff]
      %v4588 = vld [vmem:[%s9 + $0x70] sm:$0xff]
      %v4589 = vld [vmem:[%s9 + $0x78] sm:$0xff]
      %v4606 = vunpack.c.l.b16 %v4574
      %v4607 = vunpack.c.h.b16 %v4574
      %v4608 = vunpack.c.l.b16 %v4575
      %v4609 = vunpack.c.h.b16 %v4575
      %v4610 = vunpack.c.l.b16 %v4576
      %v4611 = vunpack.c.h.b16 %v4576
      %v4612 = vunpack.c.l.b16 %v4577
      %v4613 = vunpack.c.h.b16 %v4577
      %v4614 = vunpack.c.l.b16 %v4578
      %v4615 = vunpack.c.h.b16 %v4578
      %v4616 = vunpack.c.l.b16 %v4579
      %v4617 = vunpack.c.h.b16 %v4579
      %v4618 = vunpack.c.l.b16 %v4580
      %v4619 = vunpack.c.h.b16 %v4580
      %v4620 = vunpack.c.l.b16 %v4581
      %v4621 = vunpack.c.h.b16 %v4581
      %v4622 = vunpack.c.l.b16 %v4582
      %v4623 = vunpack.c.h.b16 %v4582
      %v4624 = vunpack.c.l.b16 %v4583
      %v4625 = vunpack.c.h.b16 %v4583
      %v4626 = vunpack.c.l.b16 %v4584
      %v4627 = vunpack.c.h.b16 %v4584
      %v4628 = vunpack.c.l.b16 %v4585
      %v4629 = vunpack.c.h.b16 %v4585
      %v4630 = vunpack.c.l.b16 %v4586
      %v4631 = vunpack.c.h.b16 %v4586
      %v4632 = vunpack.c.l.b16 %v4587
      %v4633 = vunpack.c.h.b16 %v4587
      %v4634 = vunpack.c.l.b16 %v4588
      %v4635 = vunpack.c.h.b16 %v4588
      %v4636 = vunpack.c.l.b16 %v4589
      %v4637 = vunpack.c.h.b16 %v4589
      %v4638 = vpack.c.b16 %v4608, %v4606
      %v4639 = vpack.c.b16 %v4609, %v4607
      %v4640 = vpack.c.b16 %v4612, %v4610
      %v4641 = vpack.c.b16 %v4613, %v4611
      %v4642 = vpack.c.b16 %v4616, %v4614
      %v4643 = vpack.c.b16 %v4617, %v4615
      %v4644 = vpack.c.b16 %v4620, %v4618
      %v4645 = vpack.c.b16 %v4621, %v4619
      %v4646 = vpack.c.b16 %v4624, %v4622
      %v4647 = vpack.c.b16 %v4625, %v4623
      %v4648 = vpack.c.b16 %v4628, %v4626
      %v4649 = vpack.c.b16 %v4629, %v4627
      %v4650 = vpack.c.b16 %v4632, %v4630
      %v4651 = vpack.c.b16 %v4633, %v4631
      %v4652 = vpack.c.b16 %v4636, %v4634
      %v4653 = vpack.c.b16 %v4637, %v4635
      %4670 = vmatpush.bf16.msra.mxu0 %v4652
      %4671 = vmatpush.bf16.msra.mxu0 %v4650
      %4672 = vmatpush.bf16.msra.mxu0 %v4648
      %4673 = vmatpush.bf16.msra.mxu0 %v4646
      %4674 = vmatpush.bf16.msra.mxu0 %v4644
      %4675 = vmatpush.bf16.msra.mxu0 %v4642
      %4676 = vmatpush.bf16.msra.mxu0 %v4640
      %4677 = vmatpush.bf16.msra.mxu0 %v4638
      %4678 = vmatmul.bf16.gmra.mxu0 %v4573
      %v4679 = vpop.f32.mrf.mxu0
      %v4680 = vadd.f32 0.0, %v4679
      %v4681 = vpop.f32.mrf.mxu0
      %v4682 = vadd.f32 0.0, %v4681
      %4683 = vdwg.mxu0
      %4684 = vmatpush.bf16.msra.mxu0 %v4653
      %4685 = vmatpush.bf16.msra.mxu0 %v4651
      %4686 = vmatpush.bf16.msra.mxu0 %v4649
      %4687 = vmatpush.bf16.msra.mxu0 %v4647
      %4688 = vmatpush.bf16.msra.mxu0 %v4645
      %4689 = vmatpush.bf16.msra.mxu0 %v4643
      %4690 = vmatpush.bf16.msra.mxu0 %v4641
      %4691 = vmatpush.bf16.msra.mxu0 %v4639
      %4692 = vmatmul.bf16.gmra.mxu0 %v4573
      %v4693 = vpop.f32.mrf.mxu0
      %v4694 = vadd.f32 0.0, %v4693
      %v4695 = vpop.f32.mrf.mxu0
      %v4696 = vadd.f32 0.0, %v4695
      %4697 = vdwg.mxu0
      %4700 = vrot.lane.b32.xlu0 %v4680, 64
      %v4701 = vpop.permute.xlu0 %4700
      %4702 = vrot.lane.b32.xlu0 %v4682, 64
      %v4703 = vpop.permute.xlu0 %4702
      %4708 = vrot.lane.b32.xlu0 %v4694, 64
      %v4709 = vpop.permute.xlu0 %4708
      %4710 = vrot.lane.b32.xlu0 %v4696, 64
      %v4711 = vpop.permute.xlu0 %4710
      %v4714 = vld [vmem:[%s10] sm:$0x1]
      %v4716 = vperm.slane %v4714, 0
      %v4718 = vadd.f32 %v4680, %v4716
      %v4719 = vadd.f32 %v4682, %v4716
      %v4720 = vadd.f32 %v4701, %v4716
      %v4721 = vadd.f32 %v4703, %v4716
      %v4722 = vadd.f32 %v4694, %v4716
      %v4723 = vadd.f32 %v4696, %v4716
      %v4724 = vadd.f32 %v4709, %v4716
      %v4725 = vadd.f32 %v4711, %v4716
      %v4726 = vmul.f32 %v4718, 0.5
      %v4727 = vmul.f32 %v4719, 0.5
      %v4728 = vmul.f32 %v4720, 0.5
      %v4729 = vmul.f32 %v4721, 0.5
      %v4730 = vmul.f32 %v4722, 0.5
      %v4731 = vmul.f32 %v4723, 0.5
      %v4732 = vmul.f32 %v4724, 0.5
      %v4733 = vmul.f32 %v4725, 0.5
      %v4734 = vmul.f32 %v4718, %v4718
      %v4735 = vmul.f32 %v4719, %v4719
      %v4736 = vmul.f32 %v4720, %v4720
      %v4737 = vmul.f32 %v4721, %v4721
      %v4738 = vmul.f32 %v4722, %v4722
      %v4739 = vmul.f32 %v4723, %v4723
      %v4740 = vmul.f32 %v4724, %v4724
      %v4741 = vmul.f32 %v4725, %v4725
      %v4742 = vmul.f32 %v4734, %v4718
      %v4743 = vmul.f32 %v4735, %v4719
      %v4744 = vmul.f32 %v4736, %v4720
      %v4745 = vmul.f32 %v4737, %v4721
      %v4746 = vmul.f32 %v4738, %v4722
      %v4747 = vmul.f32 %v4739, %v4723
      %v4748 = vmul.f32 %v4740, %v4724
      %v4749 = vmul.f32 %v4741, %v4725
      %v4750 = vmul.f32 %v4742, 0.044715
      %v4751 = vmul.f32 %v4743, 0.044715
      %v4752 = vmul.f32 %v4744, 0.044715
      %v4753 = vmul.f32 %v4745, 0.044715
      %v4754 = vmul.f32 %v4746, 0.044715
      %v4755 = vmul.f32 %v4747, 0.044715
      %v4756 = vmul.f32 %v4748, 0.044715
      %v4757 = vmul.f32 %v4749, 0.044715
      %v4758 = vadd.f32 %v4718, %v4750
      %v4759 = vadd.f32 %v4719, %v4751
      %v4760 = vadd.f32 %v4720, %v4752
      %v4761 = vadd.f32 %v4721, %v4753
      %v4762 = vadd.f32 %v4722, %v4754
      %v4763 = vadd.f32 %v4723, %v4755
      %v4764 = vadd.f32 %v4724, %v4756
      %v4765 = vadd.f32 %v4725, %v4757
      %v4766 = vmul.f32 %v4758, 0.7978846
      %v4767 = vmul.f32 %v4759, 0.7978846
      %v4768 = vmul.f32 %v4760, 0.7978846
      %v4769 = vmul.f32 %v4761, 0.7978846
      %v4770 = vmul.f32 %v4762, 0.7978846
      %v4771 = vmul.f32 %v4763, 0.7978846
      %v4772 = vmul.f32 %v4764, 0.7978846
      %v4773 = vmul.f32 %v4765, 0.7978846
      %v4774 = vtanh.pop %v4766
      %v4775 = vtanh.pop %v4767
      %v4776 = vtanh.pop %v4768
      %v4777 = vtanh.pop %v4769
      %v4778 = vtanh.pop %v4770
      %v4779 = vtanh.pop %v4771
      %v4780 = vtanh.pop %v4772
      %v4781 = vtanh.pop %v4773
      %v4782 = vadd.f32 %v4774, 1.0
      %v4783 = vadd.f32 %v4775, 1.0
      %v4784 = vadd.f32 %v4776, 1.0
      %v4785 = vadd.f32 %v4777, 1.0
      %v4786 = vadd.f32 %v4778, 1.0
      %v4787 = vadd.f32 %v4779, 1.0
      %v4788 = vadd.f32 %v4780, 1.0
      %v4789 = vadd.f32 %v4781, 1.0
      %v4790 = vmul.f32 %v4726, %v4782
      %v4791 = vmul.f32 %v4727, %v4783
      %v4792 = vmul.f32 %v4728, %v4784
      %v4793 = vmul.f32 %v4729, %v4785
      %v4794 = vmul.f32 %v4730, %v4786
      %v4795 = vmul.f32 %v4731, %v4787
      %v4796 = vmul.f32 %v4732, %v4788
      %v4797 = vmul.f32 %v4733, %v4789
      %v4798 = vpack.c.bf16 %v4791, %v4790
      %v4799 = vpack.c.bf16 %v4793, %v4792
      %v4800 = vpack.c.bf16 %v4795, %v4794
      %v4801 = vpack.c.bf16 %v4797, %v4796
      %v4802 = vld [vmem:[%s11] sm:$0xf]
      %v4803 = vld [vmem:[%s11 + $0x4] sm:$0xf]
      %v4804 = vld [vmem:[%s11 + $0x8] sm:$0xf]
      %v4805 = vld [vmem:[%s11 + $0xc] sm:$0xf]
      %v4806 = vld [vmem:[%s11 + $0x10] sm:$0xf]
      %v4807 = vld [vmem:[%s11 + $0x14] sm:$0xf]
      %v4808 = vld [vmem:[%s11 + $0x18] sm:$0xf]
      %v4809 = vld [vmem:[%s11 + $0x1c] sm:$0xf]
      %v4818 = vunpack.c.l.b16 %v4802
      %v4819 = vunpack.c.l.b16 %v4803
      %v4820 = vunpack.c.l.b16 %v4804
      %v4821 = vunpack.c.l.b16 %v4805
      %v4822 = vunpack.c.l.b16 %v4806
      %v4823 = vunpack.c.l.b16 %v4807
      %v4824 = vunpack.c.l.b16 %v4808
      %v4825 = vunpack.c.l.b16 %v4809
      %v4826 = vpack.c.b16 %v4819, %v4818
      %v4827 = vpack.c.b16 %v4821, %v4820
      %v4828 = vpack.c.b16 %v4823, %v4822
      %v4829 = vpack.c.b16 %v4825, %v4824
      %v4835 = vsel %vm1278, %v4798, 0
      %v4838 = vsel %vm1278, %v4799, 0
      %v4841 = vsel %vm1278, %v4800, 0
      %v4844 = vsel %vm1278, %v4801, 0
      %4846 = vmatpush.bf16.msra.mxu0 0
      %4847 = vmatpush.bf16.msra.mxu0 0
      %4848 = vmatpush.bf16.msra.mxu0 0
      %4849 = vmatpush.bf16.msra.mxu0 0
      %4850 = vmatpush.bf16.msra.mxu0 %v4829
      %4851 = vmatpush.bf16.msra.mxu0 %v4828
      %4852 = vmatpush.bf16.msra.mxu0 %v4827
      %4853 = vmatpush.bf16.msra.mxu0 %v4826
      %4854 = vmatmul.bf16.gmra.mxu0 %v4835
      %v4855 = vpop.f32.mrf.mxu0
      %v4856 = vadd.f32 0.0, %v4855
      %v4857 = vpop.f32.mrf.mxu0
      %v4858 = vadd.f32 0.0, %v4857
      %4859 = vmatmul.bf16.gmra.mxu0 %v4838
      %v4860 = vpop.f32.mrf.mxu0
      %v4861 = vadd.f32 0.0, %v4860
      %v4862 = vpop.f32.mrf.mxu0
      %v4863 = vadd.f32 0.0, %v4862
      %4864 = vmatmul.bf16.gmra.mxu0 %v4841
      %v4865 = vpop.f32.mrf.mxu0
      %v4866 = vadd.f32 0.0, %v4865
      %v4867 = vpop.f32.mrf.mxu0
      %v4868 = vadd.f32 0.0, %v4867
      %4869 = vmatmul.bf16.gmra.mxu0 %v4844
      %v4870 = vpop.f32.mrf.mxu0
      %v4871 = vadd.f32 0.0, %v4870
      %v4872 = vpop.f32.mrf.mxu0
      %v4873 = vadd.f32 0.0, %v4872
      %4874 = vdwg.mxu0
      %4883 = vrot.lane.b32.xlu0 %v4856, 96
      %v4884 = vpop.permute.xlu0 %4883
      %4885 = vrot.lane.b32.xlu0 %v4858, 96
      %v4886 = vpop.permute.xlu0 %4885
      %4887 = vrot.lane.b32.xlu0 %v4861, 96
      %v4888 = vpop.permute.xlu0 %4887
      %4889 = vrot.lane.b32.xlu0 %v4863, 96
      %v4890 = vpop.permute.xlu0 %4889
      %4891 = vrot.lane.b32.xlu0 %v4866, 96
      %v4892 = vpop.permute.xlu0 %4891
      %4893 = vrot.lane.b32.xlu0 %v4868, 96
      %v4894 = vpop.permute.xlu0 %4893
      %4895 = vrot.lane.b32.xlu0 %v4871, 96
      %v4896 = vpop.permute.xlu0 %4895
      %4897 = vrot.lane.b32.xlu0 %v4873, 96
      %v4898 = vpop.permute.xlu0 %4897
      %4907 = vrot.lane.b32.xlu0 %v4856, 64
      %v4908 = vpop.permute.xlu0 %4907
      %4909 = vrot.lane.b32.xlu0 %v4858, 64
      %v4910 = vpop.permute.xlu0 %4909
      %4911 = vrot.lane.b32.xlu0 %v4861, 64
      %v4912 = vpop.permute.xlu0 %4911
      %4913 = vrot.lane.b32.xlu0 %v4863, 64
      %v4914 = vpop.permute.xlu0 %4913
      %4915 = vrot.lane.b32.xlu0 %v4866, 64
      %v4916 = vpop.permute.xlu0 %4915
      %4917 = vrot.lane.b32.xlu0 %v4868, 64
      %v4918 = vpop.permute.xlu0 %4917
      %4919 = vrot.lane.b32.xlu0 %v4871, 64
      %v4920 = vpop.permute.xlu0 %4919
      %4921 = vrot.lane.b32.xlu0 %v4873, 64
      %v4922 = vpop.permute.xlu0 %4921
      %4931 = vrot.lane.b32.xlu0 %v4856, 32
      %v4932 = vpop.permute.xlu0 %4931
      %4933 = vrot.lane.b32.xlu0 %v4858, 32
      %v4934 = vpop.permute.xlu0 %4933
      %4935 = vrot.lane.b32.xlu0 %v4861, 32
      %v4936 = vpop.permute.xlu0 %4935
      %4937 = vrot.lane.b32.xlu0 %v4863, 32
      %v4938 = vpop.permute.xlu0 %4937
      %4939 = vrot.lane.b32.xlu0 %v4866, 32
      %v4940 = vpop.permute.xlu0 %4939
      %4941 = vrot.lane.b32.xlu0 %v4868, 32
      %v4942 = vpop.permute.xlu0 %4941
      %4943 = vrot.lane.b32.xlu0 %v4871, 32
      %v4944 = vpop.permute.xlu0 %4943
      %4945 = vrot.lane.b32.xlu0 %v4873, 32
      %v4946 = vpop.permute.xlu0 %4945
      %v4955 = vld [vmem:[%s12] sm:$0x1]
      %v4957 = vperm.slane %v4955, 0
      %v4959 = vadd.f32 %v4856, %v4957
      %v4960 = vadd.f32 %v4858, %v4957
      %v4961 = vadd.f32 %v4861, %v4957
      %v4962 = vadd.f32 %v4863, %v4957
      %v4963 = vadd.f32 %v4866, %v4957
      %v4964 = vadd.f32 %v4868, %v4957
      %v4965 = vadd.f32 %v4871, %v4957
      %v4966 = vadd.f32 %v4873, %v4957
      %v4967 = vadd.f32 %v4884, %v4957
      %v4968 = vadd.f32 %v4886, %v4957
      %v4969 = vadd.f32 %v4888, %v4957
      %v4970 = vadd.f32 %v4890, %v4957
      %v4971 = vadd.f32 %v4892, %v4957
      %v4972 = vadd.f32 %v4894, %v4957
      %v4973 = vadd.f32 %v4896, %v4957
      %v4974 = vadd.f32 %v4898, %v4957
      %v4975 = vadd.f32 %v4908, %v4957
      %v4976 = vadd.f32 %v4910, %v4957
      %v4977 = vadd.f32 %v4912, %v4957
      %v4978 = vadd.f32 %v4914, %v4957
      %v4979 = vadd.f32 %v4916, %v4957
      %v4980 = vadd.f32 %v4918, %v4957
      %v4981 = vadd.f32 %v4920, %v4957
      %v4982 = vadd.f32 %v4922, %v4957
      %v4983 = vadd.f32 %v4932, %v4957
      %v4984 = vadd.f32 %v4934, %v4957
      %v4985 = vadd.f32 %v4936, %v4957
      %v4986 = vadd.f32 %v4938, %v4957
      %v4987 = vadd.f32 %v4940, %v4957
      %v4988 = vadd.f32 %v4942, %v4957
      %v4989 = vadd.f32 %v4944, %v4957
      %v4990 = vadd.f32 %v4946, %v4957
      %v4991 = vmul.f32 %v4959, 0.5
      %v4992 = vmul.f32 %v4960, 0.5
      %v4993 = vmul.f32 %v4961, 0.5
      %v4994 = vmul.f32 %v4962, 0.5
      %v4995 = vmul.f32 %v4963, 0.5
      %v4996 = vmul.f32 %v4964, 0.5
      %v4997 = vmul.f32 %v4965, 0.5
      %v4998 = vmul.f32 %v4966, 0.5
      %v4999 = vmul.f32 %v4967, 0.5
      %v5000 = vmul.f32 %v4968, 0.5
      %v5001 = vmul.f32 %v4969, 0.5
      %v5002 = vmul.f32 %v4970, 0.5
      %v5003 = vmul.f32 %v4971, 0.5
      %v5004 = vmul.f32 %v4972, 0.5
      %v5005 = vmul.f32 %v4973, 0.5
      %v5006 = vmul.f32 %v4974, 0.5
      %v5007 = vmul.f32 %v4975, 0.5
      %v5008 = vmul.f32 %v4976, 0.5
      %v5009 = vmul.f32 %v4977, 0.5
      %v5010 = vmul.f32 %v4978, 0.5
      %v5011 = vmul.f32 %v4979, 0.5
      %v5012 = vmul.f32 %v4980, 0.5
      %v5013 = vmul.f32 %v4981, 0.5
      %v5014 = vmul.f32 %v4982, 0.5
      %v5015 = vmul.f32 %v4983, 0.5
      %v5016 = vmul.f32 %v4984, 0.5
      %v5017 = vmul.f32 %v4985, 0.5
      %v5018 = vmul.f32 %v4986, 0.5
      %v5019 = vmul.f32 %v4987, 0.5
      %v5020 = vmul.f32 %v4988, 0.5
      %v5021 = vmul.f32 %v4989, 0.5
      %v5022 = vmul.f32 %v4990, 0.5
      %v5023 = vmul.f32 %v4959, %v4959
      %v5024 = vmul.f32 %v4960, %v4960
      %v5025 = vmul.f32 %v4961, %v4961
      %v5026 = vmul.f32 %v4962, %v4962
      %v5027 = vmul.f32 %v4963, %v4963
      %v5028 = vmul.f32 %v4964, %v4964
      %v5029 = vmul.f32 %v4965, %v4965
      %v5030 = vmul.f32 %v4966, %v4966
      %v5031 = vmul.f32 %v4967, %v4967
      %v5032 = vmul.f32 %v4968, %v4968
      %v5033 = vmul.f32 %v4969, %v4969
      %v5034 = vmul.f32 %v4970, %v4970
      %v5035 = vmul.f32 %v4971, %v4971
      %v5036 = vmul.f32 %v4972, %v4972
      %v5037 = vmul.f32 %v4973, %v4973
      %v5038 = vmul.f32 %v4974, %v4974
      %v5039 = vmul.f32 %v4975, %v4975
      %v5040 = vmul.f32 %v4976, %v4976
      %v5041 = vmul.f32 %v4977, %v4977
      %v5042 = vmul.f32 %v4978, %v4978
      %v5043 = vmul.f32 %v4979, %v4979
      %v5044 = vmul.f32 %v4980, %v4980
      %v5045 = vmul.f32 %v4981, %v4981
      %v5046 = vmul.f32 %v4982, %v4982
      %v5047 = vmul.f32 %v4983, %v4983
      %v5048 = vmul.f32 %v4984, %v4984
      %v5049 = vmul.f32 %v4985, %v4985
      %v5050 = vmul.f32 %v4986, %v4986
      %v5051 = vmul.f32 %v4987, %v4987
      %v5052 = vmul.f32 %v4988, %v4988
      %v5053 = vmul.f32 %v4989, %v4989
      %v5054 = vmul.f32 %v4990, %v4990
      %v5055 = vmul.f32 %v5023, %v4959
      %v5056 = vmul.f32 %v5024, %v4960
      %v5057 = vmul.f32 %v5025, %v4961
      %v5058 = vmul.f32 %v5026, %v4962
      %v5059 = vmul.f32 %v5027, %v4963
      %v5060 = vmul.f32 %v5028, %v4964
      %v5061 = vmul.f32 %v5029, %v4965
      %v5062 = vmul.f32 %v5030, %v4966
      %v5063 = vmul.f32 %v5031, %v4967
      %v5064 = vmul.f32 %v5032, %v4968
      %v5065 = vmul.f32 %v5033, %v4969
      %v5066 = vmul.f32 %v5034, %v4970
      %v5067 = vmul.f32 %v5035, %v4971
      %v5068 = vmul.f32 %v5036, %v4972
      %v5069 = vmul.f32 %v5037, %v4973
      %v5070 = vmul.f32 %v5038, %v4974
      %v5071 = vmul.f32 %v5039, %v4975
      %v5072 = vmul.f32 %v5040, %v4976
      %v5073 = vmul.f32 %v5041, %v4977
      %v5074 = vmul.f32 %v5042, %v4978
      %v5075 = vmul.f32 %v5043, %v4979
      %v5076 = vmul.f32 %v5044, %v4980
      %v5077 = vmul.f32 %v5045, %v4981
      %v5078 = vmul.f32 %v5046, %v4982
      %v5079 = vmul.f32 %v5047, %v4983
      %v5080 = vmul.f32 %v5048, %v4984
      %v5081 = vmul.f32 %v5049, %v4985
      %v5082 = vmul.f32 %v5050, %v4986
      %v5083 = vmul.f32 %v5051, %v4987
      %v5084 = vmul.f32 %v5052, %v4988
      %v5085 = vmul.f32 %v5053, %v4989
      %v5086 = vmul.f32 %v5054, %v4990
      %v5087 = vmul.f32 %v5055, 0.044715
      %v5088 = vmul.f32 %v5056, 0.044715
      %v5089 = vmul.f32 %v5057, 0.044715
      %v5090 = vmul.f32 %v5058, 0.044715
      %v5091 = vmul.f32 %v5059, 0.044715
      %v5092 = vmul.f32 %v5060, 0.044715
      %v5093 = vmul.f32 %v5061, 0.044715
      %v5094 = vmul.f32 %v5062, 0.044715
      %v5095 = vmul.f32 %v5063, 0.044715
      %v5096 = vmul.f32 %v5064, 0.044715
      %v5097 = vmul.f32 %v5065, 0.044715
      %v5098 = vmul.f32 %v5066, 0.044715
      %v5099 = vmul.f32 %v5067, 0.044715
      %v5100 = vmul.f32 %v5068, 0.044715
      %v5101 = vmul.f32 %v5069, 0.044715
      %v5102 = vmul.f32 %v5070, 0.044715
      %v5103 = vmul.f32 %v5071, 0.044715
      %v5104 = vmul.f32 %v5072, 0.044715
      %v5105 = vmul.f32 %v5073, 0.044715
      %v5106 = vmul.f32 %v5074, 0.044715
      %v5107 = vmul.f32 %v5075, 0.044715
      %v5108 = vmul.f32 %v5076, 0.044715
      %v5109 = vmul.f32 %v5077, 0.044715
      %v5110 = vmul.f32 %v5078, 0.044715
      %v5111 = vmul.f32 %v5079, 0.044715
      %v5112 = vmul.f32 %v5080, 0.044715
      %v5113 = vmul.f32 %v5081, 0.044715
      %v5114 = vmul.f32 %v5082, 0.044715
      %v5115 = vmul.f32 %v5083, 0.044715
      %v5116 = vmul.f32 %v5084, 0.044715
      %v5117 = vmul.f32 %v5085, 0.044715
      %v5118 = vmul.f32 %v5086, 0.044715
      %v5119 = vadd.f32 %v4959, %v5087
      %v5120 = vadd.f32 %v4960, %v5088
      %v5121 = vadd.f32 %v4961, %v5089
      %v5122 = vadd.f32 %v4962, %v5090
      %v5123 = vadd.f32 %v4963, %v5091
      %v5124 = vadd.f32 %v4964, %v5092
      %v5125 = vadd.f32 %v4965, %v5093
      %v5126 = vadd.f32 %v4966, %v5094
      %v5127 = vadd.f32 %v4967, %v5095
      %v5128 = vadd.f32 %v4968, %v5096
      %v5129 = vadd.f32 %v4969, %v5097
      %v5130 = vadd.f32 %v4970, %v5098
      %v5131 = vadd.f32 %v4971, %v5099
      %v5132 = vadd.f32 %v4972, %v5100
      %v5133 = vadd.f32 %v4973, %v5101
      %v5134 = vadd.f32 %v4974, %v5102
      %v5135 = vadd.f32 %v4975, %v5103
      %v5136 = vadd.f32 %v4976, %v5104
      %v5137 = vadd.f32 %v4977, %v5105
      %v5138 = vadd.f32 %v4978, %v5106
      %v5139 = vadd.f32 %v4979, %v5107
      %v5140 = vadd.f32 %v4980, %v5108
      %v5141 = vadd.f32 %v4981, %v5109
      %v5142 = vadd.f32 %v4982, %v5110
      %v5143 = vadd.f32 %v4983, %v5111
      %v5144 = vadd.f32 %v4984, %v5112
      %v5145 = vadd.f32 %v4985, %v5113
      %v5146 = vadd.f32 %v4986, %v5114
      %v5147 = vadd.f32 %v4987, %v5115
      %v5148 = vadd.f32 %v4988, %v5116
      %v5149 = vadd.f32 %v4989, %v5117
      %v5150 = vadd.f32 %v4990, %v5118
      %v5151 = vmul.f32 %v5119, 0.7978846
      %v5152 = vmul.f32 %v5120, 0.7978846
      %v5153 = vmul.f32 %v5121, 0.7978846
      %v5154 = vmul.f32 %v5122, 0.7978846
      %v5155 = vmul.f32 %v5123, 0.7978846
      %v5156 = vmul.f32 %v5124, 0.7978846
      %v5157 = vmul.f32 %v5125, 0.7978846
      %v5158 = vmul.f32 %v5126, 0.7978846
      %v5159 = vmul.f32 %v5127, 0.7978846
      %v5160 = vmul.f32 %v5128, 0.7978846
      %v5161 = vmul.f32 %v5129, 0.7978846
      %v5162 = vmul.f32 %v5130, 0.7978846
      %v5163 = vmul.f32 %v5131, 0.7978846
      %v5164 = vmul.f32 %v5132, 0.7978846
      %v5165 = vmul.f32 %v5133, 0.7978846
      %v5166 = vmul.f32 %v5134, 0.7978846
      %v5167 = vmul.f32 %v5135, 0.7978846
      %v5168 = vmul.f32 %v5136, 0.7978846
      %v5169 = vmul.f32 %v5137, 0.7978846
      %v5170 = vmul.f32 %v5138, 0.7978846
      %v5171 = vmul.f32 %v5139, 0.7978846
      %v5172 = vmul.f32 %v5140, 0.7978846
      %v5173 = vmul.f32 %v5141, 0.7978846
      %v5174 = vmul.f32 %v5142, 0.7978846
      %v5175 = vmul.f32 %v5143, 0.7978846
      %v5176 = vmul.f32 %v5144, 0.7978846
      %v5177 = vmul.f32 %v5145, 0.7978846
      %v5178 = vmul.f32 %v5146, 0.7978846
      %v5179 = vmul.f32 %v5147, 0.7978846
      %v5180 = vmul.f32 %v5148, 0.7978846
      %v5181 = vmul.f32 %v5149, 0.7978846
      %v5182 = vmul.f32 %v5150, 0.7978846
      %v5183 = vtanh.pop %v5151
      %v5184 = vtanh.pop %v5152
      %v5185 = vtanh.pop %v5153
      %v5186 = vtanh.pop %v5154
      %v5187 = vtanh.pop %v5155
      %v5188 = vtanh.pop %v5156
      %v5189 = vtanh.pop %v5157
      %v5190 = vtanh.pop %v5158
      %v5191 = vtanh.pop %v5159
      %v5192 = vtanh.pop %v5160
      %v5193 = vtanh.pop %v5161
      %v5194 = vtanh.pop %v5162
      %v5195 = vtanh.pop %v5163
      %v5196 = vtanh.pop %v5164
      %v5197 = vtanh.pop %v5165
      %v5198 = vtanh.pop %v5166
      %v5199 = vtanh.pop %v5167
      %v5200 = vtanh.pop %v5168
      %v5201 = vtanh.pop %v5169
      %v5202 = vtanh.pop %v5170
      %v5203 = vtanh.pop %v5171
      %v5204 = vtanh.pop %v5172
      %v5205 = vtanh.pop %v5173
      %v5206 = vtanh.pop %v5174
      %v5207 = vtanh.pop %v5175
      %v5208 = vtanh.pop %v5176
      %v5209 = vtanh.pop %v5177
      %v5210 = vtanh.pop %v5178
      %v5211 = vtanh.pop %v5179
      %v5212 = vtanh.pop %v5180
      %v5213 = vtanh.pop %v5181
      %v5214 = vtanh.pop %v5182
      %v5215 = vadd.f32 %v5183, 1.0
      %v5216 = vadd.f32 %v5184, 1.0
      %v5217 = vadd.f32 %v5185, 1.0
      %v5218 = vadd.f32 %v5186, 1.0
      %v5219 = vadd.f32 %v5187, 1.0
      %v5220 = vadd.f32 %v5188, 1.0
      %v5221 = vadd.f32 %v5189, 1.0
      %v5222 = vadd.f32 %v5190, 1.0
      %v5223 = vadd.f32 %v5191, 1.0
      %v5224 = vadd.f32 %v5192, 1.0
      %v5225 = vadd.f32 %v5193, 1.0
      %v5226 = vadd.f32 %v5194, 1.0
      %v5227 = vadd.f32 %v5195, 1.0
      %v5228 = vadd.f32 %v5196, 1.0
      %v5229 = vadd.f32 %v5197, 1.0
      %v5230 = vadd.f32 %v5198, 1.0
      %v5231 = vadd.f32 %v5199, 1.0
      %v5232 = vadd.f32 %v5200, 1.0
      %v5233 = vadd.f32 %v5201, 1.0
      %v5234 = vadd.f32 %v5202, 1.0
      %v5235 = vadd.f32 %v5203, 1.0
      %v5236 = vadd.f32 %v5204, 1.0
      %v5237 = vadd.f32 %v5205, 1.0
      %v5238 = vadd.f32 %v5206, 1.0
      %v5239 = vadd.f32 %v5207, 1.0
      %v5240 = vadd.f32 %v5208, 1.0
      %v5241 = vadd.f32 %v5209, 1.0
      %v5242 = vadd.f32 %v5210, 1.0
      %v5243 = vadd.f32 %v5211, 1.0
      %v5244 = vadd.f32 %v5212, 1.0
      %v5245 = vadd.f32 %v5213, 1.0
      %v5246 = vadd.f32 %v5214, 1.0
      %v5247 = vmul.f32 %v4991, %v5215
      %v5248 = vmul.f32 %v4992, %v5216
      %v5249 = vmul.f32 %v4993, %v5217
      %v5250 = vmul.f32 %v4994, %v5218
      %v5251 = vmul.f32 %v4995, %v5219
      %v5252 = vmul.f32 %v4996, %v5220
      %v5253 = vmul.f32 %v4997, %v5221
      %v5254 = vmul.f32 %v4998, %v5222
      %v5255 = vmul.f32 %v4999, %v5223
      %v5256 = vmul.f32 %v5000, %v5224
      %v5257 = vmul.f32 %v5001, %v5225
      %v5258 = vmul.f32 %v5002, %v5226
      %v5259 = vmul.f32 %v5003, %v5227
      %v5260 = vmul.f32 %v5004, %v5228
      %v5261 = vmul.f32 %v5005, %v5229
      %v5262 = vmul.f32 %v5006, %v5230
      %v5263 = vmul.f32 %v5007, %v5231
      %v5264 = vmul.f32 %v5008, %v5232
      %v5265 = vmul.f32 %v5009, %v5233
      %v5266 = vmul.f32 %v5010, %v5234
      %v5267 = vmul.f32 %v5011, %v5235
      %v5268 = vmul.f32 %v5012, %v5236
      %v5269 = vmul.f32 %v5013, %v5237
      %v5270 = vmul.f32 %v5014, %v5238
      %v5271 = vmul.f32 %v5015, %v5239
      %v5272 = vmul.f32 %v5016, %v5240
      %v5273 = vmul.f32 %v5017, %v5241
      %v5274 = vmul.f32 %v5018, %v5242
      %v5275 = vmul.f32 %v5019, %v5243
      %v5276 = vmul.f32 %v5020, %v5244
      %v5277 = vmul.f32 %v5021, %v5245
      %v5278 = vmul.f32 %v5022, %v5246
      %v5279 = vld [vmem:[%s13] sm:$0x1]
      %v5281 = vperm.slane %v5279, 0
      %v5283 = vmul.f32 %v5247, %v5281
      %v5284 = vmul.f32 %v5248, %v5281
      %v5285 = vmul.f32 %v5249, %v5281
      %v5286 = vmul.f32 %v5250, %v5281
      %v5287 = vmul.f32 %v5251, %v5281
      %v5288 = vmul.f32 %v5252, %v5281
      %v5289 = vmul.f32 %v5253, %v5281
      %v5290 = vmul.f32 %v5254, %v5281
      %v5291 = vmul.f32 %v5255, %v5281
      %v5292 = vmul.f32 %v5256, %v5281
      %v5293 = vmul.f32 %v5257, %v5281
      %v5294 = vmul.f32 %v5258, %v5281
      %v5295 = vmul.f32 %v5259, %v5281
      %v5296 = vmul.f32 %v5260, %v5281
      %v5297 = vmul.f32 %v5261, %v5281
      %v5298 = vmul.f32 %v5262, %v5281
      %v5299 = vmul.f32 %v5263, %v5281
      %v5300 = vmul.f32 %v5264, %v5281
      %v5301 = vmul.f32 %v5265, %v5281
      %v5302 = vmul.f32 %v5266, %v5281
      %v5303 = vmul.f32 %v5267, %v5281
      %v5304 = vmul.f32 %v5268, %v5281
      %v5305 = vmul.f32 %v5269, %v5281
      %v5306 = vmul.f32 %v5270, %v5281
      %v5307 = vmul.f32 %v5271, %v5281
      %v5308 = vmul.f32 %v5272, %v5281
      %v5309 = vmul.f32 %v5273, %v5281
      %v5310 = vmul.f32 %v5274, %v5281
      %v5311 = vmul.f32 %v5275, %v5281
      %v5312 = vmul.f32 %v5276, %v5281
      %v5313 = vmul.f32 %v5277, %v5281
      %v5314 = vmul.f32 %v5278, %v5281
      %vm5315 = vcmask 261120
      %v5316 = vsel %vm5315, %v5283, 0.0
      %5317 = vadd.xlane.f32.xlu0 %v5316
      %v5318 = vpop.xlane.xlu0 %5317
      %v5319 = vsel %vm5315, %v5284, 0.0
      %5320 = vadd.xlane.f32.xlu0 %v5319
      %v5321 = vpop.xlane.xlu0 %5320
      %v5322 = vsel %vm5315, %v5285, 0.0
      %5323 = vadd.xlane.f32.xlu0 %v5322
      %v5324 = vpop.xlane.xlu0 %5323
      %v5325 = vsel %vm5315, %v5286, 0.0
      %5326 = vadd.xlane.f32.xlu0 %v5325
      %v5327 = vpop.xlane.xlu0 %5326
      %v5328 = vsel %vm5315, %v5287, 0.0
      %5329 = vadd.xlane.f32.xlu0 %v5328
      %v5330 = vpop.xlane.xlu0 %5329
      %v5331 = vsel %vm5315, %v5288, 0.0
      %5332 = vadd.xlane.f32.xlu0 %v5331
      %v5333 = vpop.xlane.xlu0 %5332
      %v5334 = vsel %vm5315, %v5289, 0.0
      %5335 = vadd.xlane.f32.xlu0 %v5334
      %v5336 = vpop.xlane.xlu0 %5335
      %v5337 = vsel %vm5315, %v5290, 0.0
      %5338 = vadd.xlane.f32.xlu0 %v5337
      %v5339 = vpop.xlane.xlu0 %5338
      %v5340 = vsel %vm5315, %v5291, 0.0
      %5341 = vadd.xlane.f32.xlu0 %v5340
      %v5342 = vpop.xlane.xlu0 %5341
      %v5343 = vsel %vm5315, %v5292, 0.0
      %5344 = vadd.xlane.f32.xlu0 %v5343
      %v5345 = vpop.xlane.xlu0 %5344
      %v5346 = vsel %vm5315, %v5293, 0.0
      %5347 = vadd.xlane.f32.xlu0 %v5346
      %v5348 = vpop.xlane.xlu0 %5347
      %v5349 = vsel %vm5315, %v5294, 0.0
      %5350 = vadd.xlane.f32.xlu0 %v5349
      %v5351 = vpop.xlane.xlu0 %5350
      %v5352 = vsel %vm5315, %v5295, 0.0
      %5353 = vadd.xlane.f32.xlu0 %v5352
      %v5354 = vpop.xlane.xlu0 %5353
      %v5355 = vsel %vm5315, %v5296, 0.0
      %5356 = vadd.xlane.f32.xlu0 %v5355
      %v5357 = vpop.xlane.xlu0 %5356
      %v5358 = vsel %vm5315, %v5297, 0.0
      %5359 = vadd.xlane.f32.xlu0 %v5358
      %v5360 = vpop.xlane.xlu0 %5359
      %v5361 = vsel %vm5315, %v5298, 0.0
      %5362 = vadd.xlane.f32.xlu0 %v5361
      %v5363 = vpop.xlane.xlu0 %5362
      %v5364 = vsel %vm5315, %v5299, 0.0
      %5365 = vadd.xlane.f32.xlu0 %v5364
      %v5366 = vpop.xlane.xlu0 %5365
      %v5367 = vsel %vm5315, %v5300, 0.0
      %5368 = vadd.xlane.f32.xlu0 %v5367
      %v5369 = vpop.xlane.xlu0 %5368
      %v5370 = vsel %vm5315, %v5301, 0.0
      %5371 = vadd.xlane.f32.xlu0 %v5370
      %v5372 = vpop.xlane.xlu0 %5371
      %v5373 = vsel %vm5315, %v5302, 0.0
      %5374 = vadd.xlane.f32.xlu0 %v5373
      %v5375 = vpop.xlane.xlu0 %5374
      %v5376 = vsel %vm5315, %v5303, 0.0
      %5377 = vadd.xlane.f32.xlu0 %v5376
      %v5378 = vpop.xlane.xlu0 %5377
      %v5379 = vsel %vm5315, %v5304, 0.0
      %5380 = vadd.xlane.f32.xlu0 %v5379
      %v5381 = vpop.xlane.xlu0 %5380
      %v5382 = vsel %vm5315, %v5305, 0.0
      %5383 = vadd.xlane.f32.xlu0 %v5382
      %v5384 = vpop.xlane.xlu0 %5383
      %v5385 = vsel %vm5315, %v5306, 0.0
      %5386 = vadd.xlane.f32.xlu0 %v5385
      %v5387 = vpop.xlane.xlu0 %5386
      %v5388 = vsel %vm5315, %v5307, 0.0
      %5389 = vadd.xlane.f32.xlu0 %v5388
      %v5390 = vpop.xlane.xlu0 %5389
      %v5391 = vsel %vm5315, %v5308, 0.0
      %5392 = vadd.xlane.f32.xlu0 %v5391
      %v5393 = vpop.xlane.xlu0 %5392
      %v5394 = vsel %vm5315, %v5309, 0.0
      %5395 = vadd.xlane.f32.xlu0 %v5394
      %v5396 = vpop.xlane.xlu0 %5395
      %v5397 = vsel %vm5315, %v5310, 0.0
      %5398 = vadd.xlane.f32.xlu0 %v5397
      %v5399 = vpop.xlane.xlu0 %5398
      %v5400 = vsel %vm5315, %v5311, 0.0
      %5401 = vadd.xlane.f32.xlu0 %v5400
      %v5402 = vpop.xlane.xlu0 %5401
      %v5403 = vsel %vm5315, %v5312, 0.0
      %5404 = vadd.xlane.f32.xlu0 %v5403
      %v5405 = vpop.xlane.xlu0 %5404
      %v5406 = vsel %vm5315, %v5313, 0.0
      %5407 = vadd.xlane.f32.xlu0 %v5406
      %v5408 = vpop.xlane.xlu0 %5407
      %v5409 = vsel %vm5315, %v5314, 0.0
      %5410 = vadd.xlane.f32.xlu0 %v5409
      %v5411 = vpop.xlane.xlu0 %5410
      %v5412 = vld [vmem:[#allocation4] sm:$0x1]
      %v5414 = vperm.slane %v5412, 0
      %5415 = vset.pattern.permute.xlu0 0
      %5416 = vperm.xlu0 %5415, %v5414
      %v5417 = vpop.permute.xlu0 %5416
      %v5419 = vadd.f32 %v5318, %v5417
      %v5420 = vadd.f32 %v5321, %v5417
      %v5421 = vadd.f32 %v5324, %v5417
      %v5422 = vadd.f32 %v5327, %v5417
      %v5423 = vadd.f32 %v5330, %v5417
      %v5424 = vadd.f32 %v5333, %v5417
      %v5425 = vadd.f32 %v5336, %v5417
      %v5426 = vadd.f32 %v5339, %v5417
      %v5427 = vadd.f32 %v5342, %v5417
      %v5428 = vadd.f32 %v5345, %v5417
      %v5429 = vadd.f32 %v5348, %v5417
      %v5430 = vadd.f32 %v5351, %v5417
      %v5431 = vadd.f32 %v5354, %v5417
      %v5432 = vadd.f32 %v5357, %v5417
      %v5433 = vadd.f32 %v5360, %v5417
      %v5434 = vadd.f32 %v5363, %v5417
      %v5435 = vadd.f32 %v5366, %v5417
      %v5436 = vadd.f32 %v5369, %v5417
      %v5437 = vadd.f32 %v5372, %v5417
      %v5438 = vadd.f32 %v5375, %v5417
      %v5439 = vadd.f32 %v5378, %v5417
      %v5440 = vadd.f32 %v5381, %v5417
      %v5441 = vadd.f32 %v5384, %v5417
      %v5442 = vadd.f32 %v5387, %v5417
      %v5443 = vadd.f32 %v5390, %v5417
      %v5444 = vadd.f32 %v5393, %v5417
      %v5445 = vadd.f32 %v5396, %v5417
      %v5446 = vadd.f32 %v5399, %v5417
      %v5447 = vadd.f32 %v5402, %v5417
      %v5448 = vadd.f32 %v5405, %v5417
      %v5449 = vadd.f32 %v5408, %v5417
      %v5450 = vadd.f32 %v5411, %v5417
      %v5451 = vxor.u32 %v5419, 2147483648
      %v5452 = vxor.u32 %v5420, 2147483648
      %v5453 = vxor.u32 %v5421, 2147483648
      %v5454 = vxor.u32 %v5422, 2147483648
      %v5455 = vxor.u32 %v5423, 2147483648
      %v5456 = vxor.u32 %v5424, 2147483648
      %v5457 = vxor.u32 %v5425, 2147483648
      %v5458 = vxor.u32 %v5426, 2147483648
      %v5459 = vxor.u32 %v5427, 2147483648
      %v5460 = vxor.u32 %v5428, 2147483648
      %v5461 = vxor.u32 %v5429, 2147483648
      %v5462 = vxor.u32 %v5430, 2147483648
      %v5463 = vxor.u32 %v5431, 2147483648
      %v5464 = vxor.u32 %v5432, 2147483648
      %v5465 = vxor.u32 %v5433, 2147483648
      %v5466 = vxor.u32 %v5434, 2147483648
      %v5467 = vxor.u32 %v5435, 2147483648
      %v5468 = vxor.u32 %v5436, 2147483648
      %v5469 = vxor.u32 %v5437, 2147483648
      %v5470 = vxor.u32 %v5438, 2147483648
      %v5471 = vxor.u32 %v5439, 2147483648
      %v5472 = vxor.u32 %v5440, 2147483648
      %v5473 = vxor.u32 %v5441, 2147483648
      %v5474 = vxor.u32 %v5442, 2147483648
      %v5475 = vxor.u32 %v5443, 2147483648
      %v5476 = vxor.u32 %v5444, 2147483648
      %v5477 = vxor.u32 %v5445, 2147483648
      %v5478 = vxor.u32 %v5446, 2147483648
      %v5479 = vxor.u32 %v5447, 2147483648
      %v5480 = vxor.u32 %v5448, 2147483648
      %v5481 = vxor.u32 %v5449, 2147483648
      %v5482 = vxor.u32 %v5450, 2147483648
      %v5483 = vmul.f32 %v5451, 1.442695
      %v5484 = vpow.pop %v5483
      %v5485 = vmul.f32 %v5452, 1.442695
      %v5486 = vpow.pop %v5485
      %v5487 = vmul.f32 %v5453, 1.442695
      %v5488 = vpow.pop %v5487
      %v5489 = vmul.f32 %v5454, 1.442695
      %v5490 = vpow.pop %v5489
      %v5491 = vmul.f32 %v5455, 1.442695
      %v5492 = vpow.pop %v5491
      %v5493 = vmul.f32 %v5456, 1.442695
      %v5494 = vpow.pop %v5493
      %v5495 = vmul.f32 %v5457, 1.442695
      %v5496 = vpow.pop %v5495
      %v5497 = vmul.f32 %v5458, 1.442695
      %v5498 = vpow.pop %v5497
      %v5499 = vmul.f32 %v5459, 1.442695
      %v5500 = vpow.pop %v5499
      %v5501 = vmul.f32 %v5460, 1.442695
      %v5502 = vpow.pop %v5501
      %v5503 = vmul.f32 %v5461, 1.442695
      %v5504 = vpow.pop %v5503
      %v5505 = vmul.f32 %v5462, 1.442695
      %v5506 = vpow.pop %v5505
      %v5507 = vmul.f32 %v5463, 1.442695
      %v5508 = vpow.pop %v5507
      %v5509 = vmul.f32 %v5464, 1.442695
      %v5510 = vpow.pop %v5509
      %v5511 = vmul.f32 %v5465, 1.442695
      %v5512 = vpow.pop %v5511
      %v5513 = vmul.f32 %v5466, 1.442695
      %v5514 = vpow.pop %v5513
      %v5515 = vmul.f32 %v5467, 1.442695
      %v5516 = vpow.pop %v5515
      %v5517 = vmul.f32 %v5468, 1.442695
      %v5518 = vpow.pop %v5517
      %v5519 = vmul.f32 %v5469, 1.442695
      %v5520 = vpow.pop %v5519
      %v5521 = vmul.f32 %v5470, 1.442695
      %v5522 = vpow.pop %v5521
      %v5523 = vmul.f32 %v5471, 1.442695
      %v5524 = vpow.pop %v5523
      %v5525 = vmul.f32 %v5472, 1.442695
      %v5526 = vpow.pop %v5525
      %v5527 = vmul.f32 %v5473, 1.442695
      %v5528 = vpow.pop %v5527
      %v5529 = vmul.f32 %v5474, 1.442695
      %v5530 = vpow.pop %v5529
      %v5531 = vmul.f32 %v5475, 1.442695
      %v5532 = vpow.pop %v5531
      %v5533 = vmul.f32 %v5476, 1.442695
      %v5534 = vpow.pop %v5533
      %v5535 = vmul.f32 %v5477, 1.442695
      %v5536 = vpow.pop %v5535
      %v5537 = vmul.f32 %v5478, 1.442695
      %v5538 = vpow.pop %v5537
      %v5539 = vmul.f32 %v5479, 1.442695
      %v5540 = vpow.pop %v5539
      %v5541 = vmul.f32 %v5480, 1.442695
      %v5542 = vpow.pop %v5541
      %v5543 = vmul.f32 %v5481, 1.442695
      %v5544 = vpow.pop %v5543
      %v5545 = vmul.f32 %v5482, 1.442695
      %v5546 = vpow.pop %v5545
      %v5547 = vadd.f32 %v5484, 1.0
      %v5548 = vadd.f32 %v5486, 1.0
      %v5549 = vadd.f32 %v5488, 1.0
      %v5550 = vadd.f32 %v5490, 1.0
      %v5551 = vadd.f32 %v5492, 1.0
      %v5552 = vadd.f32 %v5494, 1.0
      %v5553 = vadd.f32 %v5496, 1.0
      %v5554 = vadd.f32 %v5498, 1.0
      %v5555 = vadd.f32 %v5500, 1.0
      %v5556 = vadd.f32 %v5502, 1.0
      %v5557 = vadd.f32 %v5504, 1.0
      %v5558 = vadd.f32 %v5506, 1.0
      %v5559 = vadd.f32 %v5508, 1.0
      %v5560 = vadd.f32 %v5510, 1.0
      %v5561 = vadd.f32 %v5512, 1.0
      %v5562 = vadd.f32 %v5514, 1.0
      %v5563 = vadd.f32 %v5516, 1.0
      %v5564 = vadd.f32 %v5518, 1.0
      %v5565 = vadd.f32 %v5520, 1.0
      %v5566 = vadd.f32 %v5522, 1.0
      %v5567 = vadd.f32 %v5524, 1.0
      %v5568 = vadd.f32 %v5526, 1.0
      %v5569 = vadd.f32 %v5528, 1.0
      %v5570 = vadd.f32 %v5530, 1.0
      %v5571 = vadd.f32 %v5532, 1.0
      %v5572 = vadd.f32 %v5534, 1.0
      %v5573 = vadd.f32 %v5536, 1.0
      %v5574 = vadd.f32 %v5538, 1.0
      %v5575 = vadd.f32 %v5540, 1.0
      %v5576 = vadd.f32 %v5542, 1.0
      %v5577 = vadd.f32 %v5544, 1.0
      %v5578 = vadd.f32 %v5546, 1.0
      %v5579 = vrcp.pop %v5547
      %v5580 = vmul.f32 %v5547, %v5579
      %v5581 = vsub.f32 1.0, %v5580
      %v5582 = vmul.f32 %v5579, %v5581
      %v5583 = vadd.f32 %v5579, %v5582
      %vm5584 = vweird.f32 %v5547
      %vm5585 = vweird.f32 %v5579
      %vm5586 = vmor %vm5584, %vm5585
      %v5587 = vsel %vm5586, %v5579, %v5583
      %v5588 = vand.u32 2147483647, %v5547
      %vm5589 = vcmp.eq.f32.partialorder %v5588, 8.507059e+37
      %v5590 = vand.u32 %v5547, 2147483648
      %v5591 = vor.u32 1.1754944e-38, %v5590
      %v5592 = vsel %vm5589, %v5591, %v5587
      %v5593 = vmul.f32 1.0, %v5592
      %v5594 = vrcp.pop %v5548
      %v5595 = vmul.f32 %v5548, %v5594
      %v5596 = vsub.f32 1.0, %v5595
      %v5597 = vmul.f32 %v5594, %v5596
      %v5598 = vadd.f32 %v5594, %v5597
      %vm5599 = vweird.f32 %v5548
      %vm5600 = vweird.f32 %v5594
      %vm5601 = vmor %vm5599, %vm5600
      %v5602 = vsel %vm5601, %v5594, %v5598
      %v5603 = vand.u32 2147483647, %v5548
      %vm5604 = vcmp.eq.f32.partialorder %v5603, 8.507059e+37
      %v5605 = vand.u32 %v5548, 2147483648
      %v5606 = vor.u32 1.1754944e-38, %v5605
      %v5607 = vsel %vm5604, %v5606, %v5602
      %v5608 = vmul.f32 1.0, %v5607
      %v5609 = vrcp.pop %v5549
      %v5610 = vmul.f32 %v5549, %v5609
      %v5611 = vsub.f32 1.0, %v5610
      %v5612 = vmul.f32 %v5609, %v5611
      %v5613 = vadd.f32 %v5609, %v5612
      %vm5614 = vweird.f32 %v5549
      %vm5615 = vweird.f32 %v5609
      %vm5616 = vmor %vm5614, %vm5615
      %v5617 = vsel %vm5616, %v5609, %v5613
      %v5618 = vand.u32 2147483647, %v5549
      %vm5619 = vcmp.eq.f32.partialorder %v5618, 8.507059e+37
      %v5620 = vand.u32 %v5549, 2147483648
      %v5621 = vor.u32 1.1754944e-38, %v5620
      %v5622 = vsel %vm5619, %v5621, %v5617
      %v5623 = vmul.f32 1.0, %v5622
      %v5624 = vrcp.pop %v5550
      %v5625 = vmul.f32 %v5550, %v5624
      %v5626 = vsub.f32 1.0, %v5625
      %v5627 = vmul.f32 %v5624, %v5626
      %v5628 = vadd.f32 %v5624, %v5627
      %vm5629 = vweird.f32 %v5550
      %vm5630 = vweird.f32 %v5624
      %vm5631 = vmor %vm5629, %vm5630
      %v5632 = vsel %vm5631, %v5624, %v5628
      %v5633 = vand.u32 2147483647, %v5550
      %vm5634 = vcmp.eq.f32.partialorder %v5633, 8.507059e+37
      %v5635 = vand.u32 %v5550, 2147483648
      %v5636 = vor.u32 1.1754944e-38, %v5635
      %v5637 = vsel %vm5634, %v5636, %v5632
      %v5638 = vmul.f32 1.0, %v5637
      %v5639 = vrcp.pop %v5551
      %v5640 = vmul.f32 %v5551, %v5639
      %v5641 = vsub.f32 1.0, %v5640
      %v5642 = vmul.f32 %v5639, %v5641
      %v5643 = vadd.f32 %v5639, %v5642
      %vm5644 = vweird.f32 %v5551
      %vm5645 = vweird.f32 %v5639
      %vm5646 = vmor %vm5644, %vm5645
      %v5647 = vsel %vm5646, %v5639, %v5643
      %v5648 = vand.u32 2147483647, %v5551
      %vm5649 = vcmp.eq.f32.partialorder %v5648, 8.507059e+37
      %v5650 = vand.u32 %v5551, 2147483648
      %v5651 = vor.u32 1.1754944e-38, %v5650
      %v5652 = vsel %vm5649, %v5651, %v5647
      %v5653 = vmul.f32 1.0, %v5652
      %v5654 = vrcp.pop %v5552
      %v5655 = vmul.f32 %v5552, %v5654
      %v5656 = vsub.f32 1.0, %v5655
      %v5657 = vmul.f32 %v5654, %v5656
      %v5658 = vadd.f32 %v5654, %v5657
      %vm5659 = vweird.f32 %v5552
      %vm5660 = vweird.f32 %v5654
      %vm5661 = vmor %vm5659, %vm5660
      %v5662 = vsel %vm5661, %v5654, %v5658
      %v5663 = vand.u32 2147483647, %v5552
      %vm5664 = vcmp.eq.f32.partialorder %v5663, 8.507059e+37
      %v5665 = vand.u32 %v5552, 2147483648
      %v5666 = vor.u32 1.1754944e-38, %v5665
      %v5667 = vsel %vm5664, %v5666, %v5662
      %v5668 = vmul.f32 1.0, %v5667
      %v5669 = vrcp.pop %v5553
      %v5670 = vmul.f32 %v5553, %v5669
      %v5671 = vsub.f32 1.0, %v5670
      %v5672 = vmul.f32 %v5669, %v5671
      %v5673 = vadd.f32 %v5669, %v5672
      %vm5674 = vweird.f32 %v5553
      %vm5675 = vweird.f32 %v5669
      %vm5676 = vmor %vm5674, %vm5675
      %v5677 = vsel %vm5676, %v5669, %v5673
      %v5678 = vand.u32 2147483647, %v5553
      %vm5679 = vcmp.eq.f32.partialorder %v5678, 8.507059e+37
      %v5680 = vand.u32 %v5553, 2147483648
      %v5681 = vor.u32 1.1754944e-38, %v5680
      %v5682 = vsel %vm5679, %v5681, %v5677
      %v5683 = vmul.f32 1.0, %v5682
      %v5684 = vrcp.pop %v5554
      %v5685 = vmul.f32 %v5554, %v5684
      %v5686 = vsub.f32 1.0, %v5685
      %v5687 = vmul.f32 %v5684, %v5686
      %v5688 = vadd.f32 %v5684, %v5687
      %vm5689 = vweird.f32 %v5554
      %vm5690 = vweird.f32 %v5684
      %vm5691 = vmor %vm5689, %vm5690
      %v5692 = vsel %vm5691, %v5684, %v5688
      %v5693 = vand.u32 2147483647, %v5554
      %vm5694 = vcmp.eq.f32.partialorder %v5693, 8.507059e+37
      %v5695 = vand.u32 %v5554, 2147483648
      %v5696 = vor.u32 1.1754944e-38, %v5695
      %v5697 = vsel %vm5694, %v5696, %v5692
      %v5698 = vmul.f32 1.0, %v5697
      %v5699 = vrcp.pop %v5555
      %v5700 = vmul.f32 %v5555, %v5699
      %v5701 = vsub.f32 1.0, %v5700
      %v5702 = vmul.f32 %v5699, %v5701
      %v5703 = vadd.f32 %v5699, %v5702
      %vm5704 = vweird.f32 %v5555
      %vm5705 = vweird.f32 %v5699
      %vm5706 = vmor %vm5704, %vm5705
      %v5707 = vsel %vm5706, %v5699, %v5703
      %v5708 = vand.u32 2147483647, %v5555
      %vm5709 = vcmp.eq.f32.partialorder %v5708, 8.507059e+37
      %v5710 = vand.u32 %v5555, 2147483648
      %v5711 = vor.u32 1.1754944e-38, %v5710
      %v5712 = vsel %vm5709, %v5711, %v5707
      %v5713 = vmul.f32 1.0, %v5712
      %v5714 = vrcp.pop %v5556
      %v5715 = vmul.f32 %v5556, %v5714
      %v5716 = vsub.f32 1.0, %v5715
      %v5717 = vmul.f32 %v5714, %v5716
      %v5718 = vadd.f32 %v5714, %v5717
      %vm5719 = vweird.f32 %v5556
      %vm5720 = vweird.f32 %v5714
      %vm5721 = vmor %vm5719, %vm5720
      %v5722 = vsel %vm5721, %v5714, %v5718
      %v5723 = vand.u32 2147483647, %v5556
      %vm5724 = vcmp.eq.f32.partialorder %v5723, 8.507059e+37
      %v5725 = vand.u32 %v5556, 2147483648
      %v5726 = vor.u32 1.1754944e-38, %v5725
      %v5727 = vsel %vm5724, %v5726, %v5722
      %v5728 = vmul.f32 1.0, %v5727
      %v5729 = vrcp.pop %v5557
      %v5730 = vmul.f32 %v5557, %v5729
      %v5731 = vsub.f32 1.0, %v5730
      %v5732 = vmul.f32 %v5729, %v5731
      %v5733 = vadd.f32 %v5729, %v5732
      %vm5734 = vweird.f32 %v5557
      %vm5735 = vweird.f32 %v5729
      %vm5736 = vmor %vm5734, %vm5735
      %v5737 = vsel %vm5736, %v5729, %v5733
      %v5738 = vand.u32 2147483647, %v5557
      %vm5739 = vcmp.eq.f32.partialorder %v5738, 8.507059e+37
      %v5740 = vand.u32 %v5557, 2147483648
      %v5741 = vor.u32 1.1754944e-38, %v5740
      %v5742 = vsel %vm5739, %v5741, %v5737
      %v5743 = vmul.f32 1.0, %v5742
      %v5744 = vrcp.pop %v5558
      %v5745 = vmul.f32 %v5558, %v5744
      %v5746 = vsub.f32 1.0, %v5745
      %v5747 = vmul.f32 %v5744, %v5746
      %v5748 = vadd.f32 %v5744, %v5747
      %vm5749 = vweird.f32 %v5558
      %vm5750 = vweird.f32 %v5744
      %vm5751 = vmor %vm5749, %vm5750
      %v5752 = vsel %vm5751, %v5744, %v5748
      %v5753 = vand.u32 2147483647, %v5558
      %vm5754 = vcmp.eq.f32.partialorder %v5753, 8.507059e+37
      %v5755 = vand.u32 %v5558, 2147483648
      %v5756 = vor.u32 1.1754944e-38, %v5755
      %v5757 = vsel %vm5754, %v5756, %v5752
      %v5758 = vmul.f32 1.0, %v5757
      %v5759 = vrcp.pop %v5559
      %v5760 = vmul.f32 %v5559, %v5759
      %v5761 = vsub.f32 1.0, %v5760
      %v5762 = vmul.f32 %v5759, %v5761
      %v5763 = vadd.f32 %v5759, %v5762
      %vm5764 = vweird.f32 %v5559
      %vm5765 = vweird.f32 %v5759
      %vm5766 = vmor %vm5764, %vm5765
      %v5767 = vsel %vm5766, %v5759, %v5763
      %v5768 = vand.u32 2147483647, %v5559
      %vm5769 = vcmp.eq.f32.partialorder %v5768, 8.507059e+37
      %v5770 = vand.u32 %v5559, 2147483648
      %v5771 = vor.u32 1.1754944e-38, %v5770
      %v5772 = vsel %vm5769, %v5771, %v5767
      %v5773 = vmul.f32 1.0, %v5772
      %v5774 = vrcp.pop %v5560
      %v5775 = vmul.f32 %v5560, %v5774
      %v5776 = vsub.f32 1.0, %v5775
      %v5777 = vmul.f32 %v5774, %v5776
      %v5778 = vadd.f32 %v5774, %v5777
      %vm5779 = vweird.f32 %v5560
      %vm5780 = vweird.f32 %v5774
      %vm5781 = vmor %vm5779, %vm5780
      %v5782 = vsel %vm5781, %v5774, %v5778
      %v5783 = vand.u32 2147483647, %v5560
      %vm5784 = vcmp.eq.f32.partialorder %v5783, 8.507059e+37
      %v5785 = vand.u32 %v5560, 2147483648
      %v5786 = vor.u32 1.1754944e-38, %v5785
      %v5787 = vsel %vm5784, %v5786, %v5782
      %v5788 = vmul.f32 1.0, %v5787
      %v5789 = vrcp.pop %v5561
      %v5790 = vmul.f32 %v5561, %v5789
      %v5791 = vsub.f32 1.0, %v5790
      %v5792 = vmul.f32 %v5789, %v5791
      %v5793 = vadd.f32 %v5789, %v5792
      %vm5794 = vweird.f32 %v5561
      %vm5795 = vweird.f32 %v5789
      %vm5796 = vmor %vm5794, %vm5795
      %v5797 = vsel %vm5796, %v5789, %v5793
      %v5798 = vand.u32 2147483647, %v5561
      %vm5799 = vcmp.eq.f32.partialorder %v5798, 8.507059e+37
      %v5800 = vand.u32 %v5561, 2147483648
      %v5801 = vor.u32 1.1754944e-38, %v5800
      %v5802 = vsel %vm5799, %v5801, %v5797
      %v5803 = vmul.f32 1.0, %v5802
      %v5804 = vrcp.pop %v5562
      %v5805 = vmul.f32 %v5562, %v5804
      %v5806 = vsub.f32 1.0, %v5805
      %v5807 = vmul.f32 %v5804, %v5806
      %v5808 = vadd.f32 %v5804, %v5807
      %vm5809 = vweird.f32 %v5562
      %vm5810 = vweird.f32 %v5804
      %vm5811 = vmor %vm5809, %vm5810
      %v5812 = vsel %vm5811, %v5804, %v5808
      %v5813 = vand.u32 2147483647, %v5562
      %vm5814 = vcmp.eq.f32.partialorder %v5813, 8.507059e+37
      %v5815 = vand.u32 %v5562, 2147483648
      %v5816 = vor.u32 1.1754944e-38, %v5815
      %v5817 = vsel %vm5814, %v5816, %v5812
      %v5818 = vmul.f32 1.0, %v5817
      %v5819 = vrcp.pop %v5563
      %v5820 = vmul.f32 %v5563, %v5819
      %v5821 = vsub.f32 1.0, %v5820
      %v5822 = vmul.f32 %v5819, %v5821
      %v5823 = vadd.f32 %v5819, %v5822
      %vm5824 = vweird.f32 %v5563
      %vm5825 = vweird.f32 %v5819
      %vm5826 = vmor %vm5824, %vm5825
      %v5827 = vsel %vm5826, %v5819, %v5823
      %v5828 = vand.u32 2147483647, %v5563
      %vm5829 = vcmp.eq.f32.partialorder %v5828, 8.507059e+37
      %v5830 = vand.u32 %v5563, 2147483648
      %v5831 = vor.u32 1.1754944e-38, %v5830
      %v5832 = vsel %vm5829, %v5831, %v5827
      %v5833 = vmul.f32 1.0, %v5832
      %v5834 = vrcp.pop %v5564
      %v5835 = vmul.f32 %v5564, %v5834
      %v5836 = vsub.f32 1.0, %v5835
      %v5837 = vmul.f32 %v5834, %v5836
      %v5838 = vadd.f32 %v5834, %v5837
      %vm5839 = vweird.f32 %v5564
      %vm5840 = vweird.f32 %v5834
      %vm5841 = vmor %vm5839, %vm5840
      %v5842 = vsel %vm5841, %v5834, %v5838
      %v5843 = vand.u32 2147483647, %v5564
      %vm5844 = vcmp.eq.f32.partialorder %v5843, 8.507059e+37
      %v5845 = vand.u32 %v5564, 2147483648
      %v5846 = vor.u32 1.1754944e-38, %v5845
      %v5847 = vsel %vm5844, %v5846, %v5842
      %v5848 = vmul.f32 1.0, %v5847
      %v5849 = vrcp.pop %v5565
      %v5850 = vmul.f32 %v5565, %v5849
      %v5851 = vsub.f32 1.0, %v5850
      %v5852 = vmul.f32 %v5849, %v5851
      %v5853 = vadd.f32 %v5849, %v5852
      %vm5854 = vweird.f32 %v5565
      %vm5855 = vweird.f32 %v5849
      %vm5856 = vmor %vm5854, %vm5855
      %v5857 = vsel %vm5856, %v5849, %v5853
      %v5858 = vand.u32 2147483647, %v5565
      %vm5859 = vcmp.eq.f32.partialorder %v5858, 8.507059e+37
      %v5860 = vand.u32 %v5565, 2147483648
      %v5861 = vor.u32 1.1754944e-38, %v5860
      %v5862 = vsel %vm5859, %v5861, %v5857
      %v5863 = vmul.f32 1.0, %v5862
      %v5864 = vrcp.pop %v5566
      %v5865 = vmul.f32 %v5566, %v5864
      %v5866 = vsub.f32 1.0, %v5865
      %v5867 = vmul.f32 %v5864, %v5866
      %v5868 = vadd.f32 %v5864, %v5867
      %vm5869 = vweird.f32 %v5566
      %vm5870 = vweird.f32 %v5864
      %vm5871 = vmor %vm5869, %vm5870
      %v5872 = vsel %vm5871, %v5864, %v5868
      %v5873 = vand.u32 2147483647, %v5566
      %vm5874 = vcmp.eq.f32.partialorder %v5873, 8.507059e+37
      %v5875 = vand.u32 %v5566, 2147483648
      %v5876 = vor.u32 1.1754944e-38, %v5875
      %v5877 = vsel %vm5874, %v5876, %v5872
      %v5878 = vmul.f32 1.0, %v5877
      %v5879 = vrcp.pop %v5567
      %v5880 = vmul.f32 %v5567, %v5879
      %v5881 = vsub.f32 1.0, %v5880
      %v5882 = vmul.f32 %v5879, %v5881
      %v5883 = vadd.f32 %v5879, %v5882
      %vm5884 = vweird.f32 %v5567
      %vm5885 = vweird.f32 %v5879
      %vm5886 = vmor %vm5884, %vm5885
      %v5887 = vsel %vm5886, %v5879, %v5883
      %v5888 = vand.u32 2147483647, %v5567
      %vm5889 = vcmp.eq.f32.partialorder %v5888, 8.507059e+37
      %v5890 = vand.u32 %v5567, 2147483648
      %v5891 = vor.u32 1.1754944e-38, %v5890
      %v5892 = vsel %vm5889, %v5891, %v5887
      %v5893 = vmul.f32 1.0, %v5892
      %v5894 = vrcp.pop %v5568
      %v5895 = vmul.f32 %v5568, %v5894
      %v5896 = vsub.f32 1.0, %v5895
      %v5897 = vmul.f32 %v5894, %v5896
      %v5898 = vadd.f32 %v5894, %v5897
      %vm5899 = vweird.f32 %v5568
      %vm5900 = vweird.f32 %v5894
      %vm5901 = vmor %vm5899, %vm5900
      %v5902 = vsel %vm5901, %v5894, %v5898
      %v5903 = vand.u32 2147483647, %v5568
      %vm5904 = vcmp.eq.f32.partialorder %v5903, 8.507059e+37
      %v5905 = vand.u32 %v5568, 2147483648
      %v5906 = vor.u32 1.1754944e-38, %v5905
      %v5907 = vsel %vm5904, %v5906, %v5902
      %v5908 = vmul.f32 1.0, %v5907
      %v5909 = vrcp.pop %v5569
      %v5910 = vmul.f32 %v5569, %v5909
      %v5911 = vsub.f32 1.0, %v5910
      %v5912 = vmul.f32 %v5909, %v5911
      %v5913 = vadd.f32 %v5909, %v5912
      %vm5914 = vweird.f32 %v5569
      %vm5915 = vweird.f32 %v5909
      %vm5916 = vmor %vm5914, %vm5915
      %v5917 = vsel %vm5916, %v5909, %v5913
      %v5918 = vand.u32 2147483647, %v5569
      %vm5919 = vcmp.eq.f32.partialorder %v5918, 8.507059e+37
      %v5920 = vand.u32 %v5569, 2147483648
      %v5921 = vor.u32 1.1754944e-38, %v5920
      %v5922 = vsel %vm5919, %v5921, %v5917
      %v5923 = vmul.f32 1.0, %v5922
      %v5924 = vrcp.pop %v5570
      %v5925 = vmul.f32 %v5570, %v5924
      %v5926 = vsub.f32 1.0, %v5925
      %v5927 = vmul.f32 %v5924, %v5926
      %v5928 = vadd.f32 %v5924, %v5927
      %vm5929 = vweird.f32 %v5570
      %vm5930 = vweird.f32 %v5924
      %vm5931 = vmor %vm5929, %vm5930
      %v5932 = vsel %vm5931, %v5924, %v5928
      %v5933 = vand.u32 2147483647, %v5570
      %vm5934 = vcmp.eq.f32.partialorder %v5933, 8.507059e+37
      %v5935 = vand.u32 %v5570, 2147483648
      %v5936 = vor.u32 1.1754944e-38, %v5935
      %v5937 = vsel %vm5934, %v5936, %v5932
      %v5938 = vmul.f32 1.0, %v5937
      %v5939 = vrcp.pop %v5571
      %v5940 = vmul.f32 %v5571, %v5939
      %v5941 = vsub.f32 1.0, %v5940
      %v5942 = vmul.f32 %v5939, %v5941
      %v5943 = vadd.f32 %v5939, %v5942
      %vm5944 = vweird.f32 %v5571
      %vm5945 = vweird.f32 %v5939
      %vm5946 = vmor %vm5944, %vm5945
      %v5947 = vsel %vm5946, %v5939, %v5943
      %v5948 = vand.u32 2147483647, %v5571
      %vm5949 = vcmp.eq.f32.partialorder %v5948, 8.507059e+37
      %v5950 = vand.u32 %v5571, 2147483648
      %v5951 = vor.u32 1.1754944e-38, %v5950
      %v5952 = vsel %vm5949, %v5951, %v5947
      %v5953 = vmul.f32 1.0, %v5952
      %v5954 = vrcp.pop %v5572
      %v5955 = vmul.f32 %v5572, %v5954
      %v5956 = vsub.f32 1.0, %v5955
      %v5957 = vmul.f32 %v5954, %v5956
      %v5958 = vadd.f32 %v5954, %v5957
      %vm5959 = vweird.f32 %v5572
      %vm5960 = vweird.f32 %v5954
      %vm5961 = vmor %vm5959, %vm5960
      %v5962 = vsel %vm5961, %v5954, %v5958
      %v5963 = vand.u32 2147483647, %v5572
      %vm5964 = vcmp.eq.f32.partialorder %v5963, 8.507059e+37
      %v5965 = vand.u32 %v5572, 2147483648
      %v5966 = vor.u32 1.1754944e-38, %v5965
      %v5967 = vsel %vm5964, %v5966, %v5962
      %v5968 = vmul.f32 1.0, %v5967
      %v5969 = vrcp.pop %v5573
      %v5970 = vmul.f32 %v5573, %v5969
      %v5971 = vsub.f32 1.0, %v5970
      %v5972 = vmul.f32 %v5969, %v5971
      %v5973 = vadd.f32 %v5969, %v5972
      %vm5974 = vweird.f32 %v5573
      %vm5975 = vweird.f32 %v5969
      %vm5976 = vmor %vm5974, %vm5975
      %v5977 = vsel %vm5976, %v5969, %v5973
      %v5978 = vand.u32 2147483647, %v5573
      %vm5979 = vcmp.eq.f32.partialorder %v5978, 8.507059e+37
      %v5980 = vand.u32 %v5573, 2147483648
      %v5981 = vor.u32 1.1754944e-38, %v5980
      %v5982 = vsel %vm5979, %v5981, %v5977
      %v5983 = vmul.f32 1.0, %v5982
      %v5984 = vrcp.pop %v5574
      %v5985 = vmul.f32 %v5574, %v5984
      %v5986 = vsub.f32 1.0, %v5985
      %v5987 = vmul.f32 %v5984, %v5986
      %v5988 = vadd.f32 %v5984, %v5987
      %vm5989 = vweird.f32 %v5574
      %vm5990 = vweird.f32 %v5984
      %vm5991 = vmor %vm5989, %vm5990
      %v5992 = vsel %vm5991, %v5984, %v5988
      %v5993 = vand.u32 2147483647, %v5574
      %vm5994 = vcmp.eq.f32.partialorder %v5993, 8.507059e+37
      %v5995 = vand.u32 %v5574, 2147483648
      %v5996 = vor.u32 1.1754944e-38, %v5995
      %v5997 = vsel %vm5994, %v5996, %v5992
      %v5998 = vmul.f32 1.0, %v5997
      %v5999 = vrcp.pop %v5575
      %v6000 = vmul.f32 %v5575, %v5999
      %v6001 = vsub.f32 1.0, %v6000
      %v6002 = vmul.f32 %v5999, %v6001
      %v6003 = vadd.f32 %v5999, %v6002
      %vm6004 = vweird.f32 %v5575
      %vm6005 = vweird.f32 %v5999
      %vm6006 = vmor %vm6004, %vm6005
      %v6007 = vsel %vm6006, %v5999, %v6003
      %v6008 = vand.u32 2147483647, %v5575
      %vm6009 = vcmp.eq.f32.partialorder %v6008, 8.507059e+37
      %v6010 = vand.u32 %v5575, 2147483648
      %v6011 = vor.u32 1.1754944e-38, %v6010
      %v6012 = vsel %vm6009, %v6011, %v6007
      %v6013 = vmul.f32 1.0, %v6012
      %v6014 = vrcp.pop %v5576
      %v6015 = vmul.f32 %v5576, %v6014
      %v6016 = vsub.f32 1.0, %v6015
      %v6017 = vmul.f32 %v6014, %v6016
      %v6018 = vadd.f32 %v6014, %v6017
      %vm6019 = vweird.f32 %v5576
      %vm6020 = vweird.f32 %v6014
      %vm6021 = vmor %vm6019, %vm6020
      %v6022 = vsel %vm6021, %v6014, %v6018
      %v6023 = vand.u32 2147483647, %v5576
      %vm6024 = vcmp.eq.f32.partialorder %v6023, 8.507059e+37
      %v6025 = vand.u32 %v5576, 2147483648
      %v6026 = vor.u32 1.1754944e-38, %v6025
      %v6027 = vsel %vm6024, %v6026, %v6022
      %v6028 = vmul.f32 1.0, %v6027
      %v6029 = vrcp.pop %v5577
      %v6030 = vmul.f32 %v5577, %v6029
      %v6031 = vsub.f32 1.0, %v6030
      %v6032 = vmul.f32 %v6029, %v6031
      %v6033 = vadd.f32 %v6029, %v6032
      %vm6034 = vweird.f32 %v5577
      %vm6035 = vweird.f32 %v6029
      %vm6036 = vmor %vm6034, %vm6035
      %v6037 = vsel %vm6036, %v6029, %v6033
      %v6038 = vand.u32 2147483647, %v5577
      %vm6039 = vcmp.eq.f32.partialorder %v6038, 8.507059e+37
      %v6040 = vand.u32 %v5577, 2147483648
      %v6041 = vor.u32 1.1754944e-38, %v6040
      %v6042 = vsel %vm6039, %v6041, %v6037
      %v6043 = vmul.f32 1.0, %v6042
      %v6044 = vrcp.pop %v5578
      %v6045 = vmul.f32 %v5578, %v6044
      %v6046 = vsub.f32 1.0, %v6045
      %v6047 = vmul.f32 %v6044, %v6046
      %v6048 = vadd.f32 %v6044, %v6047
      %vm6049 = vweird.f32 %v5578
      %vm6050 = vweird.f32 %v6044
      %vm6051 = vmor %vm6049, %vm6050
      %v6052 = vsel %vm6051, %v6044, %v6048
      %v6053 = vand.u32 2147483647, %v5578
      %vm6054 = vcmp.eq.f32.partialorder %v6053, 8.507059e+37
      %v6055 = vand.u32 %v5578, 2147483648
      %v6056 = vor.u32 1.1754944e-38, %v6055
      %v6057 = vsel %vm6054, %v6056, %v6052
      %v6058 = vmul.f32 1.0, %v6057
      %v6091 = vlaneseq
      %v6092 = vand.u32 %v6091, 127
      %v6093 = vperm.slane %v5593, %v6092
      %v6094 = vadd.s32 %v6092, 4294967288
      %v6095 = vperm.slane %v5608, %v6094
      %vm6096 = vcmask 130112
      %v6097 = vsel %vm6096, %v6095, %v6093
      %v6098 = vadd.s32 %v6092, 4294967280
      %v6099 = vperm.slane %v5623, %v6098
      %vm6100 = vcmask 195712
      %v6101 = vsel %vm6100, %v6099, %v6097
      %v6102 = vadd.s32 %v6092, 4294967272
      %v6103 = vperm.slane %v5638, %v6102
      %vm6104 = vcmask 261312
      %v6105 = vsel %vm6104, %v6103, %v6101
      %v6106 = vadd.s32 %v6092, 4294967264
      %v6107 = vperm.slane %v5653, %v6106
      %vm6108 = vcmask 326912
      %v6109 = vsel %vm6108, %v6107, %v6105
      %v6110 = vadd.s32 %v6092, 4294967256
      %v6111 = vperm.slane %v5668, %v6110
      %vm6112 = vcmask 392512
      %v6113 = vsel %vm6112, %v6111, %v6109
      %v6114 = vadd.s32 %v6092, 4294967248
      %v6115 = vperm.slane %v5683, %v6114
      %vm6116 = vcmask 458112
      %v6117 = vsel %vm6116, %v6115, %v6113
      %v6118 = vadd.s32 %v6092, 4294967240
      %v6119 = vperm.slane %v5698, %v6118
      %vm6120 = vcmask 523712
      %v6121 = vsel %vm6120, %v6119, %v6117
      %v6122 = vadd.s32 %v6092, 4294967232
      %v6123 = vperm.slane %v5713, %v6122
      %vm6124 = vcmask 589312
      %v6125 = vsel %vm6124, %v6123, %v6121
      %v6126 = vadd.s32 %v6092, 4294967224
      %v6127 = vperm.slane %v5728, %v6126
      %vm6128 = vcmask 654912
      %v6129 = vsel %vm6128, %v6127, %v6125
      %v6130 = vadd.s32 %v6092, 4294967216
      %v6131 = vperm.slane %v5743, %v6130
      %vm6132 = vcmask 720512
      %v6133 = vsel %vm6132, %v6131, %v6129
      %v6134 = vadd.s32 %v6092, 4294967208
      %v6135 = vperm.slane %v5758, %v6134
      %vm6136 = vcmask 786112
      %v6137 = vsel %vm6136, %v6135, %v6133
      %v6138 = vadd.s32 %v6092, 4294967200
      %v6139 = vperm.slane %v5773, %v6138
      %vm6140 = vcmask 851712
      %v6141 = vsel %vm6140, %v6139, %v6137
      %v6142 = vadd.s32 %v6092, 4294967192
      %v6143 = vperm.slane %v5788, %v6142
      %vm6144 = vcmask 917312
      %v6145 = vsel %vm6144, %v6143, %v6141
      %v6146 = vadd.s32 %v6092, 4294967184
      %v6147 = vperm.slane %v5803, %v6146
      %vm6148 = vcmask 982912
      %v6149 = vsel %vm6148, %v6147, %v6145
      %v6150 = vadd.s32 %v6092, 4294967176
      %v6151 = vperm.slane %v5818, %v6150
      %vm6152 = vcmask 1048512
      %v6153 = vsel %vm6152, %v6151, %v6149
      %v6154 = vperm.slane %v5833, %v6092
      %v6155 = vperm.slane %v5848, %v6094
      %v6156 = vsel %vm6096, %v6155, %v6154
      %v6157 = vperm.slane %v5863, %v6098
      %v6158 = vsel %vm6100, %v6157, %v6156
      %v6159 = vperm.slane %v5878, %v6102
      %v6160 = vsel %vm6104, %v6159, %v6158
      %v6161 = vperm.slane %v5893, %v6106
      %v6162 = vsel %vm6108, %v6161, %v6160
      %v6163 = vperm.slane %v5908, %v6110
      %v6164 = vsel %vm6112, %v6163, %v6162
      %v6165 = vperm.slane %v5923, %v6114
      %v6166 = vsel %vm6116, %v6165, %v6164
      %v6167 = vperm.slane %v5938, %v6118
      %v6168 = vsel %vm6120, %v6167, %v6166
      %v6169 = vperm.slane %v5953, %v6122
      %v6170 = vsel %vm6124, %v6169, %v6168
      %v6171 = vperm.slane %v5968, %v6126
      %v6172 = vsel %vm6128, %v6171, %v6170
      %v6173 = vperm.slane %v5983, %v6130
      %v6174 = vsel %vm6132, %v6173, %v6172
      %v6175 = vperm.slane %v5998, %v6134
      %v6176 = vsel %vm6136, %v6175, %v6174
      %v6177 = vperm.slane %v6013, %v6138
      %v6178 = vsel %vm6140, %v6177, %v6176
      %v6179 = vperm.slane %v6028, %v6142
      %v6180 = vsel %vm6144, %v6179, %v6178
      %v6181 = vperm.slane %v6043, %v6146
      %v6182 = vsel %vm6148, %v6181, %v6180
      %v6183 = vperm.slane %v6058, %v6150
      %v6184 = vsel %vm6152, %v6183, %v6182
      %v6185 = vsel %vm2270, %v6184, %v6153
      %6187 = vst [vmem:[%s494] sm:$0x3] %v6185
      %p6188 = scmp.lt.s32.totalorder %s28, 1
      %s6189 = scalar_select %p6188, %s28, 1
      %s6190 = smul.addr %s6189, 2
      %s6191 = scalar_lea.vmem %s15, %s6190
      // Predicated region
      $region81: #{postprocess_forward.1} parent=79 // pred_check
        %p6192 = pneg %p366
      $region82: #{postprocess_forward.1} parent=79 // pred_check_branch
        %6194 = sbr.rel (%p6192) target = $region84
      $region83: #{postprocess_forward.1} parent=79 // pred_region
        _
      $region84: #{postprocess_forward.1} parent=79 // pred_fallthru
        _
    $region80: #{postprocess_forward.1} parent=5 // pred_fallthru
      _
    %p6195 = scmp.le.s32.totalorder 2, %s23
    // Predicated region
    $region85: #{postprocess_forward.1} parent=5 // pred_check
      %p6196 = pneg %p6195
    $region86: #{postprocess_forward.1} parent=5 // pred_check_branch
      %6198 = sbr.rel (%p6196) target = $region88
    $region87: #{postprocess_forward.1} parent=5 // pred_region
      %s6199 = ssub.s32 %s23, 2
      // Predicated region
      $region89: #{postprocess_forward.1} parent=87 // pred_check
        %p6200 = pneg %p372
      $region90: #{postprocess_forward.1} parent=87 // pred_check_branch
        %6202 = sbr.rel (%p6200) target = $region92
      $region91: #{postprocess_forward.1} parent=87 // pred_region
        %p6203 = scmp.lt.s32.totalorder %s29, 1
        %s6204 = scalar_select %p6203, %s29, 1
        %s6205 = smul.addr %s6204, 2
        %s6206 = scalar_lea.vmem %s15, %s6205
      $region92: #{postprocess_forward.1} parent=87 // pred_fallthru
        _
    $region88: #{postprocess_forward.1} parent=5 // pred_fallthru
      _
  $region6: #{postprocess_forward.1} parent=0 // loop_footer
    %s27 = sadd.s32 1, %s23
  $region7: #{postprocess_forward.1} parent=0 // loop_footer_branch
    %22 = sbr.rel target = $region3
  $region8: #{postprocess_forward.1} parent=0 // loop_exit
    _

</llo_original>
